<compile_context>
chip_gen: v6e
topology: v6e:2x2x1
jax: 0.10.0
libtpu: 0.0.40
codegen_flags: <defaults>
</compile_context>

<pallas_src>
import functools

import jax
import jax.numpy as jnp
from jax import lax
from jax.experimental import pallas as pl
from jax.experimental.pallas import tpu as pltpu

BN_EPS = 1e-5
LANES = 128


# --------------------------------------------------------------------------- #
# Kernel
# --------------------------------------------------------------------------- #
def _inverted_residual_kernel(x_ref, w1_ref, b1_ref, wd_ref, b2_ref,
                              w3_ref, b3_ref, o_ref, *scratch,
                              H, W, stride, use_res):
    # x_ref block: (1, H*W, cin_p) -- one image, channels on the lane axis.
    x2 = x_ref[0]                                   # (H*W, cin_p)
    hw = H * W
    chid_p = w1_ref.shape[1]

    # ---- 1x1 expand conv (MXU, BN scale folded into w1) + bias + ReLU6 ------
    h = jnp.dot(x2, w1_ref[...], preferred_element_type=jnp.float32)
    h = jnp.clip(h + b1_ref[...], 0.0, 6.0)        # (H*W, chid_p) f32

    wd = wd_ref[...].astype(jnp.float32)            # (9, chid_p), BN scale folded

    # ---- 3x3 depthwise conv, zero padding = 1 -------------------------------
    # dx tap variants built once: two +/-1 sublane rolls + two hoisted column
    # masks (in-kernel iota, no row/col inputs).  Wrapped values from the
    # flattened roll are always masked off.
    col = lax.broadcasted_iota(jnp.int32, (hw, 1), 0) % W
    h_l = jnp.where(col > 0, pltpu.roll(h, 1, axis=0), 0.0)          # reads x-1
    h_r = jnp.where(col < W - 1, pltpu.roll(h, hw - 1, axis=0), 0.0)  # reads x+1

    if stride == 1:
        # Zero-row-padded scratch: dy taps become address-offset window reads,
        # no dy masks and no per-tap rolls/selects inside the MAC loop.
        dw_buf = scratch[0]                          # (3, (H+2)*W, chid_p) f32
        zrow = jnp.zeros((W, chid_p), jnp.float32)
        for kx, hv in enumerate((h_l, h, h_r)):      # kx: 0->dx=-1, 1->0, 2->+1
            dw_buf[kx, pl.ds(0, W)] = zrow                   # top pad row
            dw_buf[kx, pl.ds(W + hw, W)] = zrow              # bottom pad row
            dw_buf[kx, pl.ds(W, hw)] = hv                    # interior rows
        acc = jnp.zeros((hw, chid_p), jnp.float32)
        for ky in range(3):
            for kx in range(3):
                acc = acc + dw_buf[kx, pl.ds(ky * W, hw)] * wd[ky * 3 + kx]
    else:
        # stride 2: tap sources at output resolution via one phase reshape per
        # dx variant (row phases; columns are always the even phase).
        ho, wo = H // 2, W // 2
        zrow = jnp.zeros((1, wo, chid_p), jnp.float32)
        srcs = []
        for hv in (h_l, h, h_r):                     # indexed by kx
            v5 = hv.reshape(ho, 2, wo, 2, chid_p)
            even = v5[:, 0, :, 0, :]                 # input rows 0,2,...,H-2
            odd = v5[:, 1, :, 0, :]                  # input rows 1,3,...,H-1
            up = jnp.concatenate([zrow, odd[:ho - 1]], axis=0)  # rows -1,1,...
            srcs.append((up, even, odd))             # indexed by ky
        acc = jnp.zeros((ho, wo, chid_p), jnp.float32)
        for ky in range(3):
            for kx in range(3):
                acc = acc + srcs[kx][ky] * wd[ky * 3 + kx]
        acc = acc.reshape(ho * wo, chid_p)

    acc = jnp.clip(acc + b2_ref[...], 0.0, 6.0)

    # ---- 1x1 project conv (MXU, BN scale folded into w3) + bias -------------
    out = jnp.dot(acc.astype(w3_ref.dtype), w3_ref[...],
                  preferred_element_type=jnp.float32)
    out = out + b3_ref[...]
    if use_res:
        out = out + x2.astype(jnp.float32)
    o_ref[0] = out.astype(o_ref.dtype)


# --------------------------------------------------------------------------- #
# Host-side helpers
# --------------------------------------------------------------------------- #
def _round_up(x, m):
    return ((x + m - 1) // m) * m


def _pad2(a, rows, cols):
    return jnp.pad(a, ((0, rows - a.shape[0]), (0, cols - a.shape[1])))


def _fold_bn(gamma, beta, mean, var, cpad):
    scale = gamma / jnp.sqrt(var + BN_EPS)
    bias = beta - mean * scale
    pad = cpad - scale.shape[0]
    scale = jnp.pad(scale, (0, pad)).astype(jnp.float32)            # (cpad,)
    bias = jnp.pad(bias, (0, pad)).reshape(1, cpad).astype(jnp.float32)
    return scale, bias


def _vmem_limit_bytes():
    # Generation-dependent cap: ~48 MiB on v7x (64 MiB physical), 96 MiB on
    # v5e/v6e (128 MiB physical).
    try:
        cap = int(pltpu.get_tpu_info().vmem_capacity_bytes)
    except Exception:
        cap = 64 * 1024 * 1024
    return int(min(cap * 3 // 4, 96 * 1024 * 1024))


def make_params(key, inp, oup, expand_ratio):
    chid = inp * expand_ratio
    ks = jax.random.split(key, 9)
    p = {}
    # conv1: PyTorch weight (chid, inp, 1, 1) -> stored (inp, chid)
    p["w1"] = jax.random.normal(ks[0], (inp, chid), jnp.float32) * 0.1
    # depthwise: PyTorch weight (chid, 1, 3, 3) -> stored (9, chid) taps
    p["wd"] = (jax.random.normal(ks[1], (3, 3, chid), jnp.float32) * 0.1).reshape(9, chid)
    # conv3: PyTorch weight (oup, chid, 1, 1) -> stored (chid, oup)
    p["w3"] = jax.random.normal(ks[2], (chid, oup), jnp.float32) * 0.1
    # BatchNorm params (eval mode running stats)
    for name, c, ka, kb in (("bn1", chid, ks[3], ks[4]),
                            ("bn2", chid, ks[5], ks[6]),
                            ("bn3", oup, ks[7], ks[8])):
        gamma = 1.0 + 0.1 * jax.random.normal(ka, (c,), jnp.float32)
        beta = 0.1 * jax.random.normal(kb, (c,), jnp.float32)
        p[name] = (gamma, beta, jnp.zeros((c,), jnp.float32), jnp.ones((c,), jnp.float32))
    return p


def inverted_residual_nhwc(x_nhwc, params, *, inp, oup, stride, expand_ratio,
                           compute_dtype=jnp.bfloat16):
    """NHWC-native inverted residual block (bf16 data movement by default)."""
    assert stride in (1, 2)
    chid = inp * expand_ratio
    use_res = (stride == 1) and (inp == oup)

    N, H, W, cin = x_nhwc.shape
    assert cin == inp
    if stride == 2:
        assert H % 2 == 0 and W % 2 == 0, "stride-2 path assumes even spatial dims"
    Ho, Wo = H // stride, W // stride

    cin_p = _round_up(inp, LANES)
    chid_p = _round_up(chid, LANES)
    cout_p = _round_up(oup, LANES)

    # Channel-pad + flatten spatial: lane axis is a multiple of 128 everywhere.
    x_flat = jnp.pad(x_nhwc, ((0, 0), (0, 0), (0, 0), (0, cin_p - inp)))
    x_flat = x_flat.reshape(N, H * W, cin_p).astype(compute_dtype)

    # Fold BN: scales into the conv weights (host-side), biases stay f32.
    s1, b1 = _fold_bn(*params["bn1"], chid_p)
    s2, b2 = _fold_bn(*params["bn2"], chid_p)
    s3, b3 = _fold_bn(*params["bn3"], cout_p)
    w1 = (_pad2(params["w1"], cin_p, chid_p) * s1[None, :]).astype(compute_dtype)
    wd = (_pad2(params["wd"], 9, chid_p) * s2[None, :]).astype(compute_dtype)
    w3 = (_pad2(params["w3"], chid_p, cout_p) * s3[None, :]).astype(compute_dtype)

    kernel = functools.partial(_inverted_residual_kernel, H=H, W=W,
                               stride=stride, use_res=use_res)

    const = lambda shape: pl.BlockSpec(shape, lambda n: (0,) * len(shape))

    scratch_shapes = (
        [pltpu.VMEM((3, (H + 2) * W, chid_p), jnp.float32)] if stride == 1 else [])

    out_flat = pl.pallas_call(
        kernel,
        out_shape=jax.ShapeDtypeStruct((N, Ho * Wo, cout_p), compute_dtype),
        grid_spec=pltpu.PrefetchScalarGridSpec(
            num_scalar_prefetch=0,
            grid=(N,),
            in_specs=[
                pl.BlockSpec((1, H * W, cin_p), lambda n: (n, 0, 0)),   # x
                const((cin_p, chid_p)),                                 # w1*s1
                const((1, chid_p)),                                     # b1
                const((9, chid_p)),                                     # wd*s2
                const((1, chid_p)),                                     # b2
                const((chid_p, cout_p)),                                # w3*s3
                const((1, cout_p)),                                     # b3
            ],
            out_specs=pl.BlockSpec((1, Ho * Wo, cout_p), lambda n: (n, 0, 0)),
            scratch_shapes=scratch_shapes,
        ),
        compiler_params=pltpu.CompilerParams(
            dimension_semantics=("parallel",),
            vmem_limit_bytes=_vmem_limit_bytes()),
    )(x_flat, w1, b1, wd, b2, w3, b3)

    return out_flat.reshape(N, Ho, Wo, cout_p)[..., :oup]


def inverted_residual(x_nchw, params, *, inp, oup, stride, expand_ratio,
                      compute_dtype=jnp.bfloat16):
    """NCHW wrapper kept only for PyTorch interface parity.

    Real pipelines should keep activations NHWC end-to-end and call
    inverted_residual_nhwc directly (each transpose is an extra HBM pass).
    """
    x_nhwc = jnp.transpose(x_nchw, (0, 2, 3, 1))
    out = inverted_residual_nhwc(x_nhwc, params, inp=inp, oup=oup, stride=stride,
                                 expand_ratio=expand_ratio,
                                 compute_dtype=compute_dtype)
    return jnp.transpose(out, (0, 3, 1, 2))


# --------------------------------------------------------------------------- #
# Pure-JAX reference (lax.conv) for correctness checking
# --------------------------------------------------------------------------- #
def _reference(x_nchw, params, *, inp, oup, stride, expand_ratio):
    chid = inp * expand_ratio
    use_res = (stride == 1) and (inp == oup)
    x = jnp.transpose(x_nchw, (0, 2, 3, 1)).astype(jnp.float32)   # NHWC
    s1, b1 = _fold_bn(*params["bn1"], chid)
    s2, b2 = _fold_bn(*params["bn2"], chid)
    s3, b3 = _fold_bn(*params["bn3"], oup)
    dn = ("NHWC", "HWIO", "NHWC")

    w1 = params["w1"].reshape(1, 1, inp, chid)
    h = lax.conv_general_dilated(x, w1, (1, 1), "VALID", dimension_numbers=dn)
    h = jnp.clip(h * s1 + b1, 0.0, 6.0)

    wd = params["wd"].reshape(3, 3, 1, chid)
    h = lax.conv_general_dilated(h, wd, (stride, stride), ((1, 1), (1, 1)),
                                 dimension_numbers=dn, feature_group_count=chid)
    h = jnp.clip(h * s2 + b2, 0.0, 6.0)

    w3 = params["w3"].reshape(1, 1, chid, oup)
    h = lax.conv_general_dilated(h, w3, (1, 1), "VALID", dimension_numbers=dn)
    h = h * s3 + b3
    if use_res:
        h = h + x
    return jnp.transpose(h, (0, 3, 1, 2))


# --------------------------------------------------------------------------- #
if __name__ == "__main__":
    key = jax.random.PRNGKey(0)
    k_x, k_p = jax.random.split(key)

    N, INP, OUP, H, W = 2, 4, 4, 16, 16
    EXPAND = 2

    x = jax.random.normal(k_x, (N, INP, H, W), jnp.float32)
    params = make_params(k_p, INP, OUP, EXPAND)

    # stride = 1 (with residual), f32 data movement (tight tolerance)
    out_s1 = jax.block_until_ready(
        inverted_residual(x, params, inp=INP, oup=OUP, stride=1,
                          expand_ratio=EXPAND, compute_dtype=jnp.float32))
    ref_s1 = _reference(x, params, inp=INP, oup=OUP, stride=1, expand_ratio=EXPAND)
    assert out_s1.shape == ref_s1.shape
    assert float(jnp.max(jnp.abs(out_s1 - ref_s1))) < 5e-4, "stride-1 f32 mismatch"

    # stride = 2 (no residual), f32 data movement (tight tolerance)
    out_s2 = jax.block_until_ready(
        inverted_residual(x, params, inp=INP, oup=OUP, stride=2,
                          expand_ratio=EXPAND, compute_dtype=jnp.float32))
    ref_s2 = _reference(x, params, inp=INP, oup=OUP, stride=2, expand_ratio=EXPAND)
    assert out_s2.shape == ref_s2.shape
    assert float(jnp.max(jnp.abs(out_s2 - ref_s2))) < 5e-4, "stride-2 f32 mismatch"

    # default path: bf16 data movement, f32 accumulation (loose tolerance)
    out_bf = jax.block_until_ready(
        inverted_residual(x, params, inp=INP, oup=OUP, stride=1,
                          expand_ratio=EXPAND))
    err_bf = float(jnp.max(jnp.abs(out_bf.astype(jnp.float32) - ref_s1)))
    assert err_bf < 1.5e-1, "stride-1 bf16 mismatch"

    print("KERNEL_OK")
</pallas_src>

<mosaic_0001>
module attributes {stable_mosaic.version = 11 : i64} {
  func.func @_inverted_residual_kernel(%arg0: i32, %arg1: memref<1x256x128xf32, #tpu.memory_space<vmem>>, %arg2: memref<128x128xf32, #tpu.memory_space<vmem>>, %arg3: memref<1x128xf32, #tpu.memory_space<vmem>>, %arg4: memref<9x128xf32, #tpu.memory_space<vmem>>, %arg5: memref<1x128xf32, #tpu.memory_space<vmem>>, %arg6: memref<128x128xf32, #tpu.memory_space<vmem>>, %arg7: memref<1x128xf32, #tpu.memory_space<vmem>>, %arg8: memref<1x256x128xf32, #tpu.memory_space<vmem>>, %arg9: memref<3x288x128xf32, #tpu.memory_space<vmem>>) attributes {dimension_semantics = [#tpu.dimension_semantics<parallel>], iteration_bounds = array<i64: 2>, scalar_prefetch = 0 : i64, scratch_operands = 1 : i64, tpu.core_type = #tpu.core_type<tc>, window_params = [{transform_indices = @transform_0, window_bounds = array<i64: 1, 256, 128>}, {pipeline_mode = #tpu.pipeline_mode<synchronous>, transform_indices = @transform_1, window_bounds = array<i64: 128, 128>}, {pipeline_mode = #tpu.pipeline_mode<synchronous>, transform_indices = @transform_2, window_bounds = array<i64: 1, 128>}, {pipeline_mode = #tpu.pipeline_mode<synchronous>, transform_indices = @transform_3, window_bounds = array<i64: 9, 128>}, {pipeline_mode = #tpu.pipeline_mode<synchronous>, transform_indices = @transform_4, window_bounds = array<i64: 1, 128>}, {pipeline_mode = #tpu.pipeline_mode<synchronous>, transform_indices = @transform_5, window_bounds = array<i64: 128, 128>}, {pipeline_mode = #tpu.pipeline_mode<synchronous>, transform_indices = @transform_6, window_bounds = array<i64: 1, 128>}, {transform_indices = @transform_7, window_bounds = array<i64: 1, 256, 128>}]} {
    %c0 = arith.constant 0 : index
    %c0_0 = arith.constant 0 : index
    %c0_1 = arith.constant 0 : index
    %0 = vector.load %arg1[%c0, %c0_0, %c0_1] : memref<1x256x128xf32, #tpu.memory_space<vmem>>, vector<1x256x128xf32>
    %1 = vector.shape_cast %0 : vector<1x256x128xf32> to vector<256x128xf32>
    %c0_2 = arith.constant 0 : index
    %c0_3 = arith.constant 0 : index
    %2 = vector.load %arg2[%c0_2, %c0_3] : memref<128x128xf32, #tpu.memory_space<vmem>>, vector<128x128xf32>
    %cst = arith.constant dense<0.000000e+00> : vector<256x128xf32>
    %3 = tpu.matmul %1, %2, %cst {dimension_numbers = #tpu.dot_dimension_numbers<[1], [0], [0], [1], [0, 0, 1, 1], [], []>} : vector<256x128xf32>, vector<128x128xf32>, vector<256x128xf32> -> vector<256x128xf32>
    %c0_4 = arith.constant 0 : index
    %c0_5 = arith.constant 0 : index
    %4 = vector.load %arg3[%c0_4, %c0_5] : memref<1x128xf32, #tpu.memory_space<vmem>>, vector<1x128xf32>
    %5 = vector.broadcast %4 : vector<1x128xf32> to vector<256x128xf32>
    %6 = arith.addf %3, %5 : vector<256x128xf32>
    %cst_6 = arith.constant 0.000000e+00 : f32
    %cst_7 = arith.constant 6.000000e+00 : f32
    %7 = vector.broadcast %cst_6 : f32 to vector<256x128xf32>
    %8 = arith.maximumf %7, %6 : vector<256x128xf32>
    %9 = vector.broadcast %cst_7 : f32 to vector<256x128xf32>
    %10 = arith.minimumf %9, %8 : vector<256x128xf32>
    %c0_8 = arith.constant 0 : index
    %c0_9 = arith.constant 0 : index
    %11 = vector.load %arg4[%c0_8, %c0_9] : memref<9x128xf32, #tpu.memory_space<vmem>>, vector<9x128xf32>
    %12 = tpu.iota {dimensions = array<i32: 0>} : vector<256x1xi32>
    %c16_i32 = arith.constant 16 : i32
    %c0_i32 = arith.constant 0 : i32
    %13 = arith.cmpi eq, %c16_i32, %c0_i32 : i32
    %c1_i32 = arith.constant 1 : i32
    %14 = arith.select %13, %c1_i32, %c16_i32 : i32
    %15 = vector.broadcast %14 : i32 to vector<256x1xi32>
    %16 = arith.remsi %12, %15 : vector<256x1xi32>
    %c0_i32_10 = arith.constant 0 : i32
    %17 = vector.broadcast %c0_i32_10 : i32 to vector<256x1xi32>
    %18 = arith.cmpi ne, %16, %17 : vector<256x1xi32>
    %c0_i32_11 = arith.constant 0 : i32
    %19 = vector.broadcast %c0_i32_11 : i32 to vector<256x1xi32>
    %20 = arith.cmpi slt, %16, %19 : vector<256x1xi32>
    %c0_i32_12 = arith.constant 0 : i32
    %21 = arith.cmpi slt, %14, %c0_i32_12 : i32
    %22 = vector.broadcast %21 : i1 to vector<256x1xi1>
    %23 = vector.broadcast %22 : vector<256x1xi1> to vector<256x1xi1>
    %24 = arith.xori %20, %23 : vector<256x1xi1>
    %25 = arith.andi %24, %18 : vector<256x1xi1>
    %26 = vector.broadcast %14 : i32 to vector<256x1xi32>
    %27 = arith.addi %16, %26 : vector<256x1xi32>
    %28 = arith.select %25, %27, %16 : vector<256x1xi1>, vector<256x1xi32>
    %c0_i32_13 = arith.constant 0 : i32
    %29 = vector.broadcast %c0_i32_13 : i32 to vector<256x1xi32>
    %30 = arith.cmpi sgt, %28, %29 : vector<256x1xi32>
    %c1_i32_14 = arith.constant 1 : i32
    %31 = tpu.dynamic_rotate %10 by %c1_i32_14 dim 0 : vector<256x128xf32>, i32 -> vector<256x128xf32>
    %cst_15 = arith.constant 0.000000e+00 : f32
    %32 = vector.shape_cast %30 : vector<256x1xi1> to vector<256x1xi1>
    %33 = vector.broadcast %32 : vector<256x1xi1> to vector<256x128xi1>
    %34 = vector.broadcast %cst_15 : f32 to vector<256x128xf32>
    %35 = arith.select %33, %31, %34 : vector<256x128xi1>, vector<256x128xf32>
    %c15_i32 = arith.constant 15 : i32
    %36 = vector.broadcast %c15_i32 : i32 to vector<256x1xi32>
    %37 = arith.cmpi slt, %28, %36 : vector<256x1xi32>
    %c255_i32 = arith.constant 255 : i32
    %38 = tpu.dynamic_rotate %10 by %c255_i32 dim 0 : vector<256x128xf32>, i32 -> vector<256x128xf32>
    %cst_16 = arith.constant 0.000000e+00 : f32
    %39 = vector.shape_cast %37 : vector<256x1xi1> to vector<256x1xi1>
    %40 = vector.broadcast %39 : vector<256x1xi1> to vector<256x128xi1>
    %41 = vector.broadcast %cst_16 : f32 to vector<256x128xf32>
    %42 = arith.select %40, %38, %41 : vector<256x128xi1>, vector<256x128xf32>
    %cst_17 = arith.constant 0.000000e+00 : f32
    %43 = vector.broadcast %cst_17 : f32 to vector<16x128xf32>
    %c0_18 = arith.constant 0 : index
    %c0_19 = arith.constant 0 : index
    %c0_20 = arith.constant 0 : index
    %44 = vector.load %arg9[%c0_18, %c0_19, %c0_20] : memref<3x288x128xf32, #tpu.memory_space<vmem>>, vector<1x16x128xf32>
    %45 = vector.shape_cast %44 : vector<1x16x128xf32> to vector<16x128xf32>
    %46 = vector.shape_cast %43 : vector<16x128xf32> to vector<1x16x128xf32>
    tpu.vector_store %arg9[%c0_18, %c0_19, %c0_20], %46 {strides = array<i32>} : memref<3x288x128xf32, #tpu.memory_space<vmem>>, vector<1x16x128xf32>,
    %c0_21 = arith.constant 0 : index
    %c272 = arith.constant 272 : index
    %c0_22 = arith.constant 0 : index
    %47 = vector.load %arg9[%c0_21, %c272, %c0_22] : memref<3x288x128xf32, #tpu.memory_space<vmem>>, vector<1x16x128xf32>
    %48 = vector.shape_cast %47 : vector<1x16x128xf32> to vector<16x128xf32>
    %49 = vector.shape_cast %43 : vector<16x128xf32> to vector<1x16x128xf32>
    tpu.vector_store %arg9[%c0_21, %c272, %c0_22], %49 {strides = array<i32>} : memref<3x288x128xf32, #tpu.memory_space<vmem>>, vector<1x16x128xf32>,
    %c0_23 = arith.constant 0 : index
    %c16 = arith.constant 16 : index
    %c0_24 = arith.constant 0 : index
    %50 = vector.load %arg9[%c0_23, %c16, %c0_24] : memref<3x288x128xf32, #tpu.memory_space<vmem>>, vector<1x256x128xf32>
    %51 = vector.shape_cast %50 : vector<1x256x128xf32> to vector<256x128xf32>
    %52 = vector.shape_cast %35 : vector<256x128xf32> to vector<1x256x128xf32>
    tpu.vector_store %arg9[%c0_23, %c16, %c0_24], %52 {strides = array<i32>} : memref<3x288x128xf32, #tpu.memory_space<vmem>>, vector<1x256x128xf32>,
    %c1 = arith.constant 1 : index
    %c0_25 = arith.constant 0 : index
    %c0_26 = arith.constant 0 : index
    %53 = vector.load %arg9[%c1, %c0_25, %c0_26] : memref<3x288x128xf32, #tpu.memory_space<vmem>>, vector<1x16x128xf32>
    %54 = vector.shape_cast %53 : vector<1x16x128xf32> to vector<16x128xf32>
    %55 = vector.shape_cast %43 : vector<16x128xf32> to vector<1x16x128xf32>
    tpu.vector_store %arg9[%c1, %c0_25, %c0_26], %55 {strides = array<i32>} : memref<3x288x128xf32, #tpu.memory_space<vmem>>, vector<1x16x128xf32>,
    %c1_27 = arith.constant 1 : index
    %c272_28 = arith.constant 272 : index
    %c0_29 = arith.constant 0 : index
    %56 = vector.load %arg9[%c1_27, %c272_28, %c0_29] : memref<3x288x128xf32, #tpu.memory_space<vmem>>, vector<1x16x128xf32>
    %57 = vector.shape_cast %56 : vector<1x16x128xf32> to vector<16x128xf32>
    %58 = vector.shape_cast %43 : vector<16x128xf32> to vector<1x16x128xf32>
    tpu.vector_store %arg9[%c1_27, %c272_28, %c0_29], %58 {strides = array<i32>} : memref<3x288x128xf32, #tpu.memory_space<vmem>>, vector<1x16x128xf32>,
    %c1_30 = arith.constant 1 : index
    %c16_31 = arith.constant 16 : index
    %c0_32 = arith.constant 0 : index
    %59 = vector.load %arg9[%c1_30, %c16_31, %c0_32] : memref<3x288x128xf32, #tpu.memory_space<vmem>>, vector<1x256x128xf32>
    %60 = vector.shape_cast %59 : vector<1x256x128xf32> to vector<256x128xf32>
    %61 = vector.shape_cast %10 : vector<256x128xf32> to vector<1x256x128xf32>
    tpu.vector_store %arg9[%c1_30, %c16_31, %c0_32], %61 {strides = array<i32>} : memref<3x288x128xf32, #tpu.memory_space<vmem>>, vector<1x256x128xf32>,
    %c2 = arith.constant 2 : index
    %c0_33 = arith.constant 0 : index
    %c0_34 = arith.constant 0 : index
    %62 = vector.load %arg9[%c2, %c0_33, %c0_34] : memref<3x288x128xf32, #tpu.memory_space<vmem>>, vector<1x16x128xf32>
    %63 = vector.shape_cast %62 : vector<1x16x128xf32> to vector<16x128xf32>
    %64 = vector.shape_cast %43 : vector<16x128xf32> to vector<1x16x128xf32>
    tpu.vector_store %arg9[%c2, %c0_33, %c0_34], %64 {strides = array<i32>} : memref<3x288x128xf32, #tpu.memory_space<vmem>>, vector<1x16x128xf32>,
    %c2_35 = arith.constant 2 : index
    %c272_36 = arith.constant 272 : index
    %c0_37 = arith.constant 0 : index
    %65 = vector.load %arg9[%c2_35, %c272_36, %c0_37] : memref<3x288x128xf32, #tpu.memory_space<vmem>>, vector<1x16x128xf32>
    %66 = vector.shape_cast %65 : vector<1x16x128xf32> to vector<16x128xf32>
    %67 = vector.shape_cast %43 : vector<16x128xf32> to vector<1x16x128xf32>
    tpu.vector_store %arg9[%c2_35, %c272_36, %c0_37], %67 {strides = array<i32>} : memref<3x288x128xf32, #tpu.memory_space<vmem>>, vector<1x16x128xf32>,
    %c2_38 = arith.constant 2 : index
    %c16_39 = arith.constant 16 : index
    %c0_40 = arith.constant 0 : index
    %68 = vector.load %arg9[%c2_38, %c16_39, %c0_40] : memref<3x288x128xf32, #tpu.memory_space<vmem>>, vector<1x256x128xf32>
    %69 = vector.shape_cast %68 : vector<1x256x128xf32> to vector<256x128xf32>
    %70 = vector.shape_cast %42 : vector<256x128xf32> to vector<1x256x128xf32>
    tpu.vector_store %arg9[%c2_38, %c16_39, %c0_40], %70 {strides = array<i32>} : memref<3x288x128xf32, #tpu.memory_space<vmem>>, vector<1x256x128xf32>,
    %cst_41 = arith.constant 0.000000e+00 : f32
    %71 = vector.broadcast %cst_41 : f32 to vector<256x128xf32>
    %c0_42 = arith.constant 0 : index
    %c0_43 = arith.constant 0 : index
    %c0_44 = arith.constant 0 : index
    %72 = vector.load %arg9[%c0_42, %c0_43, %c0_44] : memref<3x288x128xf32, #tpu.memory_space<vmem>>, vector<1x256x128xf32>
    %73 = vector.shape_cast %72 : vector<1x256x128xf32> to vector<256x128xf32>
    %74 = vector.extract_strided_slice %11 {offsets = [0, 0], sizes = [1, 128], strides = [1, 1]} : vector<9x128xf32> to vector<1x128xf32>
    %75 = vector.shape_cast %74 : vector<1x128xf32> to vector<128xf32>
    %76 = vector.shape_cast %75 : vector<128xf32> to vector<1x128xf32>
    %77 = vector.broadcast %76 : vector<1x128xf32> to vector<256x128xf32>
    %78 = arith.mulf %73, %77 : vector<256x128xf32>
    %79 = arith.addf %71, %78 : vector<256x128xf32>
    %c1_45 = arith.constant 1 : index
    %c0_46 = arith.constant 0 : index
    %c0_47 = arith.constant 0 : index
    %80 = vector.load %arg9[%c1_45, %c0_46, %c0_47] : memref<3x288x128xf32, #tpu.memory_space<vmem>>, vector<1x256x128xf32>
    %81 = vector.shape_cast %80 : vector<1x256x128xf32> to vector<256x128xf32>
    %82 = vector.extract_strided_slice %11 {offsets = [1, 0], sizes = [1, 128], strides = [1, 1]} : vector<9x128xf32> to vector<1x128xf32>
    %83 = vector.shape_cast %82 : vector<1x128xf32> to vector<128xf32>
    %84 = vector.shape_cast %83 : vector<128xf32> to vector<1x128xf32>
    %85 = vector.broadcast %84 : vector<1x128xf32> to vector<256x128xf32>
    %86 = arith.mulf %81, %85 : vector<256x128xf32>
    %87 = arith.addf %79, %86 : vector<256x128xf32>
    %c2_48 = arith.constant 2 : index
    %c0_49 = arith.constant 0 : index
    %c0_50 = arith.constant 0 : index
    %88 = vector.load %arg9[%c2_48, %c0_49, %c0_50] : memref<3x288x128xf32, #tpu.memory_space<vmem>>, vector<1x256x128xf32>
    %89 = vector.shape_cast %88 : vector<1x256x128xf32> to vector<256x128xf32>
    %90 = vector.extract_strided_slice %11 {offsets = [2, 0], sizes = [1, 128], strides = [1, 1]} : vector<9x128xf32> to vector<1x128xf32>
    %91 = vector.shape_cast %90 : vector<1x128xf32> to vector<128xf32>
    %92 = vector.shape_cast %91 : vector<128xf32> to vector<1x128xf32>
    %93 = vector.broadcast %92 : vector<1x128xf32> to vector<256x128xf32>
    %94 = arith.mulf %89, %93 : vector<256x128xf32>
    %95 = arith.addf %87, %94 : vector<256x128xf32>
    %c0_51 = arith.constant 0 : index
    %c16_52 = arith.constant 16 : index
    %c0_53 = arith.constant 0 : index
    %96 = vector.load %arg9[%c0_51, %c16_52, %c0_53] : memref<3x288x128xf32, #tpu.memory_space<vmem>>, vector<1x256x128xf32>
    %97 = vector.shape_cast %96 : vector<1x256x128xf32> to vector<256x128xf32>
    %98 = vector.extract_strided_slice %11 {offsets = [3, 0], sizes = [1, 128], strides = [1, 1]} : vector<9x128xf32> to vector<1x128xf32>
    %99 = vector.shape_cast %98 : vector<1x128xf32> to vector<128xf32>
    %100 = vector.shape_cast %99 : vector<128xf32> to vector<1x128xf32>
    %101 = vector.broadcast %100 : vector<1x128xf32> to vector<256x128xf32>
    %102 = arith.mulf %97, %101 : vector<256x128xf32>
    %103 = arith.addf %95, %102 : vector<256x128xf32>
    %c1_54 = arith.constant 1 : index
    %c16_55 = arith.constant 16 : index
    %c0_56 = arith.constant 0 : index
    %104 = vector.load %arg9[%c1_54, %c16_55, %c0_56] : memref<3x288x128xf32, #tpu.memory_space<vmem>>, vector<1x256x128xf32>
    %105 = vector.shape_cast %104 : vector<1x256x128xf32> to vector<256x128xf32>
    %106 = vector.extract_strided_slice %11 {offsets = [4, 0], sizes = [1, 128], strides = [1, 1]} : vector<9x128xf32> to vector<1x128xf32>
    %107 = vector.shape_cast %106 : vector<1x128xf32> to vector<128xf32>
    %108 = vector.shape_cast %107 : vector<128xf32> to vector<1x128xf32>
    %109 = vector.broadcast %108 : vector<1x128xf32> to vector<256x128xf32>
    %110 = arith.mulf %105, %109 : vector<256x128xf32>
    %111 = arith.addf %103, %110 : vector<256x128xf32>
    %c2_57 = arith.constant 2 : index
    %c16_58 = arith.constant 16 : index
    %c0_59 = arith.constant 0 : index
    %112 = vector.load %arg9[%c2_57, %c16_58, %c0_59] : memref<3x288x128xf32, #tpu.memory_space<vmem>>, vector<1x256x128xf32>
    %113 = vector.shape_cast %112 : vector<1x256x128xf32> to vector<256x128xf32>
    %114 = vector.extract_strided_slice %11 {offsets = [5, 0], sizes = [1, 128], strides = [1, 1]} : vector<9x128xf32> to vector<1x128xf32>
    %115 = vector.shape_cast %114 : vector<1x128xf32> to vector<128xf32>
    %116 = vector.shape_cast %115 : vector<128xf32> to vector<1x128xf32>
    %117 = vector.broadcast %116 : vector<1x128xf32> to vector<256x128xf32>
    %118 = arith.mulf %113, %117 : vector<256x128xf32>
    %119 = arith.addf %111, %118 : vector<256x128xf32>
    %c0_60 = arith.constant 0 : index
    %c32 = arith.constant 32 : index
    %c0_61 = arith.constant 0 : index
    %120 = vector.load %arg9[%c0_60, %c32, %c0_61] : memref<3x288x128xf32, #tpu.memory_space<vmem>>, vector<1x256x128xf32>
    %121 = vector.shape_cast %120 : vector<1x256x128xf32> to vector<256x128xf32>
    %122 = vector.extract_strided_slice %11 {offsets = [6, 0], sizes = [1, 128], strides = [1, 1]} : vector<9x128xf32> to vector<1x128xf32>
    %123 = vector.shape_cast %122 : vector<1x128xf32> to vector<128xf32>
    %124 = vector.shape_cast %123 : vector<128xf32> to vector<1x128xf32>
    %125 = vector.broadcast %124 : vector<1x128xf32> to vector<256x128xf32>
    %126 = arith.mulf %121, %125 : vector<256x128xf32>
    %127 = arith.addf %119, %126 : vector<256x128xf32>
    %c1_62 = arith.constant 1 : index
    %c32_63 = arith.constant 32 : index
    %c0_64 = arith.constant 0 : index
    %128 = vector.load %arg9[%c1_62, %c32_63, %c0_64] : memref<3x288x128xf32, #tpu.memory_space<vmem>>, vector<1x256x128xf32>
    %129 = vector.shape_cast %128 : vector<1x256x128xf32> to vector<256x128xf32>
    %130 = vector.extract_strided_slice %11 {offsets = [7, 0], sizes = [1, 128], strides = [1, 1]} : vector<9x128xf32> to vector<1x128xf32>
    %131 = vector.shape_cast %130 : vector<1x128xf32> to vector<128xf32>
    %132 = vector.shape_cast %131 : vector<128xf32> to vector<1x128xf32>
    %133 = vector.broadcast %132 : vector<1x128xf32> to vector<256x128xf32>
    %134 = arith.mulf %129, %133 : vector<256x128xf32>
    %135 = arith.addf %127, %134 : vector<256x128xf32>
    %c2_65 = arith.constant 2 : index
    %c32_66 = arith.constant 32 : index
    %c0_67 = arith.constant 0 : index
    %136 = vector.load %arg9[%c2_65, %c32_66, %c0_67] : memref<3x288x128xf32, #tpu.memory_space<vmem>>, vector<1x256x128xf32>
    %137 = vector.shape_cast %136 : vector<1x256x128xf32> to vector<256x128xf32>
    %138 = vector.extract_strided_slice %11 {offsets = [8, 0], sizes = [1, 128], strides = [1, 1]} : vector<9x128xf32> to vector<1x128xf32>
    %139 = vector.shape_cast %138 : vector<1x128xf32> to vector<128xf32>
    %140 = vector.shape_cast %139 : vector<128xf32> to vector<1x128xf32>
    %141 = vector.broadcast %140 : vector<1x128xf32> to vector<256x128xf32>
    %142 = arith.mulf %137, %141 : vector<256x128xf32>
    %143 = arith.addf %135, %142 : vector<256x128xf32>
    %c0_68 = arith.constant 0 : index
    %c0_69 = arith.constant 0 : index
    %144 = vector.load %arg5[%c0_68, %c0_69] : memref<1x128xf32, #tpu.memory_space<vmem>>, vector<1x128xf32>
    %145 = vector.broadcast %144 : vector<1x128xf32> to vector<256x128xf32>
    %146 = arith.addf %143, %145 : vector<256x128xf32>
    %cst_70 = arith.constant 0.000000e+00 : f32
    %cst_71 = arith.constant 6.000000e+00 : f32
    %147 = vector.broadcast %cst_70 : f32 to vector<256x128xf32>
    %148 = arith.maximumf %147, %146 : vector<256x128xf32>
    %149 = vector.broadcast %cst_71 : f32 to vector<256x128xf32>
    %150 = arith.minimumf %149, %148 : vector<256x128xf32>
    %c0_72 = arith.constant 0 : index
    %c0_73 = arith.constant 0 : index
    %151 = vector.load %arg6[%c0_72, %c0_73] : memref<128x128xf32, #tpu.memory_space<vmem>>, vector<128x128xf32>
    %cst_74 = arith.constant dense<0.000000e+00> : vector<256x128xf32>
    %152 = tpu.matmul %150, %151, %cst_74 {dimension_numbers = #tpu.dot_dimension_numbers<[1], [0], [0], [1], [0, 0, 1, 1], [], []>} : vector<256x128xf32>, vector<128x128xf32>, vector<256x128xf32> -> vector<256x128xf32>
    %c0_75 = arith.constant 0 : index
    %c0_76 = arith.constant 0 : index
    %153 = vector.load %arg7[%c0_75, %c0_76] : memref<1x128xf32, #tpu.memory_space<vmem>>, vector<1x128xf32>
    %154 = vector.broadcast %153 : vector<1x128xf32> to vector<256x128xf32>
    %155 = arith.addf %152, %154 : vector<256x128xf32>
    %156 = arith.addf %155, %1 : vector<256x128xf32>
    %c0_77 = arith.constant 0 : index
    %c0_78 = arith.constant 0 : index
    %c0_79 = arith.constant 0 : index
    %157 = vector.load %arg8[%c0_77, %c0_78, %c0_79] : memref<1x256x128xf32, #tpu.memory_space<vmem>>, vector<1x256x128xf32>
    %158 = vector.shape_cast %157 : vector<1x256x128xf32> to vector<256x128xf32>
    %159 = vector.shape_cast %156 : vector<256x128xf32> to vector<1x256x128xf32>
    tpu.vector_store %arg8[%c0_77, %c0_78, %c0_79], %159 {strides = array<i32>} : memref<1x256x128xf32, #tpu.memory_space<vmem>>, vector<1x256x128xf32>,
    return
  }
  func.func @transform_0(%arg0: i32) -> (i32, i32, i32) {
    %c0_i32 = arith.constant 0 : i32
    %c0_i32_0 = arith.constant 0 : i32
    %c0_i32_1 = arith.constant 0 : i32
    return %arg0, %c0_i32, %c0_i32_0 : i32, i32, i32
  }
  func.func @transform_1(%arg0: i32) -> (i32, i32) {
    %c0_i32 = arith.constant 0 : i32
    %c0_i32_0 = arith.constant 0 : i32
    %c0_i32_1 = arith.constant 0 : i32
    return %c0_i32, %c0_i32_0 : i32, i32
  }
  func.func @transform_2(%arg0: i32) -> (i32, i32) {
    %c0_i32 = arith.constant 0 : i32
    %c0_i32_0 = arith.constant 0 : i32
    %c0_i32_1 = arith.constant 0 : i32
    return %c0_i32, %c0_i32_0 : i32, i32
  }
  func.func @transform_3(%arg0: i32) -> (i32, i32) {
    %c0_i32 = arith.constant 0 : i32
    %c0_i32_0 = arith.constant 0 : i32
    %c0_i32_1 = arith.constant 0 : i32
    return %c0_i32, %c0_i32_0 : i32, i32
  }
  func.func @transform_4(%arg0: i32) -> (i32, i32) {
    %c0_i32 = arith.constant 0 : i32
    %c0_i32_0 = arith.constant 0 : i32
    %c0_i32_1 = arith.constant 0 : i32
    return %c0_i32, %c0_i32_0 : i32, i32
  }
  func.func @transform_5(%arg0: i32) -> (i32, i32) {
    %c0_i32 = arith.constant 0 : i32
    %c0_i32_0 = arith.constant 0 : i32
    %c0_i32_1 = arith.constant 0 : i32
    return %c0_i32, %c0_i32_0 : i32, i32
  }
  func.func @transform_6(%arg0: i32) -> (i32, i32) {
    %c0_i32 = arith.constant 0 : i32
    %c0_i32_0 = arith.constant 0 : i32
    %c0_i32_1 = arith.constant 0 : i32
    return %c0_i32, %c0_i32_0 : i32, i32
  }
  func.func @transform_7(%arg0: i32) -> (i32, i32, i32) {
    %c0_i32 = arith.constant 0 : i32
    %c0_i32_0 = arith.constant 0 : i32
    %c0_i32_1 = arith.constant 0 : i32
    return %arg0, %c0_i32, %c0_i32_0 : i32, i32, i32
  }
}

</mosaic_0001>

<llo_original>
// kernel: tpu_custom_call.1
$region0: #{tpu_custom_call.1}
  #allocation0 [shape = 'u32[]', space=smem, size = 0x4, offset = 0x4, fixed_abs, tag = 'smem constant byte address 0x4 - core index']
  #allocation1 [shape = 'u32[144,128]{1,0:T(1,128)}', space=vmem, size = 0x12000, scoped, tag = 'internal scratch']
  #allocation2 [shape = 'f32[3,288,128]{2,1,0:T(8,128)}', space=vmem, size = 0x6c000, scoped, tag = 'scratch operand']
  %s0 = inlined_call_operand.hbm [shape: f32[2,256,128], index: 0, kind: input, shape index: {}]
  %s1 = inlined_call_operand.hbm [shape: f32[128,128], index: 1, kind: input, shape index: {}]
  %s2 = inlined_call_operand.vmem [shape: f32[1,128], index: 2, kind: input, shape index: {}]
  %s3 = inlined_call_operand.hbm [shape: f32[9,128], index: 3, kind: input, shape index: {}]
  %s4 = inlined_call_operand.vmem [shape: f32[1,128], index: 4, kind: input, shape index: {}]
  %s5 = inlined_call_operand.hbm [shape: f32[128,128], index: 5, kind: input, shape index: {}]
  %s6 = inlined_call_operand.vmem [shape: f32[1,128], index: 6, kind: input, shape index: {}]
  %s7 = inlined_call_operand.hbm [shape: f32[2,256,128], index: 7, kind: output, shape index: {}]
  %s8 = sld [smem:[#allocation0]]
  $region77: #{tpu_custom_call.1} parent=0
    _
  %s10 = ssub.s32 1, %s8
  %s11 = scalar_select 0, %s10, %s8
  $region1: #{tpu_custom_call.1} parent=0
    #allocation3 [shape = 'u8[262144]{0}', space=vmem, size = 0x40000, scoped, tag = 'input window, operand 0']
    #allocation4 [shape = 's32[2]{0}', space=sflag, size = 0x8, scoped, tag = 'scoped memory for tpu_custom_call.1']
    #allocation5 [shape = 's32[2]{0}', space=sflag, size = 0x8, scoped, tag = 'scoped memory for tpu_custom_call.1']
    #allocation6 [shape = 'u8[65536]{0}', space=vmem, size = 0x10000, scoped, tag = 'input window, operand 1, single buffered']
    #allocation7 [shape = 's32[1]{0}', space=sflag, size = 0x4, scoped, tag = 'scoped memory for tpu_custom_call.1']
    #allocation8 [shape = 'u8[8192]{0}', space=vmem, size = 0x2000, scoped, tag = 'input window, operand 3, single buffered']
    #allocation9 [shape = 'u8[65536]{0}', space=vmem, size = 0x10000, scoped, tag = 'input window, operand 5, single buffered']
    #allocation10 [shape = 's32[1]{0}', space=sflag, size = 0x4, scoped, tag = 'scoped memory for tpu_custom_call.1']
    #allocation11 [shape = 'u8[262144]{0}', space=vmem, size = 0x40000, scoped, tag = 'output window, operand 0']
    %12 = vsyncpa [#allocation4], 0
    %s13 = scalar_lea.sflag [#allocation4], 1
    %14 = vsyncpa %s13, 0
    %15 = vsyncpa [#allocation7], 0
    %16 = vsyncpa [#allocation10], 0
    %17 = vsyncpa [#allocation5], 0
    %s18 = scalar_lea.sflag [#allocation5], 1
    %19 = vsyncpa %s18, 0
    loop: start=0, step=1, limit=4
    $region2: #{tpu_custom_call.1} parent=1 // loop_pre_header
      _
    $region3: #{tpu_custom_call.1} parent=1 // loop_header
      %s21 = sphi 0, %s25
      %p22 = scmp.ge.s32.totalorder %s21, 4
      %s31 = sphi 0, %s33
      %s34 = sphi 0, %s31
      %s35 = sphi 0, %s34
      %s51 = sphi 0, %s35
      %s55 = sphi 0, %s55
      %s57 = sphi 0, %s55
      %s58 = sphi 0, %s57
      %s72 = sphi 0, %s58
      %s76 = sphi 0, %s76
      %s78 = sphi 0, %s76
      %s79 = sphi 0, %s78
      %s93 = sphi 0, %s79
      %s97 = sphi 0, %s97
      %s99 = sphi 0, %s97
      %s100 = sphi 0, %s99
      %s114 = sphi 0, %s100
      %s118 = sphi 0, %s118
      %s120 = sphi 0, %s118
      %s121 = sphi 0, %s120
      %s135 = sphi 0, %s121
      %s139 = sphi 0, %s139
      %s141 = sphi 0, %s139
      %s142 = sphi 0, %s141
      %s156 = sphi 0, %s142
      %s160 = sphi 0, %s160
      %s162 = sphi 0, %s160
      %s163 = sphi 0, %s162
      %s177 = sphi 0, %s163
      %s183 = sphi 0, %s185
      %s186 = sphi 0, %s183
      %s187 = sphi 0, %s186
      %s203 = sphi 0, %s187
    $region4: #{tpu_custom_call.1} parent=1 // loop_header_branch
      %24 = sbr.rel (%p22) target = $region8
    $region5: #{tpu_custom_call.1} parent=1 // loop_body
      %s26 = ssub.s32 %s21, 1
      %s27 = ssub.s32 %s21, 2
      %s28 = sadd.s32 %s21, 1
      %s29 = ssub.s32 %s21, %s28
      %p30 = scmp.eq.s32.totalorder %s29, 0
      %s32 = sadd.s32 %s31, 1
      %s33 = scalar_select %p30, %s31, %s32
      %p36 = pneg %p30
      %p37 = scmp.eq.s32.totalorder %s21, 1
      %p38 = por %p36, %p37
      %p39 = scmp.ne.s32.totalorder %s31, %s34
      %p40 = scmp.eq.s32.totalorder %s21, 0
      %p41 = por %p39, %p40
      %p42 = scmp.ne.s32.totalorder %s31, %s34
      %p43 = scmp.eq.s32.totalorder %s26, 1
      %p44 = por %p42, %p43
      %p45 = scmp.ne.s32.totalorder %s34, %s35
      %p46 = scmp.eq.s32.totalorder %s26, 0
      %p47 = por %p45, %p46
      %p48 = scmp.ne.s32.totalorder %s34, %s35
      %p49 = scmp.eq.s32.totalorder %s27, 1
      %p50 = por %p48, %p49
      %p52 = scmp.ne.s32.totalorder %s35, %s51
      %p53 = scmp.eq.s32.totalorder %s27, 0
      %p54 = por %p52, %p53
      %s56 = sadd.s32 %s55, 1
      %p59 = scmp.eq.s32.totalorder %s21, 1
      %p60 = scmp.ne.s32.totalorder %s55, %s57
      %p61 = scmp.eq.s32.totalorder %s21, 0
      %p62 = por %p60, %p61
      %p63 = scmp.ne.s32.totalorder %s55, %s57
      %p64 = scmp.eq.s32.totalorder %s26, 1
      %p65 = por %p63, %p64
      %p66 = scmp.ne.s32.totalorder %s57, %s58
      %p67 = scmp.eq.s32.totalorder %s26, 0
      %p68 = por %p66, %p67
      %p69 = scmp.ne.s32.totalorder %s57, %s58
      %p70 = scmp.eq.s32.totalorder %s27, 1
      %p71 = por %p69, %p70
      %p73 = scmp.ne.s32.totalorder %s58, %s72
      %p74 = scmp.eq.s32.totalorder %s27, 0
      %p75 = por %p73, %p74
      %s77 = sadd.s32 %s76, 1
      %p80 = scmp.eq.s32.totalorder %s21, 1
      %p81 = scmp.ne.s32.totalorder %s76, %s78
      %p82 = scmp.eq.s32.totalorder %s21, 0
      %p83 = por %p81, %p82
      %p84 = scmp.ne.s32.totalorder %s76, %s78
      %p85 = scmp.eq.s32.totalorder %s26, 1
      %p86 = por %p84, %p85
      %p87 = scmp.ne.s32.totalorder %s78, %s79
      %p88 = scmp.eq.s32.totalorder %s26, 0
      %p89 = por %p87, %p88
      %p90 = scmp.ne.s32.totalorder %s78, %s79
      %p91 = scmp.eq.s32.totalorder %s27, 1
      %p92 = por %p90, %p91
      %p94 = scmp.ne.s32.totalorder %s79, %s93
      %p95 = scmp.eq.s32.totalorder %s27, 0
      %p96 = por %p94, %p95
      %s98 = sadd.s32 %s97, 1
      %p101 = scmp.eq.s32.totalorder %s21, 1
      %p102 = scmp.ne.s32.totalorder %s97, %s99
      %p103 = scmp.eq.s32.totalorder %s21, 0
      %p104 = por %p102, %p103
      %p105 = scmp.ne.s32.totalorder %s97, %s99
      %p106 = scmp.eq.s32.totalorder %s26, 1
      %p107 = por %p105, %p106
      %p108 = scmp.ne.s32.totalorder %s99, %s100
      %p109 = scmp.eq.s32.totalorder %s26, 0
      %p110 = por %p108, %p109
      %p111 = scmp.ne.s32.totalorder %s99, %s100
      %p112 = scmp.eq.s32.totalorder %s27, 1
      %p113 = por %p111, %p112
      %p115 = scmp.ne.s32.totalorder %s100, %s114
      %p116 = scmp.eq.s32.totalorder %s27, 0
      %p117 = por %p115, %p116
      %s119 = sadd.s32 %s118, 1
      %p122 = scmp.eq.s32.totalorder %s21, 1
      %p123 = scmp.ne.s32.totalorder %s118, %s120
      %p124 = scmp.eq.s32.totalorder %s21, 0
      %p125 = por %p123, %p124
      %p126 = scmp.ne.s32.totalorder %s118, %s120
      %p127 = scmp.eq.s32.totalorder %s26, 1
      %p128 = por %p126, %p127
      %p129 = scmp.ne.s32.totalorder %s120, %s121
      %p130 = scmp.eq.s32.totalorder %s26, 0
      %p131 = por %p129, %p130
      %p132 = scmp.ne.s32.totalorder %s120, %s121
      %p133 = scmp.eq.s32.totalorder %s27, 1
      %p134 = por %p132, %p133
      %p136 = scmp.ne.s32.totalorder %s121, %s135
      %p137 = scmp.eq.s32.totalorder %s27, 0
      %p138 = por %p136, %p137
      %s140 = sadd.s32 %s139, 1
      %p143 = scmp.eq.s32.totalorder %s21, 1
      %p144 = scmp.ne.s32.totalorder %s139, %s141
      %p145 = scmp.eq.s32.totalorder %s21, 0
      %p146 = por %p144, %p145
      %p147 = scmp.ne.s32.totalorder %s139, %s141
      %p148 = scmp.eq.s32.totalorder %s26, 1
      %p149 = por %p147, %p148
      %p150 = scmp.ne.s32.totalorder %s141, %s142
      %p151 = scmp.eq.s32.totalorder %s26, 0
      %p152 = por %p150, %p151
      %p153 = scmp.ne.s32.totalorder %s141, %s142
      %p154 = scmp.eq.s32.totalorder %s27, 1
      %p155 = por %p153, %p154
      %p157 = scmp.ne.s32.totalorder %s142, %s156
      %p158 = scmp.eq.s32.totalorder %s27, 0
      %p159 = por %p157, %p158
      %s161 = sadd.s32 %s160, 1
      %p164 = scmp.eq.s32.totalorder %s21, 1
      %p165 = scmp.ne.s32.totalorder %s160, %s162
      %p166 = scmp.eq.s32.totalorder %s21, 0
      %p167 = por %p165, %p166
      %p168 = scmp.ne.s32.totalorder %s160, %s162
      %p169 = scmp.eq.s32.totalorder %s26, 1
      %p170 = por %p168, %p169
      %p171 = scmp.ne.s32.totalorder %s162, %s163
      %p172 = scmp.eq.s32.totalorder %s26, 0
      %p173 = por %p171, %p172
      %p174 = scmp.ne.s32.totalorder %s162, %s163
      %p175 = scmp.eq.s32.totalorder %s27, 1
      %p176 = por %p174, %p175
      %p178 = scmp.ne.s32.totalorder %s163, %s177
      %p179 = scmp.eq.s32.totalorder %s27, 0
      %p180 = por %p178, %p179
      %s181 = ssub.s32 %s21, %s28
      %p182 = scmp.eq.s32.totalorder %s181, 0
      %s184 = sadd.s32 %s183, 1
      %s185 = scalar_select %p182, %s183, %s184
      %p188 = pneg %p182
      %p189 = scmp.eq.s32.totalorder %s21, 1
      %p190 = por %p188, %p189
      %p191 = scmp.ne.s32.totalorder %s183, %s186
      %p192 = scmp.eq.s32.totalorder %s21, 0
      %p193 = por %p191, %p192
      %p194 = scmp.ne.s32.totalorder %s183, %s186
      %p195 = scmp.eq.s32.totalorder %s26, 1
      %p196 = por %p194, %p195
      %p197 = scmp.ne.s32.totalorder %s186, %s187
      %p198 = scmp.eq.s32.totalorder %s26, 0
      %p199 = por %p197, %p198
      %p200 = scmp.ne.s32.totalorder %s186, %s187
      %p201 = scmp.eq.s32.totalorder %s27, 1
      %p202 = por %p200, %p201
      %p204 = scmp.ne.s32.totalorder %s187, %s203
      %p205 = scmp.eq.s32.totalorder %s27, 0
      %p206 = por %p204, %p205
      %p207 = scmp.le.s32.totalorder 1, %s21
      %p208 = scmp.lt.s32.totalorder %s21, 3
      %p209 = pnand %p207, %p208
      %p210 = pneg %p209
      // Predicated region
      $region9: #{tpu_custom_call.1} parent=5 // pred_check
        _
      $region10: #{tpu_custom_call.1} parent=5 // pred_check_branch
        %212 = sbr.rel (%p209) target = $region12
      $region11: #{tpu_custom_call.1} parent=5 // pred_region
        %s213 = ssub.s32 %s21, 1
        // Predicated region
        $region13: #{tpu_custom_call.1} parent=11 // pred_check
          %p214 = pneg %p68
        $region14: #{tpu_custom_call.1} parent=11 // pred_check_branch
          %216 = sbr.rel (%p214) target = $region16
        $region15: #{tpu_custom_call.1} parent=11 // pred_region
          %s218 = ssub.s32 2048, 2048
          %219 = vsyncadd [#allocation7], %s218
          %s220 = sshll.u32 [#allocation6], 4
          %s221 = int_to_ptr.vmem [resolvable:$true] %s220
          %226 = dma.hbm_to_vmem [thread:$0]  %s1, 2048, %s221, [#allocation7], 128, 128, 8
        $region16: #{tpu_custom_call.1} parent=11 // pred_fallthru
          _
        // Predicated region
        $region17: #{tpu_custom_call.1} parent=11 // pred_check
          %p227 = pneg %p89
        $region18: #{tpu_custom_call.1} parent=11 // pred_check_branch
          %229 = sbr.rel (%p227) target = $region20
        $region19: #{tpu_custom_call.1} parent=11 // pred_region
          _
        $region20: #{tpu_custom_call.1} parent=11 // pred_fallthru
          _
        // Predicated region
        $region21: #{tpu_custom_call.1} parent=11 // pred_check
          %p230 = pneg %p110
        $region22: #{tpu_custom_call.1} parent=11 // pred_check_branch
          %232 = sbr.rel (%p230) target = $region24
        $region23: #{tpu_custom_call.1} parent=11 // pred_region
          %s234 = ssub.s32 256, 256
          %235 = vsyncadd [#allocation7], %s234
          %s236 = sshll.u32 [#allocation8], 4
          %s237 = int_to_ptr.vmem [resolvable:$true] %s236
          %242 = dma.hbm_to_vmem [thread:$0]  %s3, 256, %s237, [#allocation7], 128, 128, 8
        $region24: #{tpu_custom_call.1} parent=11 // pred_fallthru
          _
        // Predicated region
        $region25: #{tpu_custom_call.1} parent=11 // pred_check
          %p243 = pneg %p131
        $region26: #{tpu_custom_call.1} parent=11 // pred_check_branch
          %245 = sbr.rel (%p243) target = $region28
        $region27: #{tpu_custom_call.1} parent=11 // pred_region
          _
        $region28: #{tpu_custom_call.1} parent=11 // pred_fallthru
          _
        // Predicated region
        $region29: #{tpu_custom_call.1} parent=11 // pred_check
          %p246 = pneg %p152
        $region30: #{tpu_custom_call.1} parent=11 // pred_check_branch
          %248 = sbr.rel (%p246) target = $region32
        $region31: #{tpu_custom_call.1} parent=11 // pred_region
          %s250 = ssub.s32 2048, 2048
          %251 = vsyncadd [#allocation10], %s250
          %s252 = sshll.u32 [#allocation9], 4
          %s253 = int_to_ptr.vmem [resolvable:$true] %s252
          %258 = dma.hbm_to_vmem [thread:$0]  %s5, 2048, %s253, [#allocation10], 128, 128, 8
        $region32: #{tpu_custom_call.1} parent=11 // pred_fallthru
          _
        // Predicated region
        $region33: #{tpu_custom_call.1} parent=11 // pred_check
          %p259 = pneg %p173
        $region34: #{tpu_custom_call.1} parent=11 // pred_check_branch
          %261 = sbr.rel (%p259) target = $region36
        $region35: #{tpu_custom_call.1} parent=11 // pred_region
          _
        $region36: #{tpu_custom_call.1} parent=11 // pred_fallthru
          _
      $region12: #{tpu_custom_call.1} parent=5 // pred_fallthru
        _
      %p262 = scmp.lt.s32.totalorder %s21, 2
      // Predicated region
      $region37: #{tpu_custom_call.1} parent=5 // pred_check
        %p263 = pneg %p262
      $region38: #{tpu_custom_call.1} parent=5 // pred_check_branch
        %265 = sbr.rel (%p263) target = $region40
      $region39: #{tpu_custom_call.1} parent=5 // pred_region
        // Predicated region
        $region41: #{tpu_custom_call.1} parent=39 // pred_check
          %p266 = pneg %p41
        $region42: #{tpu_custom_call.1} parent=39 // pred_check_branch
          %268 = sbr.rel (%p266) target = $region44
        $region43: #{tpu_custom_call.1} parent=39 // pred_region
          %s269 = sand.u32 %s31, 1
          %s270 = scalar_lea.sflag [#allocation4], %s269
          %s271 = sand.u32 %s31, 1
          %s272 = smul.addr %s271, 256
          %s273 = scalar_lea.vmem [#allocation3], %s272
          %s275 = ssub.s32 4096, 4096
          %276 = vsyncadd %s270, %s275
          %s277 = smul.addr %s21, 32
          %s278 = smul.addr %s277, 128
          %s279 = scalar_lea.hbm %s0, %s278
          %s280 = sshll.u32 %s273, 4
          %s281 = int_to_ptr.vmem [resolvable:$true] %s280
          %286 = dma.hbm_to_vmem [thread:$0]  %s279, 4096, %s281, %s270, 128, 128, 8
        $region44: #{tpu_custom_call.1} parent=39 // pred_fallthru
          _
      $region40: #{tpu_custom_call.1} parent=5 // pred_fallthru
        _
      %p287 = scmp.le.s32.totalorder 1, %s21
      %p288 = scmp.lt.s32.totalorder %s21, 3
      %p289 = pnand %p287, %p288
      %p290 = pneg %p289
      // Predicated region
      $region45: #{tpu_custom_call.1} parent=5 // pred_check
        _
      $region46: #{tpu_custom_call.1} parent=5 // pred_check_branch
        %292 = sbr.rel (%p289) target = $region48
      $region47: #{tpu_custom_call.1} parent=5 // pred_region
        %s293 = ssub.s32 %s21, 1
        %s294 = sand.u32 %s34, 1
        %s295 = scalar_lea.sflag [#allocation4], %s294
        %s296 = sand.u32 %s34, 1
        %s297 = smul.addr %s296, 256
        %s298 = scalar_lea.vmem [#allocation3], %s297
        // Predicated region
        $region49: #{tpu_custom_call.1} parent=47 // pred_check
          %p299 = pneg %p47
        $region50: #{tpu_custom_call.1} parent=47 // pred_check_branch
          %301 = sbr.rel (%p299) target = $region52
        $region51: #{tpu_custom_call.1} parent=47 // pred_region
          %302 = dma.done %s295, 4096
        $region52: #{tpu_custom_call.1} parent=47 // pred_fallthru
          _
        // Predicated region
        $region53: #{tpu_custom_call.1} parent=47 // pred_check
          %p303 = pneg %p68
        $region54: #{tpu_custom_call.1} parent=47 // pred_check_branch
          %305 = sbr.rel (%p303) target = $region56
        $region55: #{tpu_custom_call.1} parent=47 // pred_region
          %306 = dma.done [#allocation7], 2048
        $region56: #{tpu_custom_call.1} parent=47 // pred_fallthru
          _
        // Predicated region
        $region57: #{tpu_custom_call.1} parent=47 // pred_check
          %p307 = pneg %p110
        $region58: #{tpu_custom_call.1} parent=47 // pred_check_branch
          %309 = sbr.rel (%p307) target = $region60
        $region59: #{tpu_custom_call.1} parent=47 // pred_region
          %310 = dma.done [#allocation7], 256
        $region60: #{tpu_custom_call.1} parent=47 // pred_fallthru
          _
        // Predicated region
        $region61: #{tpu_custom_call.1} parent=47 // pred_check
          %p311 = pneg %p152
        $region62: #{tpu_custom_call.1} parent=47 // pred_check_branch
          %313 = sbr.rel (%p311) target = $region64
        $region63: #{tpu_custom_call.1} parent=47 // pred_region
          %314 = dma.done [#allocation10], 2048
        $region64: #{tpu_custom_call.1} parent=47 // pred_fallthru
          _
        %s315 = sand.u32 %s34, 1
        %s316 = scalar_lea.sflag [#allocation4], %s315
        %s317 = sand.u32 %s34, 1
        %s318 = smul.addr %s317, 256
        %s319 = scalar_lea.vmem [#allocation3], %s318
        %p320 = pneg %p47
        %p321 = pneg %p44
        %p322 = pneg %p68
        %p323 = pneg %p65
        %p324 = pneg %p89
        %p325 = pneg %p86
        %p326 = pneg %p110
        %p327 = pneg %p107
        %p328 = pneg %p131
        %p329 = pneg %p128
        %p330 = pneg %p152
        %p331 = pneg %p149
        %p332 = pneg %p173
        %p333 = pneg %p170
        %p334 = pneg %p199
        %p335 = pneg %p196
        %s336 = sand.u32 %s186, 1
        %s337 = scalar_lea.sflag [#allocation5], %s336
        %s338 = sand.u32 %s186, 1
        %s339 = smul.addr %s338, 256
        %s340 = scalar_lea.vmem [#allocation11], %s339
        %v341 = vld [vmem:[%s298] sm:$0xff]
        %v342 = vld [vmem:[%s298 + $0x8] sm:$0xff]
        %v343 = vld [vmem:[%s298 + $0x10] sm:$0xff]
        %v344 = vld [vmem:[%s298 + $0x18] sm:$0xff]
        %v345 = vld [vmem:[%s298 + $0x20] sm:$0xff]
        %v346 = vld [vmem:[%s298 + $0x28] sm:$0xff]
        %v347 = vld [vmem:[%s298 + $0x30] sm:$0xff]
        %v348 = vld [vmem:[%s298 + $0x38] sm:$0xff]
        %v349 = vld [vmem:[%s298 + $0x40] sm:$0xff]
        %v350 = vld [vmem:[%s298 + $0x48] sm:$0xff]
        %v351 = vld [vmem:[%s298 + $0x50] sm:$0xff]
        %v352 = vld [vmem:[%s298 + $0x58] sm:$0xff]
        %v353 = vld [vmem:[%s298 + $0x60] sm:$0xff]
        %v354 = vld [vmem:[%s298 + $0x68] sm:$0xff]
        %v355 = vld [vmem:[%s298 + $0x70] sm:$0xff]
        %v356 = vld [vmem:[%s298 + $0x78] sm:$0xff]
        %v357 = vld [vmem:[%s298 + $0x80] sm:$0xff]
        %v358 = vld [vmem:[%s298 + $0x88] sm:$0xff]
        %v359 = vld [vmem:[%s298 + $0x90] sm:$0xff]
        %v360 = vld [vmem:[%s298 + $0x98] sm:$0xff]
        %v361 = vld [vmem:[%s298 + $0xa0] sm:$0xff]
        %v362 = vld [vmem:[%s298 + $0xa8] sm:$0xff]
        %v363 = vld [vmem:[%s298 + $0xb0] sm:$0xff]
        %v364 = vld [vmem:[%s298 + $0xb8] sm:$0xff]
        %v365 = vld [vmem:[%s298 + $0xc0] sm:$0xff]
        %v366 = vld [vmem:[%s298 + $0xc8] sm:$0xff]
        %v367 = vld [vmem:[%s298 + $0xd0] sm:$0xff]
        %v368 = vld [vmem:[%s298 + $0xd8] sm:$0xff]
        %v369 = vld [vmem:[%s298 + $0xe0] sm:$0xff]
        %v370 = vld [vmem:[%s298 + $0xe8] sm:$0xff]
        %v371 = vld [vmem:[%s298 + $0xf0] sm:$0xff]
        %v372 = vld [vmem:[%s298 + $0xf8] sm:$0xff]
        %v373 = vld [vmem:[#allocation6] sm:$0xff]
        %v374 = vld [vmem:[#allocation6 + $0x8] sm:$0xff]
        %v375 = vld [vmem:[#allocation6 + $0x10] sm:$0xff]
        %v376 = vld [vmem:[#allocation6 + $0x18] sm:$0xff]
        %v377 = vld [vmem:[#allocation6 + $0x20] sm:$0xff]
        %v378 = vld [vmem:[#allocation6 + $0x28] sm:$0xff]
        %v379 = vld [vmem:[#allocation6 + $0x30] sm:$0xff]
        %v380 = vld [vmem:[#allocation6 + $0x38] sm:$0xff]
        %v381 = vld [vmem:[#allocation6 + $0x40] sm:$0xff]
        %v382 = vld [vmem:[#allocation6 + $0x48] sm:$0xff]
        %v383 = vld [vmem:[#allocation6 + $0x50] sm:$0xff]
        %v384 = vld [vmem:[#allocation6 + $0x58] sm:$0xff]
        %v385 = vld [vmem:[#allocation6 + $0x60] sm:$0xff]
        %v386 = vld [vmem:[#allocation6 + $0x68] sm:$0xff]
        %v387 = vld [vmem:[#allocation6 + $0x70] sm:$0xff]
        %v388 = vld [vmem:[#allocation6 + $0x78] sm:$0xff]
        %v389 = vld [vmem:[%s2] sm:$0x1]
        %v391 = vlaneseq
        %v392 = vshrl.u32 %v391, 7
        %v393 = vsub.s32 0, %v392
        %v394 = vrot.slane %v389, %v393
        %396 = vmatprep.subr.mxu0 0.0
        %397 = vmatpush1.msra.mxu0 %v388
        %398 = vmatprep.subr.mxu0 0.0
        %399 = vmatpush1.msra.mxu0 %v387
        %400 = vmatprep.subr.mxu0 0.0
        %401 = vmatpush1.msra.mxu0 %v386
        %402 = vmatprep.subr.mxu0 0.0
        %403 = vmatpush1.msra.mxu0 %v385
        %404 = vmatprep.subr.mxu0 0.0
        %405 = vmatpush1.msra.mxu0 %v384
        %406 = vmatprep.subr.mxu0 0.0
        %407 = vmatpush1.msra.mxu0 %v383
        %408 = vmatprep.subr.mxu0 0.0
        %409 = vmatpush1.msra.mxu0 %v382
        %410 = vmatprep.subr.mxu0 0.0
        %411 = vmatpush1.msra.mxu0 %v381
        %412 = vmatprep.subr.mxu0 0.0
        %413 = vmatpush1.msra.mxu0 %v380
        %414 = vmatprep.subr.mxu0 0.0
        %415 = vmatpush1.msra.mxu0 %v379
        %416 = vmatprep.subr.mxu0 0.0
        %417 = vmatpush1.msra.mxu0 %v378
        %418 = vmatprep.subr.mxu0 0.0
        %419 = vmatpush1.msra.mxu0 %v377
        %420 = vmatprep.subr.mxu0 0.0
        %421 = vmatpush1.msra.mxu0 %v376
        %422 = vmatprep.subr.mxu0 0.0
        %423 = vmatpush1.msra.mxu0 %v375
        %424 = vmatprep.subr.mxu0 0.0
        %425 = vmatpush1.msra.mxu0 %v374
        %426 = vmatprep.subr.mxu0 0.0
        %427 = vmatpush1.msra.mxu0 %v373
        %428 = vmatprep.subr.mxu0 0.0
        %429 = vmatpush2.msra.mxu0 0.0
        %430 = vmatprep.subr.mxu0 0.0
        %431 = vmatpush2.msra.mxu0 0.0
        %432 = vmatprep.subr.mxu0 0.0
        %433 = vmatpush2.msra.mxu0 0.0
        %434 = vmatprep.subr.mxu0 0.0
        %435 = vmatpush2.msra.mxu0 0.0
        %436 = vmatprep.subr.mxu0 0.0
        %437 = vmatpush2.msra.mxu0 0.0
        %438 = vmatprep.subr.mxu0 0.0
        %439 = vmatpush2.msra.mxu0 0.0
        %440 = vmatprep.subr.mxu0 0.0
        %441 = vmatpush2.msra.mxu0 0.0
        %442 = vmatprep.subr.mxu0 0.0
        %443 = vmatpush2.msra.mxu0 0.0
        %444 = vmatprep.subr.mxu0 0.0
        %445 = vmatpush2.msra.mxu0 0.0
        %446 = vmatprep.subr.mxu0 0.0
        %447 = vmatpush2.msra.mxu0 0.0
        %448 = vmatprep.subr.mxu0 0.0
        %449 = vmatpush2.msra.mxu0 0.0
        %450 = vmatprep.subr.mxu0 0.0
        %451 = vmatpush2.msra.mxu0 0.0
        %452 = vmatprep.subr.mxu0 0.0
        %453 = vmatpush2.msra.mxu0 0.0
        %454 = vmatprep.subr.mxu0 0.0
        %455 = vmatpush2.msra.mxu0 0.0
        %456 = vmatprep.subr.mxu0 0.0
        %457 = vmatpush2.msra.mxu0 0.0
        %458 = vmatprep.subr.mxu0 0.0
        %459 = vmatpush2.msra.mxu0 0.0
        %460 = vmatprep.mubr.f32.mxu0 0.0
        %461 = vmatmul.mubr.f32.gmra.mxu0 %v341
        %v462 = vpop.f32.mrf.mxu0
        %v463 = vadd.f32 %v394, %v462
        %v464 = vpop.f32.mrf.mxu0
        %465 = vmatprep.mubr.f32.mxu0 0.0
        %466 = vmatmul.mubr.f32.gmra.mxu0 %v342
        %v467 = vpop.f32.mrf.mxu0
        %v468 = vadd.f32 %v394, %v467
        %v469 = vpop.f32.mrf.mxu0
        %470 = vmatprep.mubr.f32.mxu0 0.0
        %471 = vmatmul.mubr.f32.gmra.mxu0 %v343
        %v472 = vpop.f32.mrf.mxu0
        %v473 = vadd.f32 %v394, %v472
        %v474 = vpop.f32.mrf.mxu0
        %475 = vmatprep.mubr.f32.mxu0 0.0
        %476 = vmatmul.mubr.f32.gmra.mxu0 %v344
        %v477 = vpop.f32.mrf.mxu0
        %v478 = vadd.f32 %v394, %v477
        %v479 = vpop.f32.mrf.mxu0
        %480 = vmatprep.mubr.f32.mxu0 0.0
        %481 = vmatmul.mubr.f32.gmra.mxu0 %v345
        %v482 = vpop.f32.mrf.mxu0
        %v483 = vadd.f32 %v394, %v482
        %v484 = vpop.f32.mrf.mxu0
        %485 = vmatprep.mubr.f32.mxu0 0.0
        %486 = vmatmul.mubr.f32.gmra.mxu0 %v346
        %v487 = vpop.f32.mrf.mxu0
        %v488 = vadd.f32 %v394, %v487
        %v489 = vpop.f32.mrf.mxu0
        %490 = vmatprep.mubr.f32.mxu0 0.0
        %491 = vmatmul.mubr.f32.gmra.mxu0 %v347
        %v492 = vpop.f32.mrf.mxu0
        %v493 = vadd.f32 %v394, %v492
        %v494 = vpop.f32.mrf.mxu0
        %495 = vmatprep.mubr.f32.mxu0 0.0
        %496 = vmatmul.mubr.f32.gmra.mxu0 %v348
        %v497 = vpop.f32.mrf.mxu0
        %v498 = vadd.f32 %v394, %v497
        %v499 = vpop.f32.mrf.mxu0
        %500 = vmatprep.mubr.f32.mxu0 0.0
        %501 = vmatmul.mubr.f32.gmra.mxu0 %v349
        %v502 = vpop.f32.mrf.mxu0
        %v503 = vadd.f32 %v394, %v502
        %v504 = vpop.f32.mrf.mxu0
        %505 = vmatprep.mubr.f32.mxu0 0.0
        %506 = vmatmul.mubr.f32.gmra.mxu0 %v350
        %v507 = vpop.f32.mrf.mxu0
        %v508 = vadd.f32 %v394, %v507
        %v509 = vpop.f32.mrf.mxu0
        %510 = vmatprep.mubr.f32.mxu0 0.0
        %511 = vmatmul.mubr.f32.gmra.mxu0 %v351
        %v512 = vpop.f32.mrf.mxu0
        %v513 = vadd.f32 %v394, %v512
        %v514 = vpop.f32.mrf.mxu0
        %515 = vmatprep.mubr.f32.mxu0 0.0
        %516 = vmatmul.mubr.f32.gmra.mxu0 %v352
        %v517 = vpop.f32.mrf.mxu0
        %v518 = vadd.f32 %v394, %v517
        %v519 = vpop.f32.mrf.mxu0
        %520 = vmatprep.mubr.f32.mxu0 0.0
        %521 = vmatmul.mubr.f32.gmra.mxu0 %v353
        %v522 = vpop.f32.mrf.mxu0
        %v523 = vadd.f32 %v394, %v522
        %v524 = vpop.f32.mrf.mxu0
        %525 = vmatprep.mubr.f32.mxu0 0.0
        %526 = vmatmul.mubr.f32.gmra.mxu0 %v354
        %v527 = vpop.f32.mrf.mxu0
        %v528 = vadd.f32 %v394, %v527
        %v529 = vpop.f32.mrf.mxu0
        %530 = vmatprep.mubr.f32.mxu0 0.0
        %531 = vmatmul.mubr.f32.gmra.mxu0 %v355
        %v532 = vpop.f32.mrf.mxu0
        %v533 = vadd.f32 %v394, %v532
        %v534 = vpop.f32.mrf.mxu0
        %535 = vmatprep.mubr.f32.mxu0 0.0
        %536 = vmatmul.mubr.f32.gmra.mxu0 %v356
        %v537 = vpop.f32.mrf.mxu0
        %v538 = vadd.f32 %v394, %v537
        %v539 = vpop.f32.mrf.mxu0
        %540 = vmatprep.mubr.f32.mxu0 0.0
        %541 = vmatmul.mubr.f32.gmra.mxu0 %v357
        %v542 = vpop.f32.mrf.mxu0
        %v543 = vadd.f32 %v394, %v542
        %v544 = vpop.f32.mrf.mxu0
        %545 = vmatprep.mubr.f32.mxu0 0.0
        %546 = vmatmul.mubr.f32.gmra.mxu0 %v358
        %v547 = vpop.f32.mrf.mxu0
        %v548 = vadd.f32 %v394, %v547
        %v549 = vpop.f32.mrf.mxu0
        %550 = vmatprep.mubr.f32.mxu0 0.0
        %551 = vmatmul.mubr.f32.gmra.mxu0 %v359
        %v552 = vpop.f32.mrf.mxu0
        %v553 = vadd.f32 %v394, %v552
        %v554 = vpop.f32.mrf.mxu0
        %555 = vmatprep.mubr.f32.mxu0 0.0
        %556 = vmatmul.mubr.f32.gmra.mxu0 %v360
        %v557 = vpop.f32.mrf.mxu0
        %v558 = vadd.f32 %v394, %v557
        %v559 = vpop.f32.mrf.mxu0
        %560 = vmatprep.mubr.f32.mxu0 0.0
        %561 = vmatmul.mubr.f32.gmra.mxu0 %v361
        %v562 = vpop.f32.mrf.mxu0
        %v563 = vadd.f32 %v394, %v562
        %v564 = vpop.f32.mrf.mxu0
        %565 = vmatprep.mubr.f32.mxu0 0.0
        %566 = vmatmul.mubr.f32.gmra.mxu0 %v362
        %v567 = vpop.f32.mrf.mxu0
        %v568 = vadd.f32 %v394, %v567
        %v569 = vpop.f32.mrf.mxu0
        %570 = vmatprep.mubr.f32.mxu0 0.0
        %571 = vmatmul.mubr.f32.gmra.mxu0 %v363
        %v572 = vpop.f32.mrf.mxu0
        %v573 = vadd.f32 %v394, %v572
        %v574 = vpop.f32.mrf.mxu0
        %575 = vmatprep.mubr.f32.mxu0 0.0
        %576 = vmatmul.mubr.f32.gmra.mxu0 %v364
        %v577 = vpop.f32.mrf.mxu0
        %v578 = vadd.f32 %v394, %v577
        %v579 = vpop.f32.mrf.mxu0
        %580 = vmatprep.mubr.f32.mxu0 0.0
        %581 = vmatmul.mubr.f32.gmra.mxu0 %v365
        %v582 = vpop.f32.mrf.mxu0
        %v583 = vadd.f32 %v394, %v582
        %v584 = vpop.f32.mrf.mxu0
        %585 = vmatprep.mubr.f32.mxu0 0.0
        %586 = vmatmul.mubr.f32.gmra.mxu0 %v366
        %v587 = vpop.f32.mrf.mxu0
        %v588 = vadd.f32 %v394, %v587
        %v589 = vpop.f32.mrf.mxu0
        %590 = vmatprep.mubr.f32.mxu0 0.0
        %591 = vmatmul.mubr.f32.gmra.mxu0 %v367
        %v592 = vpop.f32.mrf.mxu0
        %v593 = vadd.f32 %v394, %v592
        %v594 = vpop.f32.mrf.mxu0
        %595 = vmatprep.mubr.f32.mxu0 0.0
        %596 = vmatmul.mubr.f32.gmra.mxu0 %v368
        %v597 = vpop.f32.mrf.mxu0
        %v598 = vadd.f32 %v394, %v597
        %v599 = vpop.f32.mrf.mxu0
        %600 = vmatprep.mubr.f32.mxu0 0.0
        %601 = vmatmul.mubr.f32.gmra.mxu0 %v369
        %v602 = vpop.f32.mrf.mxu0
        %v603 = vadd.f32 %v394, %v602
        %v604 = vpop.f32.mrf.mxu0
        %605 = vmatprep.mubr.f32.mxu0 0.0
        %606 = vmatmul.mubr.f32.gmra.mxu0 %v370
        %v607 = vpop.f32.mrf.mxu0
        %v608 = vadd.f32 %v394, %v607
        %v609 = vpop.f32.mrf.mxu0
        %610 = vmatprep.mubr.f32.mxu0 0.0
        %611 = vmatmul.mubr.f32.gmra.mxu0 %v371
        %v612 = vpop.f32.mrf.mxu0
        %v613 = vadd.f32 %v394, %v612
        %v614 = vpop.f32.mrf.mxu0
        %615 = vmatprep.mubr.f32.mxu0 0.0
        %616 = vmatmul.mubr.f32.gmra.mxu0 %v372
        %v617 = vpop.f32.mrf.mxu0
        %v618 = vadd.f32 %v394, %v617
        %v619 = vpop.f32.mrf.mxu0
        %620 = vdwg.mxu0
        %v621 = vmax.f32 %v463, 0.0
        %v622 = vmax.f32 %v468, 0.0
        %v623 = vmax.f32 %v473, 0.0
        %v624 = vmax.f32 %v478, 0.0
        %v625 = vmax.f32 %v483, 0.0
        %v626 = vmax.f32 %v488, 0.0
        %v627 = vmax.f32 %v493, 0.0
        %v628 = vmax.f32 %v498, 0.0
        %v629 = vmax.f32 %v503, 0.0
        %v630 = vmax.f32 %v508, 0.0
        %v631 = vmax.f32 %v513, 0.0
        %v632 = vmax.f32 %v518, 0.0
        %v633 = vmax.f32 %v523, 0.0
        %v634 = vmax.f32 %v528, 0.0
        %v635 = vmax.f32 %v533, 0.0
        %v636 = vmax.f32 %v538, 0.0
        %v637 = vmax.f32 %v543, 0.0
        %v638 = vmax.f32 %v548, 0.0
        %v639 = vmax.f32 %v553, 0.0
        %v640 = vmax.f32 %v558, 0.0
        %v641 = vmax.f32 %v563, 0.0
        %v642 = vmax.f32 %v568, 0.0
        %v643 = vmax.f32 %v573, 0.0
        %v644 = vmax.f32 %v578, 0.0
        %v645 = vmax.f32 %v583, 0.0
        %v646 = vmax.f32 %v588, 0.0
        %v647 = vmax.f32 %v593, 0.0
        %v648 = vmax.f32 %v598, 0.0
        %v649 = vmax.f32 %v603, 0.0
        %v650 = vmax.f32 %v608, 0.0
        %v651 = vmax.f32 %v613, 0.0
        %v652 = vmax.f32 %v618, 0.0
        %v653 = vmin.f32 %v621, 6.0
        %v654 = vmin.f32 %v622, 6.0
        %v655 = vmin.f32 %v623, 6.0
        %v656 = vmin.f32 %v624, 6.0
        %v657 = vmin.f32 %v625, 6.0
        %v658 = vmin.f32 %v626, 6.0
        %v659 = vmin.f32 %v627, 6.0
        %v660 = vmin.f32 %v628, 6.0
        %v661 = vmin.f32 %v629, 6.0
        %v662 = vmin.f32 %v630, 6.0
        %v663 = vmin.f32 %v631, 6.0
        %v664 = vmin.f32 %v632, 6.0
        %v665 = vmin.f32 %v633, 6.0
        %v666 = vmin.f32 %v634, 6.0
        %v667 = vmin.f32 %v635, 6.0
        %v668 = vmin.f32 %v636, 6.0
        %v669 = vmin.f32 %v637, 6.0
        %v670 = vmin.f32 %v638, 6.0
        %v671 = vmin.f32 %v639, 6.0
        %v672 = vmin.f32 %v640, 6.0
        %v673 = vmin.f32 %v641, 6.0
        %v674 = vmin.f32 %v642, 6.0
        %v675 = vmin.f32 %v643, 6.0
        %v676 = vmin.f32 %v644, 6.0
        %v677 = vmin.f32 %v645, 6.0
        %v678 = vmin.f32 %v646, 6.0
        %v679 = vmin.f32 %v647, 6.0
        %v680 = vmin.f32 %v648, 6.0
        %v681 = vmin.f32 %v649, 6.0
        %v682 = vmin.f32 %v650, 6.0
        %v683 = vmin.f32 %v651, 6.0
        %v684 = vmin.f32 %v652, 6.0
        %v685 = vld [vmem:[#allocation8] sm:$0xff]
        %v686 = vld [vmem:[#allocation8 + $0x8] sm:$0x1]
        %v687 = vlaneseq
        %v688 = vshrl.u32 %v687, 7
        %v689 = vadd.s32 %v688, 8
        %v690 = vadd.s32 %v688, 16
        %v691 = vadd.s32 %v688, 24
        %v692 = vadd.s32 %v688, 32
        %v693 = vadd.s32 %v688, 40
        %v694 = vadd.s32 %v688, 48
        %v695 = vadd.s32 %v688, 56
        %v696 = vadd.s32 %v688, 64
        %v697 = vadd.s32 %v688, 72
        %v698 = vadd.s32 %v688, 80
        %v699 = vadd.s32 %v688, 88
        %v700 = vadd.s32 %v688, 96
        %v701 = vadd.s32 %v688, 104
        %v702 = vadd.s32 %v688, 112
        %v703 = vadd.s32 %v688, 120
        %v704 = vadd.s32 %v688, 128
        %v705 = vadd.s32 %v688, 136
        %v706 = vadd.s32 %v688, 144
        %v707 = vadd.s32 %v688, 152
        %v708 = vadd.s32 %v688, 160
        %v709 = vadd.s32 %v688, 168
        %v710 = vadd.s32 %v688, 176
        %v711 = vadd.s32 %v688, 184
        %v712 = vadd.s32 %v688, 192
        %v713 = vadd.s32 %v688, 200
        %v714 = vadd.s32 %v688, 208
        %v715 = vadd.s32 %v688, 216
        %v716 = vadd.s32 %v688, 224
        %v717 = vadd.s32 %v688, 232
        %v718 = vadd.s32 %v688, 240
        %v719 = vadd.s32 %v688, 248
        %vm720 = vcmp.lt.s32.totalorder %v688, 0
        %v721 = vsub.s32 0, %v688
        %v722 = vsel %vm720, %v721, %v688
        %v723 = vshrl.u32 %v722, 4
        %v724 = vand.u32 %v722, 15
        %v725 = vsub.s32 0, %v724
        %v726 = vsel %vm720, %v725, %v724
        %vm727 = vcmp.lt.s32.totalorder %v689, 0
        %v728 = vsub.s32 0, %v689
        %v729 = vsel %vm727, %v728, %v689
        %v730 = vshrl.u32 %v729, 4
        %v731 = vand.u32 %v729, 15
        %v732 = vsub.s32 0, %v731
        %v733 = vsel %vm727, %v732, %v731
        %vm734 = vcmp.lt.s32.totalorder %v690, 0
        %v735 = vsub.s32 0, %v690
        %v736 = vsel %vm734, %v735, %v690
        %v737 = vshrl.u32 %v736, 4
        %v738 = vand.u32 %v736, 15
        %v739 = vsub.s32 0, %v738
        %v740 = vsel %vm734, %v739, %v738
        %vm741 = vcmp.lt.s32.totalorder %v691, 0
        %v742 = vsub.s32 0, %v691
        %v743 = vsel %vm741, %v742, %v691
        %v744 = vshrl.u32 %v743, 4
        %v745 = vand.u32 %v743, 15
        %v746 = vsub.s32 0, %v745
        %v747 = vsel %vm741, %v746, %v745
        %vm748 = vcmp.lt.s32.totalorder %v692, 0
        %v749 = vsub.s32 0, %v692
        %v750 = vsel %vm748, %v749, %v692
        %v751 = vshrl.u32 %v750, 4
        %v752 = vand.u32 %v750, 15
        %v753 = vsub.s32 0, %v752
        %v754 = vsel %vm748, %v753, %v752
        %vm755 = vcmp.lt.s32.totalorder %v693, 0
        %v756 = vsub.s32 0, %v693
        %v757 = vsel %vm755, %v756, %v693
        %v758 = vshrl.u32 %v757, 4
        %v759 = vand.u32 %v757, 15
        %v760 = vsub.s32 0, %v759
        %v761 = vsel %vm755, %v760, %v759
        %vm762 = vcmp.lt.s32.totalorder %v694, 0
        %v763 = vsub.s32 0, %v694
        %v764 = vsel %vm762, %v763, %v694
        %v765 = vshrl.u32 %v764, 4
        %v766 = vand.u32 %v764, 15
        %v767 = vsub.s32 0, %v766
        %v768 = vsel %vm762, %v767, %v766
        %vm769 = vcmp.lt.s32.totalorder %v695, 0
        %v770 = vsub.s32 0, %v695
        %v771 = vsel %vm769, %v770, %v695
        %v772 = vshrl.u32 %v771, 4
        %v773 = vand.u32 %v771, 15
        %v774 = vsub.s32 0, %v773
        %v775 = vsel %vm769, %v774, %v773
        %vm776 = vcmp.lt.s32.totalorder %v696, 0
        %v777 = vsub.s32 0, %v696
        %v778 = vsel %vm776, %v777, %v696
        %v779 = vshrl.u32 %v778, 4
        %v780 = vand.u32 %v778, 15
        %v781 = vsub.s32 0, %v780
        %v782 = vsel %vm776, %v781, %v780
        %vm783 = vcmp.lt.s32.totalorder %v697, 0
        %v784 = vsub.s32 0, %v697
        %v785 = vsel %vm783, %v784, %v697
        %v786 = vshrl.u32 %v785, 4
        %v787 = vand.u32 %v785, 15
        %v788 = vsub.s32 0, %v787
        %v789 = vsel %vm783, %v788, %v787
        %vm790 = vcmp.lt.s32.totalorder %v698, 0
        %v791 = vsub.s32 0, %v698
        %v792 = vsel %vm790, %v791, %v698
        %v793 = vshrl.u32 %v792, 4
        %v794 = vand.u32 %v792, 15
        %v795 = vsub.s32 0, %v794
        %v796 = vsel %vm790, %v795, %v794
        %vm797 = vcmp.lt.s32.totalorder %v699, 0
        %v798 = vsub.s32 0, %v699
        %v799 = vsel %vm797, %v798, %v699
        %v800 = vshrl.u32 %v799, 4
        %v801 = vand.u32 %v799, 15
        %v802 = vsub.s32 0, %v801
        %v803 = vsel %vm797, %v802, %v801
        %vm804 = vcmp.lt.s32.totalorder %v700, 0
        %v805 = vsub.s32 0, %v700
        %v806 = vsel %vm804, %v805, %v700
        %v807 = vshrl.u32 %v806, 4
        %v808 = vand.u32 %v806, 15
        %v809 = vsub.s32 0, %v808
        %v810 = vsel %vm804, %v809, %v808
        %vm811 = vcmp.lt.s32.totalorder %v701, 0
        %v812 = vsub.s32 0, %v701
        %v813 = vsel %vm811, %v812, %v701
        %v814 = vshrl.u32 %v813, 4
        %v815 = vand.u32 %v813, 15
        %v816 = vsub.s32 0, %v815
        %v817 = vsel %vm811, %v816, %v815
        %vm818 = vcmp.lt.s32.totalorder %v702, 0
        %v819 = vsub.s32 0, %v702
        %v820 = vsel %vm818, %v819, %v702
        %v821 = vshrl.u32 %v820, 4
        %v822 = vand.u32 %v820, 15
        %v823 = vsub.s32 0, %v822
        %v824 = vsel %vm818, %v823, %v822
        %vm825 = vcmp.lt.s32.totalorder %v703, 0
        %v826 = vsub.s32 0, %v703
        %v827 = vsel %vm825, %v826, %v703
        %v828 = vshrl.u32 %v827, 4
        %v829 = vand.u32 %v827, 15
        %v830 = vsub.s32 0, %v829
        %v831 = vsel %vm825, %v830, %v829
        %vm832 = vcmp.lt.s32.totalorder %v704, 0
        %v833 = vsub.s32 0, %v704
        %v834 = vsel %vm832, %v833, %v704
        %v835 = vshrl.u32 %v834, 4
        %v836 = vand.u32 %v834, 15
        %v837 = vsub.s32 0, %v836
        %v838 = vsel %vm832, %v837, %v836
        %vm839 = vcmp.lt.s32.totalorder %v705, 0
        %v840 = vsub.s32 0, %v705
        %v841 = vsel %vm839, %v840, %v705
        %v842 = vshrl.u32 %v841, 4
        %v843 = vand.u32 %v841, 15
        %v844 = vsub.s32 0, %v843
        %v845 = vsel %vm839, %v844, %v843
        %vm846 = vcmp.lt.s32.totalorder %v706, 0
        %v847 = vsub.s32 0, %v706
        %v848 = vsel %vm846, %v847, %v706
        %v849 = vshrl.u32 %v848, 4
        %v850 = vand.u32 %v848, 15
        %v851 = vsub.s32 0, %v850
        %v852 = vsel %vm846, %v851, %v850
        %vm853 = vcmp.lt.s32.totalorder %v707, 0
        %v854 = vsub.s32 0, %v707
        %v855 = vsel %vm853, %v854, %v707
        %v856 = vshrl.u32 %v855, 4
        %v857 = vand.u32 %v855, 15
        %v858 = vsub.s32 0, %v857
        %v859 = vsel %vm853, %v858, %v857
        %vm860 = vcmp.lt.s32.totalorder %v708, 0
        %v861 = vsub.s32 0, %v708
        %v862 = vsel %vm860, %v861, %v708
        %v863 = vshrl.u32 %v862, 4
        %v864 = vand.u32 %v862, 15
        %v865 = vsub.s32 0, %v864
        %v866 = vsel %vm860, %v865, %v864
        %vm867 = vcmp.lt.s32.totalorder %v709, 0
        %v868 = vsub.s32 0, %v709
        %v869 = vsel %vm867, %v868, %v709
        %v870 = vshrl.u32 %v869, 4
        %v871 = vand.u32 %v869, 15
        %v872 = vsub.s32 0, %v871
        %v873 = vsel %vm867, %v872, %v871
        %vm874 = vcmp.lt.s32.totalorder %v710, 0
        %v875 = vsub.s32 0, %v710
        %v876 = vsel %vm874, %v875, %v710
        %v877 = vshrl.u32 %v876, 4
        %v878 = vand.u32 %v876, 15
        %v879 = vsub.s32 0, %v878
        %v880 = vsel %vm874, %v879, %v878
        %vm881 = vcmp.lt.s32.totalorder %v711, 0
        %v882 = vsub.s32 0, %v711
        %v883 = vsel %vm881, %v882, %v711
        %v884 = vshrl.u32 %v883, 4
        %v885 = vand.u32 %v883, 15
        %v886 = vsub.s32 0, %v885
        %v887 = vsel %vm881, %v886, %v885
        %vm888 = vcmp.lt.s32.totalorder %v712, 0
        %v889 = vsub.s32 0, %v712
        %v890 = vsel %vm888, %v889, %v712
        %v891 = vshrl.u32 %v890, 4
        %v892 = vand.u32 %v890, 15
        %v893 = vsub.s32 0, %v892
        %v894 = vsel %vm888, %v893, %v892
        %vm895 = vcmp.lt.s32.totalorder %v713, 0
        %v896 = vsub.s32 0, %v713
        %v897 = vsel %vm895, %v896, %v713
        %v898 = vshrl.u32 %v897, 4
        %v899 = vand.u32 %v897, 15
        %v900 = vsub.s32 0, %v899
        %v901 = vsel %vm895, %v900, %v899
        %vm902 = vcmp.lt.s32.totalorder %v714, 0
        %v903 = vsub.s32 0, %v714
        %v904 = vsel %vm902, %v903, %v714
        %v905 = vshrl.u32 %v904, 4
        %v906 = vand.u32 %v904, 15
        %v907 = vsub.s32 0, %v906
        %v908 = vsel %vm902, %v907, %v906
        %vm909 = vcmp.lt.s32.totalorder %v715, 0
        %v910 = vsub.s32 0, %v715
        %v911 = vsel %vm909, %v910, %v715
        %v912 = vshrl.u32 %v911, 4
        %v913 = vand.u32 %v911, 15
        %v914 = vsub.s32 0, %v913
        %v915 = vsel %vm909, %v914, %v913
        %vm916 = vcmp.lt.s32.totalorder %v716, 0
        %v917 = vsub.s32 0, %v716
        %v918 = vsel %vm916, %v917, %v716
        %v919 = vshrl.u32 %v918, 4
        %v920 = vand.u32 %v918, 15
        %v921 = vsub.s32 0, %v920
        %v922 = vsel %vm916, %v921, %v920
        %vm923 = vcmp.lt.s32.totalorder %v717, 0
        %v924 = vsub.s32 0, %v717
        %v925 = vsel %vm923, %v924, %v717
        %v926 = vshrl.u32 %v925, 4
        %v927 = vand.u32 %v925, 15
        %v928 = vsub.s32 0, %v927
        %v929 = vsel %vm923, %v928, %v927
        %vm930 = vcmp.lt.s32.totalorder %v718, 0
        %v931 = vsub.s32 0, %v718
        %v932 = vsel %vm930, %v931, %v718
        %v933 = vshrl.u32 %v932, 4
        %v934 = vand.u32 %v932, 15
        %v935 = vsub.s32 0, %v934
        %v936 = vsel %vm930, %v935, %v934
        %vm937 = vcmp.lt.s32.totalorder %v719, 0
        %v938 = vsub.s32 0, %v719
        %v939 = vsel %vm937, %v938, %v719
        %v940 = vshrl.u32 %v939, 4
        %v941 = vand.u32 %v939, 15
        %v942 = vsub.s32 0, %v941
        %v943 = vsel %vm937, %v942, %v941
        %vm944 = vcmp.ne.s32.totalorder %v726, 0
        %vm945 = vcmp.ne.s32.totalorder %v733, 0
        %vm946 = vcmp.ne.s32.totalorder %v740, 0
        %vm947 = vcmp.ne.s32.totalorder %v747, 0
        %vm948 = vcmp.ne.s32.totalorder %v754, 0
        %vm949 = vcmp.ne.s32.totalorder %v761, 0
        %vm950 = vcmp.ne.s32.totalorder %v768, 0
        %vm951 = vcmp.ne.s32.totalorder %v775, 0
        %vm952 = vcmp.ne.s32.totalorder %v782, 0
        %vm953 = vcmp.ne.s32.totalorder %v789, 0
        %vm954 = vcmp.ne.s32.totalorder %v796, 0
        %vm955 = vcmp.ne.s32.totalorder %v803, 0
        %vm956 = vcmp.ne.s32.totalorder %v810, 0
        %vm957 = vcmp.ne.s32.totalorder %v817, 0
        %vm958 = vcmp.ne.s32.totalorder %v824, 0
        %vm959 = vcmp.ne.s32.totalorder %v831, 0
        %vm960 = vcmp.ne.s32.totalorder %v838, 0
        %vm961 = vcmp.ne.s32.totalorder %v845, 0
        %vm962 = vcmp.ne.s32.totalorder %v852, 0
        %vm963 = vcmp.ne.s32.totalorder %v859, 0
        %vm964 = vcmp.ne.s32.totalorder %v866, 0
        %vm965 = vcmp.ne.s32.totalorder %v873, 0
        %vm966 = vcmp.ne.s32.totalorder %v880, 0
        %vm967 = vcmp.ne.s32.totalorder %v887, 0
        %vm968 = vcmp.ne.s32.totalorder %v894, 0
        %vm969 = vcmp.ne.s32.totalorder %v901, 0
        %vm970 = vcmp.ne.s32.totalorder %v908, 0
        %vm971 = vcmp.ne.s32.totalorder %v915, 0
        %vm972 = vcmp.ne.s32.totalorder %v922, 0
        %vm973 = vcmp.ne.s32.totalorder %v929, 0
        %vm974 = vcmp.ne.s32.totalorder %v936, 0
        %vm975 = vcmp.ne.s32.totalorder %v943, 0
        %vm976 = vcmp.lt.s32.totalorder %v726, 0
        %vm977 = vcmp.lt.s32.totalorder %v733, 0
        %vm978 = vcmp.lt.s32.totalorder %v740, 0
        %vm979 = vcmp.lt.s32.totalorder %v747, 0
        %vm980 = vcmp.lt.s32.totalorder %v754, 0
        %vm981 = vcmp.lt.s32.totalorder %v761, 0
        %vm982 = vcmp.lt.s32.totalorder %v768, 0
        %vm983 = vcmp.lt.s32.totalorder %v775, 0
        %vm984 = vcmp.lt.s32.totalorder %v782, 0
        %vm985 = vcmp.lt.s32.totalorder %v789, 0
        %vm986 = vcmp.lt.s32.totalorder %v796, 0
        %vm987 = vcmp.lt.s32.totalorder %v803, 0
        %vm988 = vcmp.lt.s32.totalorder %v810, 0
        %vm989 = vcmp.lt.s32.totalorder %v817, 0
        %vm990 = vcmp.lt.s32.totalorder %v824, 0
        %vm991 = vcmp.lt.s32.totalorder %v831, 0
        %vm992 = vcmp.lt.s32.totalorder %v838, 0
        %vm993 = vcmp.lt.s32.totalorder %v845, 0
        %vm994 = vcmp.lt.s32.totalorder %v852, 0
        %vm995 = vcmp.lt.s32.totalorder %v859, 0
        %vm996 = vcmp.lt.s32.totalorder %v866, 0
        %vm997 = vcmp.lt.s32.totalorder %v873, 0
        %vm998 = vcmp.lt.s32.totalorder %v880, 0
        %vm999 = vcmp.lt.s32.totalorder %v887, 0
        %vm1000 = vcmp.lt.s32.totalorder %v894, 0
        %vm1001 = vcmp.lt.s32.totalorder %v901, 0
        %vm1002 = vcmp.lt.s32.totalorder %v908, 0
        %vm1003 = vcmp.lt.s32.totalorder %v915, 0
        %vm1004 = vcmp.lt.s32.totalorder %v922, 0
        %vm1005 = vcmp.lt.s32.totalorder %v929, 0
        %vm1006 = vcmp.lt.s32.totalorder %v936, 0
        %vm1007 = vcmp.lt.s32.totalorder %v943, 0
        %vm1008 = vmand %vm976, %vm944
        %vm1009 = vmand %vm977, %vm945
        %vm1010 = vmand %vm978, %vm946
        %vm1011 = vmand %vm979, %vm947
        %vm1012 = vmand %vm980, %vm948
        %vm1013 = vmand %vm981, %vm949
        %vm1014 = vmand %vm982, %vm950
        %vm1015 = vmand %vm983, %vm951
        %vm1016 = vmand %vm984, %vm952
        %vm1017 = vmand %vm985, %vm953
        %vm1018 = vmand %vm986, %vm954
        %vm1019 = vmand %vm987, %vm955
        %vm1020 = vmand %vm988, %vm956
        %vm1021 = vmand %vm989, %vm957
        %vm1022 = vmand %vm990, %vm958
        %vm1023 = vmand %vm991, %vm959
        %vm1024 = vmand %vm992, %vm960
        %vm1025 = vmand %vm993, %vm961
        %vm1026 = vmand %vm994, %vm962
        %vm1027 = vmand %vm995, %vm963
        %vm1028 = vmand %vm996, %vm964
        %vm1029 = vmand %vm997, %vm965
        %vm1030 = vmand %vm998, %vm966
        %vm1031 = vmand %vm999, %vm967
        %vm1032 = vmand %vm1000, %vm968
        %vm1033 = vmand %vm1001, %vm969
        %vm1034 = vmand %vm1002, %vm970
        %vm1035 = vmand %vm1003, %vm971
        %vm1036 = vmand %vm1004, %vm972
        %vm1037 = vmand %vm1005, %vm973
        %vm1038 = vmand %vm1006, %vm974
        %vm1039 = vmand %vm1007, %vm975
        %v1040 = vadd.s32 %v726, 16
        %v1041 = vadd.s32 %v733, 16
        %v1042 = vadd.s32 %v740, 16
        %v1043 = vadd.s32 %v747, 16
        %v1044 = vadd.s32 %v754, 16
        %v1045 = vadd.s32 %v761, 16
        %v1046 = vadd.s32 %v768, 16
        %v1047 = vadd.s32 %v775, 16
        %v1048 = vadd.s32 %v782, 16
        %v1049 = vadd.s32 %v789, 16
        %v1050 = vadd.s32 %v796, 16
        %v1051 = vadd.s32 %v803, 16
        %v1052 = vadd.s32 %v810, 16
        %v1053 = vadd.s32 %v817, 16
        %v1054 = vadd.s32 %v824, 16
        %v1055 = vadd.s32 %v831, 16
        %v1056 = vadd.s32 %v838, 16
        %v1057 = vadd.s32 %v845, 16
        %v1058 = vadd.s32 %v852, 16
        %v1059 = vadd.s32 %v859, 16
        %v1060 = vadd.s32 %v866, 16
        %v1061 = vadd.s32 %v873, 16
        %v1062 = vadd.s32 %v880, 16
        %v1063 = vadd.s32 %v887, 16
        %v1064 = vadd.s32 %v894, 16
        %v1065 = vadd.s32 %v901, 16
        %v1066 = vadd.s32 %v908, 16
        %v1067 = vadd.s32 %v915, 16
        %v1068 = vadd.s32 %v922, 16
        %v1069 = vadd.s32 %v929, 16
        %v1070 = vadd.s32 %v936, 16
        %v1071 = vadd.s32 %v943, 16
        %v1072 = vsel %vm1008, %v1040, %v726
        %v1073 = vsel %vm1009, %v1041, %v733
        %v1074 = vsel %vm1010, %v1042, %v740
        %v1075 = vsel %vm1011, %v1043, %v747
        %v1076 = vsel %vm1012, %v1044, %v754
        %v1077 = vsel %vm1013, %v1045, %v761
        %v1078 = vsel %vm1014, %v1046, %v768
        %v1079 = vsel %vm1015, %v1047, %v775
        %v1080 = vsel %vm1016, %v1048, %v782
        %v1081 = vsel %vm1017, %v1049, %v789
        %v1082 = vsel %vm1018, %v1050, %v796
        %v1083 = vsel %vm1019, %v1051, %v803
        %v1084 = vsel %vm1020, %v1052, %v810
        %v1085 = vsel %vm1021, %v1053, %v817
        %v1086 = vsel %vm1022, %v1054, %v824
        %v1087 = vsel %vm1023, %v1055, %v831
        %v1088 = vsel %vm1024, %v1056, %v838
        %v1089 = vsel %vm1025, %v1057, %v845
        %v1090 = vsel %vm1026, %v1058, %v852
        %v1091 = vsel %vm1027, %v1059, %v859
        %v1092 = vsel %vm1028, %v1060, %v866
        %v1093 = vsel %vm1029, %v1061, %v873
        %v1094 = vsel %vm1030, %v1062, %v880
        %v1095 = vsel %vm1031, %v1063, %v887
        %v1096 = vsel %vm1032, %v1064, %v894
        %v1097 = vsel %vm1033, %v1065, %v901
        %v1098 = vsel %vm1034, %v1066, %v908
        %v1099 = vsel %vm1035, %v1067, %v915
        %v1100 = vsel %vm1036, %v1068, %v922
        %v1101 = vsel %vm1037, %v1069, %v929
        %v1102 = vsel %vm1038, %v1070, %v936
        %v1103 = vsel %vm1039, %v1071, %v943
        %vm1104 = vcmp.gt.s32.totalorder %v1072, 0
        %vm1105 = vcmp.gt.s32.totalorder %v1073, 0
        %vm1106 = vcmp.gt.s32.totalorder %v1074, 0
        %vm1107 = vcmp.gt.s32.totalorder %v1075, 0
        %vm1108 = vcmp.gt.s32.totalorder %v1076, 0
        %vm1109 = vcmp.gt.s32.totalorder %v1077, 0
        %vm1110 = vcmp.gt.s32.totalorder %v1078, 0
        %vm1111 = vcmp.gt.s32.totalorder %v1079, 0
        %vm1112 = vcmp.gt.s32.totalorder %v1080, 0
        %vm1113 = vcmp.gt.s32.totalorder %v1081, 0
        %vm1114 = vcmp.gt.s32.totalorder %v1082, 0
        %vm1115 = vcmp.gt.s32.totalorder %v1083, 0
        %vm1116 = vcmp.gt.s32.totalorder %v1084, 0
        %vm1117 = vcmp.gt.s32.totalorder %v1085, 0
        %vm1118 = vcmp.gt.s32.totalorder %v1086, 0
        %vm1119 = vcmp.gt.s32.totalorder %v1087, 0
        %vm1120 = vcmp.gt.s32.totalorder %v1088, 0
        %vm1121 = vcmp.gt.s32.totalorder %v1089, 0
        %vm1122 = vcmp.gt.s32.totalorder %v1090, 0
        %vm1123 = vcmp.gt.s32.totalorder %v1091, 0
        %vm1124 = vcmp.gt.s32.totalorder %v1092, 0
        %vm1125 = vcmp.gt.s32.totalorder %v1093, 0
        %vm1126 = vcmp.gt.s32.totalorder %v1094, 0
        %vm1127 = vcmp.gt.s32.totalorder %v1095, 0
        %vm1128 = vcmp.gt.s32.totalorder %v1096, 0
        %vm1129 = vcmp.gt.s32.totalorder %v1097, 0
        %vm1130 = vcmp.gt.s32.totalorder %v1098, 0
        %vm1131 = vcmp.gt.s32.totalorder %v1099, 0
        %vm1132 = vcmp.gt.s32.totalorder %v1100, 0
        %vm1133 = vcmp.gt.s32.totalorder %v1101, 0
        %vm1134 = vcmp.gt.s32.totalorder %v1102, 0
        %vm1135 = vcmp.gt.s32.totalorder %v1103, 0
        %v1136 = vrot.slane %v653, 7
        %v1137 = vrot.slane %v654, 7
        %v1138 = vrot.slane %v655, 7
        %v1139 = vrot.slane %v656, 7
        %v1140 = vrot.slane %v657, 7
        %v1141 = vrot.slane %v658, 7
        %v1142 = vrot.slane %v659, 7
        %v1143 = vrot.slane %v660, 7
        %v1144 = vrot.slane %v661, 7
        %v1145 = vrot.slane %v662, 7
        %v1146 = vrot.slane %v663, 7
        %v1147 = vrot.slane %v664, 7
        %v1148 = vrot.slane %v665, 7
        %v1149 = vrot.slane %v666, 7
        %v1150 = vrot.slane %v667, 7
        %v1151 = vrot.slane %v668, 7
        %v1152 = vrot.slane %v669, 7
        %v1153 = vrot.slane %v670, 7
        %v1154 = vrot.slane %v671, 7
        %v1155 = vrot.slane %v672, 7
        %v1156 = vrot.slane %v673, 7
        %v1157 = vrot.slane %v674, 7
        %v1158 = vrot.slane %v675, 7
        %v1159 = vrot.slane %v676, 7
        %v1160 = vrot.slane %v677, 7
        %v1161 = vrot.slane %v678, 7
        %v1162 = vrot.slane %v679, 7
        %v1163 = vrot.slane %v680, 7
        %v1164 = vrot.slane %v681, 7
        %v1165 = vrot.slane %v682, 7
        %v1166 = vrot.slane %v683, 7
        %v1167 = vrot.slane %v684, 7
        %vm1168 = vcmp.lt.s32.totalorder %v688, 1
        %v1169 = vsel %vm1168, %v1166, %v1167
        %v1170 = vsel %vm1168, %v1165, %v1166
        %v1171 = vsel %vm1168, %v1164, %v1165
        %v1172 = vsel %vm1168, %v1163, %v1164
        %v1173 = vsel %vm1168, %v1162, %v1163
        %v1174 = vsel %vm1168, %v1161, %v1162
        %v1175 = vsel %vm1168, %v1160, %v1161
        %v1176 = vsel %vm1168, %v1159, %v1160
        %v1177 = vsel %vm1168, %v1158, %v1159
        %v1178 = vsel %vm1168, %v1157, %v1158
        %v1179 = vsel %vm1168, %v1156, %v1157
        %v1180 = vsel %vm1168, %v1155, %v1156
        %v1181 = vsel %vm1168, %v1154, %v1155
        %v1182 = vsel %vm1168, %v1153, %v1154
        %v1183 = vsel %vm1168, %v1152, %v1153
        %v1184 = vsel %vm1168, %v1151, %v1152
        %v1185 = vsel %vm1168, %v1150, %v1151
        %v1186 = vsel %vm1168, %v1149, %v1150
        %v1187 = vsel %vm1168, %v1148, %v1149
        %v1188 = vsel %vm1168, %v1147, %v1148
        %v1189 = vsel %vm1168, %v1146, %v1147
        %v1190 = vsel %vm1168, %v1145, %v1146
        %v1191 = vsel %vm1168, %v1144, %v1145
        %v1192 = vsel %vm1168, %v1143, %v1144
        %v1193 = vsel %vm1168, %v1142, %v1143
        %v1194 = vsel %vm1168, %v1141, %v1142
        %v1195 = vsel %vm1168, %v1140, %v1141
        %v1196 = vsel %vm1168, %v1139, %v1140
        %v1197 = vsel %vm1168, %v1138, %v1139
        %v1198 = vsel %vm1168, %v1137, %v1138
        %v1199 = vsel %vm1168, %v1136, %v1137
        %v1200 = vsel %vm1168, %v1167, %v1136
        %v1201 = vsel %vm1104, 1, 0
        %v1202 = vsel %vm1105, 1, 0
        %v1203 = vsel %vm1106, 1, 0
        %v1204 = vsel %vm1107, 1, 0
        %v1205 = vsel %vm1108, 1, 0
        %v1206 = vsel %vm1109, 1, 0
        %v1207 = vsel %vm1110, 1, 0
        %v1208 = vsel %vm1111, 1, 0
        %v1209 = vsel %vm1112, 1, 0
        %v1210 = vsel %vm1113, 1, 0
        %v1211 = vsel %vm1114, 1, 0
        %v1212 = vsel %vm1115, 1, 0
        %v1213 = vsel %vm1116, 1, 0
        %v1214 = vsel %vm1117, 1, 0
        %v1215 = vsel %vm1118, 1, 0
        %v1216 = vsel %vm1119, 1, 0
        %v1217 = vsel %vm1120, 1, 0
        %v1218 = vsel %vm1121, 1, 0
        %v1219 = vsel %vm1122, 1, 0
        %v1220 = vsel %vm1123, 1, 0
        %v1221 = vsel %vm1124, 1, 0
        %v1222 = vsel %vm1125, 1, 0
        %v1223 = vsel %vm1126, 1, 0
        %v1224 = vsel %vm1127, 1, 0
        %v1225 = vsel %vm1128, 1, 0
        %v1226 = vsel %vm1129, 1, 0
        %v1227 = vsel %vm1130, 1, 0
        %v1228 = vsel %vm1131, 1, 0
        %v1229 = vsel %vm1132, 1, 0
        %v1230 = vsel %vm1133, 1, 0
        %v1231 = vsel %vm1134, 1, 0
        %v1232 = vsel %vm1135, 1, 0
        %vm1233 = vcmp.eq.s32.totalorder %v1201, 1
        %vm1234 = vcmp.eq.s32.totalorder %v1202, 1
        %vm1235 = vcmp.eq.s32.totalorder %v1203, 1
        %vm1236 = vcmp.eq.s32.totalorder %v1204, 1
        %vm1237 = vcmp.eq.s32.totalorder %v1205, 1
        %vm1238 = vcmp.eq.s32.totalorder %v1206, 1
        %vm1239 = vcmp.eq.s32.totalorder %v1207, 1
        %vm1240 = vcmp.eq.s32.totalorder %v1208, 1
        %vm1241 = vcmp.eq.s32.totalorder %v1209, 1
        %vm1242 = vcmp.eq.s32.totalorder %v1210, 1
        %vm1243 = vcmp.eq.s32.totalorder %v1211, 1
        %vm1244 = vcmp.eq.s32.totalorder %v1212, 1
        %vm1245 = vcmp.eq.s32.totalorder %v1213, 1
        %vm1246 = vcmp.eq.s32.totalorder %v1214, 1
        %vm1247 = vcmp.eq.s32.totalorder %v1215, 1
        %vm1248 = vcmp.eq.s32.totalorder %v1216, 1
        %vm1249 = vcmp.eq.s32.totalorder %v1217, 1
        %vm1250 = vcmp.eq.s32.totalorder %v1218, 1
        %vm1251 = vcmp.eq.s32.totalorder %v1219, 1
        %vm1252 = vcmp.eq.s32.totalorder %v1220, 1
        %vm1253 = vcmp.eq.s32.totalorder %v1221, 1
        %vm1254 = vcmp.eq.s32.totalorder %v1222, 1
        %vm1255 = vcmp.eq.s32.totalorder %v1223, 1
        %vm1256 = vcmp.eq.s32.totalorder %v1224, 1
        %vm1257 = vcmp.eq.s32.totalorder %v1225, 1
        %vm1258 = vcmp.eq.s32.totalorder %v1226, 1
        %vm1259 = vcmp.eq.s32.totalorder %v1227, 1
        %vm1260 = vcmp.eq.s32.totalorder %v1228, 1
        %vm1261 = vcmp.eq.s32.totalorder %v1229, 1
        %vm1262 = vcmp.eq.s32.totalorder %v1230, 1
        %vm1263 = vcmp.eq.s32.totalorder %v1231, 1
        %vm1264 = vcmp.eq.s32.totalorder %v1232, 1
        %v1265 = vsel %vm1233, %v1200, 0.0
        %v1266 = vsel %vm1234, %v1199, 0.0
        %v1267 = vsel %vm1235, %v1198, 0.0
        %v1268 = vsel %vm1236, %v1197, 0.0
        %v1269 = vsel %vm1237, %v1196, 0.0
        %v1270 = vsel %vm1238, %v1195, 0.0
        %v1271 = vsel %vm1239, %v1194, 0.0
        %v1272 = vsel %vm1240, %v1193, 0.0
        %v1273 = vsel %vm1241, %v1192, 0.0
        %v1274 = vsel %vm1242, %v1191, 0.0
        %v1275 = vsel %vm1243, %v1190, 0.0
        %v1276 = vsel %vm1244, %v1189, 0.0
        %v1277 = vsel %vm1245, %v1188, 0.0
        %v1278 = vsel %vm1246, %v1187, 0.0
        %v1279 = vsel %vm1247, %v1186, 0.0
        %v1280 = vsel %vm1248, %v1185, 0.0
        %v1281 = vsel %vm1249, %v1184, 0.0
        %v1282 = vsel %vm1250, %v1183, 0.0
        %v1283 = vsel %vm1251, %v1182, 0.0
        %v1284 = vsel %vm1252, %v1181, 0.0
        %v1285 = vsel %vm1253, %v1180, 0.0
        %v1286 = vsel %vm1254, %v1179, 0.0
        %v1287 = vsel %vm1255, %v1178, 0.0
        %v1288 = vsel %vm1256, %v1177, 0.0
        %v1289 = vsel %vm1257, %v1176, 0.0
        %v1290 = vsel %vm1258, %v1175, 0.0
        %v1291 = vsel %vm1259, %v1174, 0.0
        %v1292 = vsel %vm1260, %v1173, 0.0
        %v1293 = vsel %vm1261, %v1172, 0.0
        %v1294 = vsel %vm1262, %v1171, 0.0
        %v1295 = vsel %vm1263, %v1170, 0.0
        %v1296 = vsel %vm1264, %v1169, 0.0
        %vm1297 = vcmp.lt.s32.totalorder %v1072, 15
        %vm1298 = vcmp.lt.s32.totalorder %v1073, 15
        %vm1299 = vcmp.lt.s32.totalorder %v1074, 15
        %vm1300 = vcmp.lt.s32.totalorder %v1075, 15
        %vm1301 = vcmp.lt.s32.totalorder %v1076, 15
        %vm1302 = vcmp.lt.s32.totalorder %v1077, 15
        %vm1303 = vcmp.lt.s32.totalorder %v1078, 15
        %vm1304 = vcmp.lt.s32.totalorder %v1079, 15
        %vm1305 = vcmp.lt.s32.totalorder %v1080, 15
        %vm1306 = vcmp.lt.s32.totalorder %v1081, 15
        %vm1307 = vcmp.lt.s32.totalorder %v1082, 15
        %vm1308 = vcmp.lt.s32.totalorder %v1083, 15
        %vm1309 = vcmp.lt.s32.totalorder %v1084, 15
        %vm1310 = vcmp.lt.s32.totalorder %v1085, 15
        %vm1311 = vcmp.lt.s32.totalorder %v1086, 15
        %vm1312 = vcmp.lt.s32.totalorder %v1087, 15
        %vm1313 = vcmp.lt.s32.totalorder %v1088, 15
        %vm1314 = vcmp.lt.s32.totalorder %v1089, 15
        %vm1315 = vcmp.lt.s32.totalorder %v1090, 15
        %vm1316 = vcmp.lt.s32.totalorder %v1091, 15
        %vm1317 = vcmp.lt.s32.totalorder %v1092, 15
        %vm1318 = vcmp.lt.s32.totalorder %v1093, 15
        %vm1319 = vcmp.lt.s32.totalorder %v1094, 15
        %vm1320 = vcmp.lt.s32.totalorder %v1095, 15
        %vm1321 = vcmp.lt.s32.totalorder %v1096, 15
        %vm1322 = vcmp.lt.s32.totalorder %v1097, 15
        %vm1323 = vcmp.lt.s32.totalorder %v1098, 15
        %vm1324 = vcmp.lt.s32.totalorder %v1099, 15
        %vm1325 = vcmp.lt.s32.totalorder %v1100, 15
        %vm1326 = vcmp.lt.s32.totalorder %v1101, 15
        %vm1327 = vcmp.lt.s32.totalorder %v1102, 15
        %vm1328 = vcmp.lt.s32.totalorder %v1103, 15
        %v1329 = vrot.slane %v653, 1
        %v1330 = vrot.slane %v654, 1
        %v1331 = vrot.slane %v655, 1
        %v1332 = vrot.slane %v656, 1
        %v1333 = vrot.slane %v657, 1
        %v1334 = vrot.slane %v658, 1
        %v1335 = vrot.slane %v659, 1
        %v1336 = vrot.slane %v660, 1
        %v1337 = vrot.slane %v661, 1
        %v1338 = vrot.slane %v662, 1
        %v1339 = vrot.slane %v663, 1
        %v1340 = vrot.slane %v664, 1
        %v1341 = vrot.slane %v665, 1
        %v1342 = vrot.slane %v666, 1
        %v1343 = vrot.slane %v667, 1
        %v1344 = vrot.slane %v668, 1
        %v1345 = vrot.slane %v669, 1
        %v1346 = vrot.slane %v670, 1
        %v1347 = vrot.slane %v671, 1
        %v1348 = vrot.slane %v672, 1
        %v1349 = vrot.slane %v673, 1
        %v1350 = vrot.slane %v674, 1
        %v1351 = vrot.slane %v675, 1
        %v1352 = vrot.slane %v676, 1
        %v1353 = vrot.slane %v677, 1
        %v1354 = vrot.slane %v678, 1
        %v1355 = vrot.slane %v679, 1
        %v1356 = vrot.slane %v680, 1
        %v1357 = vrot.slane %v681, 1
        %v1358 = vrot.slane %v682, 1
        %v1359 = vrot.slane %v683, 1
        %v1360 = vrot.slane %v684, 1
        %vm1361 = vcmp.lt.s32.totalorder %v688, 7
        %v1362 = vsel %vm1361, %v1359, %v1360
        %v1363 = vsel %vm1361, %v1358, %v1359
        %v1364 = vsel %vm1361, %v1357, %v1358
        %v1365 = vsel %vm1361, %v1356, %v1357
        %v1366 = vsel %vm1361, %v1355, %v1356
        %v1367 = vsel %vm1361, %v1354, %v1355
        %v1368 = vsel %vm1361, %v1353, %v1354
        %v1369 = vsel %vm1361, %v1352, %v1353
        %v1370 = vsel %vm1361, %v1351, %v1352
        %v1371 = vsel %vm1361, %v1350, %v1351
        %v1372 = vsel %vm1361, %v1349, %v1350
        %v1373 = vsel %vm1361, %v1348, %v1349
        %v1374 = vsel %vm1361, %v1347, %v1348
        %v1375 = vsel %vm1361, %v1346, %v1347
        %v1376 = vsel %vm1361, %v1345, %v1346
        %v1377 = vsel %vm1361, %v1344, %v1345
        %v1378 = vsel %vm1361, %v1343, %v1344
        %v1379 = vsel %vm1361, %v1342, %v1343
        %v1380 = vsel %vm1361, %v1341, %v1342
        %v1381 = vsel %vm1361, %v1340, %v1341
        %v1382 = vsel %vm1361, %v1339, %v1340
        %v1383 = vsel %vm1361, %v1338, %v1339
        %v1384 = vsel %vm1361, %v1337, %v1338
        %v1385 = vsel %vm1361, %v1336, %v1337
        %v1386 = vsel %vm1361, %v1335, %v1336
        %v1387 = vsel %vm1361, %v1334, %v1335
        %v1388 = vsel %vm1361, %v1333, %v1334
        %v1389 = vsel %vm1361, %v1332, %v1333
        %v1390 = vsel %vm1361, %v1331, %v1332
        %v1391 = vsel %vm1361, %v1330, %v1331
        %v1392 = vsel %vm1361, %v1329, %v1330
        %v1393 = vsel %vm1361, %v1360, %v1329
        %v1394 = vsel %vm1297, 1, 0
        %v1395 = vsel %vm1298, 1, 0
        %v1396 = vsel %vm1299, 1, 0
        %v1397 = vsel %vm1300, 1, 0
        %v1398 = vsel %vm1301, 1, 0
        %v1399 = vsel %vm1302, 1, 0
        %v1400 = vsel %vm1303, 1, 0
        %v1401 = vsel %vm1304, 1, 0
        %v1402 = vsel %vm1305, 1, 0
        %v1403 = vsel %vm1306, 1, 0
        %v1404 = vsel %vm1307, 1, 0
        %v1405 = vsel %vm1308, 1, 0
        %v1406 = vsel %vm1309, 1, 0
        %v1407 = vsel %vm1310, 1, 0
        %v1408 = vsel %vm1311, 1, 0
        %v1409 = vsel %vm1312, 1, 0
        %v1410 = vsel %vm1313, 1, 0
        %v1411 = vsel %vm1314, 1, 0
        %v1412 = vsel %vm1315, 1, 0
        %v1413 = vsel %vm1316, 1, 0
        %v1414 = vsel %vm1317, 1, 0
        %v1415 = vsel %vm1318, 1, 0
        %v1416 = vsel %vm1319, 1, 0
        %v1417 = vsel %vm1320, 1, 0
        %v1418 = vsel %vm1321, 1, 0
        %v1419 = vsel %vm1322, 1, 0
        %v1420 = vsel %vm1323, 1, 0
        %v1421 = vsel %vm1324, 1, 0
        %v1422 = vsel %vm1325, 1, 0
        %v1423 = vsel %vm1326, 1, 0
        %v1424 = vsel %vm1327, 1, 0
        %v1425 = vsel %vm1328, 1, 0
        %vm1426 = vcmp.eq.s32.totalorder %v1394, 1
        %vm1427 = vcmp.eq.s32.totalorder %v1395, 1
        %vm1428 = vcmp.eq.s32.totalorder %v1396, 1
        %vm1429 = vcmp.eq.s32.totalorder %v1397, 1
        %vm1430 = vcmp.eq.s32.totalorder %v1398, 1
        %vm1431 = vcmp.eq.s32.totalorder %v1399, 1
        %vm1432 = vcmp.eq.s32.totalorder %v1400, 1
        %vm1433 = vcmp.eq.s32.totalorder %v1401, 1
        %vm1434 = vcmp.eq.s32.totalorder %v1402, 1
        %vm1435 = vcmp.eq.s32.totalorder %v1403, 1
        %vm1436 = vcmp.eq.s32.totalorder %v1404, 1
        %vm1437 = vcmp.eq.s32.totalorder %v1405, 1
        %vm1438 = vcmp.eq.s32.totalorder %v1406, 1
        %vm1439 = vcmp.eq.s32.totalorder %v1407, 1
        %vm1440 = vcmp.eq.s32.totalorder %v1408, 1
        %vm1441 = vcmp.eq.s32.totalorder %v1409, 1
        %vm1442 = vcmp.eq.s32.totalorder %v1410, 1
        %vm1443 = vcmp.eq.s32.totalorder %v1411, 1
        %vm1444 = vcmp.eq.s32.totalorder %v1412, 1
        %vm1445 = vcmp.eq.s32.totalorder %v1413, 1
        %vm1446 = vcmp.eq.s32.totalorder %v1414, 1
        %vm1447 = vcmp.eq.s32.totalorder %v1415, 1
        %vm1448 = vcmp.eq.s32.totalorder %v1416, 1
        %vm1449 = vcmp.eq.s32.totalorder %v1417, 1
        %vm1450 = vcmp.eq.s32.totalorder %v1418, 1
        %vm1451 = vcmp.eq.s32.totalorder %v1419, 1
        %vm1452 = vcmp.eq.s32.totalorder %v1420, 1
        %vm1453 = vcmp.eq.s32.totalorder %v1421, 1
        %vm1454 = vcmp.eq.s32.totalorder %v1422, 1
        %vm1455 = vcmp.eq.s32.totalorder %v1423, 1
        %vm1456 = vcmp.eq.s32.totalorder %v1424, 1
        %vm1457 = vcmp.eq.s32.totalorder %v1425, 1
        %v1458 = vsel %vm1426, %v1392, 0.0
        %v1459 = vsel %vm1427, %v1391, 0.0
        %v1460 = vsel %vm1428, %v1390, 0.0
        %v1461 = vsel %vm1429, %v1389, 0.0
        %v1462 = vsel %vm1430, %v1388, 0.0
        %v1463 = vsel %vm1431, %v1387, 0.0
        %v1464 = vsel %vm1432, %v1386, 0.0
        %v1465 = vsel %vm1433, %v1385, 0.0
        %v1466 = vsel %vm1434, %v1384, 0.0
        %v1467 = vsel %vm1435, %v1383, 0.0
        %v1468 = vsel %vm1436, %v1382, 0.0
        %v1469 = vsel %vm1437, %v1381, 0.0
        %v1470 = vsel %vm1438, %v1380, 0.0
        %v1471 = vsel %vm1439, %v1379, 0.0
        %v1472 = vsel %vm1440, %v1378, 0.0
        %v1473 = vsel %vm1441, %v1377, 0.0
        %v1474 = vsel %vm1442, %v1376, 0.0
        %v1475 = vsel %vm1443, %v1375, 0.0
        %v1476 = vsel %vm1444, %v1374, 0.0
        %v1477 = vsel %vm1445, %v1373, 0.0
        %v1478 = vsel %vm1446, %v1372, 0.0
        %v1479 = vsel %vm1447, %v1371, 0.0
        %v1480 = vsel %vm1448, %v1370, 0.0
        %v1481 = vsel %vm1449, %v1369, 0.0
        %v1482 = vsel %vm1450, %v1368, 0.0
        %v1483 = vsel %vm1451, %v1367, 0.0
        %v1484 = vsel %vm1452, %v1366, 0.0
        %v1485 = vsel %vm1453, %v1365, 0.0
        %v1486 = vsel %vm1454, %v1364, 0.0
        %v1487 = vsel %vm1455, %v1363, 0.0
        %v1488 = vsel %vm1456, %v1362, 0.0
        %v1489 = vsel %vm1457, %v1393, 0.0
        %1490 = vst [vmem:[#allocation2] sm:$0xff] 0.0
        %1491 = vst [vmem:[#allocation2 + $0x8] sm:$0xff] 0.0
        %1492 = vst [vmem:[#allocation2 + $0x110] sm:$0xff] 0.0
        %1493 = vst [vmem:[#allocation2 + $0x118] sm:$0xff] 0.0
        %1494 = vst [vmem:[#allocation2 + $0x10] sm:$0xff] %v1265
        %1495 = vst [vmem:[#allocation2 + $0x18] sm:$0xff] %v1266
        %1496 = vst [vmem:[#allocation2 + $0x20] sm:$0xff] %v1267
        %1497 = vst [vmem:[#allocation2 + $0x28] sm:$0xff] %v1268
        %1498 = vst [vmem:[#allocation2 + $0x30] sm:$0xff] %v1269
        %1499 = vst [vmem:[#allocation2 + $0x38] sm:$0xff] %v1270
        %1500 = vst [vmem:[#allocation2 + $0x40] sm:$0xff] %v1271
        %1501 = vst [vmem:[#allocation2 + $0x48] sm:$0xff] %v1272
        %1502 = vst [vmem:[#allocation2 + $0x50] sm:$0xff] %v1273
        %1503 = vst [vmem:[#allocation2 + $0x58] sm:$0xff] %v1274
        %1504 = vst [vmem:[#allocation2 + $0x60] sm:$0xff] %v1275
        %1505 = vst [vmem:[#allocation2 + $0x68] sm:$0xff] %v1276
        %1506 = vst [vmem:[#allocation2 + $0x70] sm:$0xff] %v1277
        %1507 = vst [vmem:[#allocation2 + $0x78] sm:$0xff] %v1278
        %1508 = vst [vmem:[#allocation2 + $0x80] sm:$0xff] %v1279
        %1509 = vst [vmem:[#allocation2 + $0x88] sm:$0xff] %v1280
        %1510 = vst [vmem:[#allocation2 + $0x90] sm:$0xff] %v1281
        %1511 = vst [vmem:[#allocation2 + $0x98] sm:$0xff] %v1282
        %1512 = vst [vmem:[#allocation2 + $0xa0] sm:$0xff] %v1283
        %1513 = vst [vmem:[#allocation2 + $0xa8] sm:$0xff] %v1284
        %1514 = vst [vmem:[#allocation2 + $0xb0] sm:$0xff] %v1285
        %1515 = vst [vmem:[#allocation2 + $0xb8] sm:$0xff] %v1286
        %1516 = vst [vmem:[#allocation2 + $0xc0] sm:$0xff] %v1287
        %1517 = vst [vmem:[#allocation2 + $0xc8] sm:$0xff] %v1288
        %1518 = vst [vmem:[#allocation2 + $0xd0] sm:$0xff] %v1289
        %1519 = vst [vmem:[#allocation2 + $0xd8] sm:$0xff] %v1290
        %1520 = vst [vmem:[#allocation2 + $0xe0] sm:$0xff] %v1291
        %1521 = vst [vmem:[#allocation2 + $0xe8] sm:$0xff] %v1292
        %1522 = vst [vmem:[#allocation2 + $0xf0] sm:$0xff] %v1293
        %1523 = vst [vmem:[#allocation2 + $0xf8] sm:$0xff] %v1294
        %1524 = vst [vmem:[#allocation2 + $0x100] sm:$0xff] %v1295
        %1525 = vst [vmem:[#allocation2 + $0x108] sm:$0xff] %v1296
        %s1526 = scalar_lea.vmem [#allocation2], 288
        %1527 = vst [vmem:[%s1526] sm:$0xff] 0.0
        %1528 = vst [vmem:[%s1526 + $0x8] sm:$0xff] 0.0
        %1529 = vst [vmem:[%s1526 + $0x110] sm:$0xff] 0.0
        %1530 = vst [vmem:[%s1526 + $0x118] sm:$0xff] 0.0
        %1531 = vst [vmem:[%s1526 + $0x10] sm:$0xff] %v653
        %1532 = vst [vmem:[%s1526 + $0x18] sm:$0xff] %v654
        %1533 = vst [vmem:[%s1526 + $0x20] sm:$0xff] %v655
        %1534 = vst [vmem:[%s1526 + $0x28] sm:$0xff] %v656
        %1535 = vst [vmem:[%s1526 + $0x30] sm:$0xff] %v657
        %1536 = vst [vmem:[%s1526 + $0x38] sm:$0xff] %v658
        %1537 = vst [vmem:[%s1526 + $0x40] sm:$0xff] %v659
        %1538 = vst [vmem:[%s1526 + $0x48] sm:$0xff] %v660
        %1539 = vst [vmem:[%s1526 + $0x50] sm:$0xff] %v661
        %1540 = vst [vmem:[%s1526 + $0x58] sm:$0xff] %v662
        %1541 = vst [vmem:[%s1526 + $0x60] sm:$0xff] %v663
        %1542 = vst [vmem:[%s1526 + $0x68] sm:$0xff] %v664
        %1543 = vst [vmem:[%s1526 + $0x70] sm:$0xff] %v665
        %1544 = vst [vmem:[%s1526 + $0x78] sm:$0xff] %v666
        %1545 = vst [vmem:[%s1526 + $0x80] sm:$0xff] %v667
        %1546 = vst [vmem:[%s1526 + $0x88] sm:$0xff] %v668
        %1547 = vst [vmem:[%s1526 + $0x90] sm:$0xff] %v669
        %1548 = vst [vmem:[%s1526 + $0x98] sm:$0xff] %v670
        %1549 = vst [vmem:[%s1526 + $0xa0] sm:$0xff] %v671
        %1550 = vst [vmem:[%s1526 + $0xa8] sm:$0xff] %v672
        %1551 = vst [vmem:[%s1526 + $0xb0] sm:$0xff] %v673
        %1552 = vst [vmem:[%s1526 + $0xb8] sm:$0xff] %v674
        %1553 = vst [vmem:[%s1526 + $0xc0] sm:$0xff] %v675
        %1554 = vst [vmem:[%s1526 + $0xc8] sm:$0xff] %v676
        %1555 = vst [vmem:[%s1526 + $0xd0] sm:$0xff] %v677
        %1556 = vst [vmem:[%s1526 + $0xd8] sm:$0xff] %v678
        %1557 = vst [vmem:[%s1526 + $0xe0] sm:$0xff] %v679
        %1558 = vst [vmem:[%s1526 + $0xe8] sm:$0xff] %v680
        %1559 = vst [vmem:[%s1526 + $0xf0] sm:$0xff] %v681
        %1560 = vst [vmem:[%s1526 + $0xf8] sm:$0xff] %v682
        %1561 = vst [vmem:[%s1526 + $0x100] sm:$0xff] %v683
        %1562 = vst [vmem:[%s1526 + $0x108] sm:$0xff] %v684
        %s1563 = scalar_lea.vmem [#allocation2], 576
        %1564 = vst [vmem:[%s1563] sm:$0xff] 0.0
        %1565 = vst [vmem:[%s1563 + $0x8] sm:$0xff] 0.0
        %1566 = vst [vmem:[%s1563 + $0x110] sm:$0xff] 0.0
        %1567 = vst [vmem:[%s1563 + $0x118] sm:$0xff] 0.0
        %1568 = vst [vmem:[%s1563 + $0x10] sm:$0xff] %v1458
        %1569 = vst [vmem:[%s1563 + $0x18] sm:$0xff] %v1459
        %1570 = vst [vmem:[%s1563 + $0x20] sm:$0xff] %v1460
        %1571 = vst [vmem:[%s1563 + $0x28] sm:$0xff] %v1461
        %1572 = vst [vmem:[%s1563 + $0x30] sm:$0xff] %v1462
        %1573 = vst [vmem:[%s1563 + $0x38] sm:$0xff] %v1463
        %1574 = vst [vmem:[%s1563 + $0x40] sm:$0xff] %v1464
        %1575 = vst [vmem:[%s1563 + $0x48] sm:$0xff] %v1465
        %1576 = vst [vmem:[%s1563 + $0x50] sm:$0xff] %v1466
        %1577 = vst [vmem:[%s1563 + $0x58] sm:$0xff] %v1467
        %1578 = vst [vmem:[%s1563 + $0x60] sm:$0xff] %v1468
        %1579 = vst [vmem:[%s1563 + $0x68] sm:$0xff] %v1469
        %1580 = vst [vmem:[%s1563 + $0x70] sm:$0xff] %v1470
        %1581 = vst [vmem:[%s1563 + $0x78] sm:$0xff] %v1471
        %1582 = vst [vmem:[%s1563 + $0x80] sm:$0xff] %v1472
        %1583 = vst [vmem:[%s1563 + $0x88] sm:$0xff] %v1473
        %1584 = vst [vmem:[%s1563 + $0x90] sm:$0xff] %v1474
        %1585 = vst [vmem:[%s1563 + $0x98] sm:$0xff] %v1475
        %1586 = vst [vmem:[%s1563 + $0xa0] sm:$0xff] %v1476
        %1587 = vst [vmem:[%s1563 + $0xa8] sm:$0xff] %v1477
        %1588 = vst [vmem:[%s1563 + $0xb0] sm:$0xff] %v1478
        %1589 = vst [vmem:[%s1563 + $0xb8] sm:$0xff] %v1479
        %1590 = vst [vmem:[%s1563 + $0xc0] sm:$0xff] %v1480
        %1591 = vst [vmem:[%s1563 + $0xc8] sm:$0xff] %v1481
        %1592 = vst [vmem:[%s1563 + $0xd0] sm:$0xff] %v1482
        %1593 = vst [vmem:[%s1563 + $0xd8] sm:$0xff] %v1483
        %1594 = vst [vmem:[%s1563 + $0xe0] sm:$0xff] %v1484
        %1595 = vst [vmem:[%s1563 + $0xe8] sm:$0xff] %v1485
        %1596 = vst [vmem:[%s1563 + $0xf0] sm:$0xff] %v1486
        %1597 = vst [vmem:[%s1563 + $0xf8] sm:$0xff] %v1487
        %1598 = vst [vmem:[%s1563 + $0x100] sm:$0xff] %v1488
        %1599 = vst [vmem:[%s1563 + $0x108] sm:$0xff] %v1489
        %v1600 = vld [vmem:[#allocation2] sm:$0xff]
        %v1601 = vld [vmem:[#allocation2 + $0x8] sm:$0xff]
        %v1602 = vld [vmem:[#allocation2 + $0x10] sm:$0xff]
        %v1603 = vld [vmem:[#allocation2 + $0x18] sm:$0xff]
        %v1604 = vld [vmem:[#allocation2 + $0x20] sm:$0xff]
        %v1605 = vld [vmem:[#allocation2 + $0x28] sm:$0xff]
        %v1606 = vld [vmem:[#allocation2 + $0x30] sm:$0xff]
        %v1607 = vld [vmem:[#allocation2 + $0x38] sm:$0xff]
        %v1608 = vld [vmem:[#allocation2 + $0x40] sm:$0xff]
        %v1609 = vld [vmem:[#allocation2 + $0x48] sm:$0xff]
        %v1610 = vld [vmem:[#allocation2 + $0x50] sm:$0xff]
        %v1611 = vld [vmem:[#allocation2 + $0x58] sm:$0xff]
        %v1612 = vld [vmem:[#allocation2 + $0x60] sm:$0xff]
        %v1613 = vld [vmem:[#allocation2 + $0x68] sm:$0xff]
        %v1614 = vld [vmem:[#allocation2 + $0x70] sm:$0xff]
        %v1615 = vld [vmem:[#allocation2 + $0x78] sm:$0xff]
        %v1616 = vld [vmem:[#allocation2 + $0x80] sm:$0xff]
        %v1617 = vld [vmem:[#allocation2 + $0x88] sm:$0xff]
        %v1618 = vld [vmem:[#allocation2 + $0x90] sm:$0xff]
        %v1619 = vld [vmem:[#allocation2 + $0x98] sm:$0xff]
        %v1620 = vld [vmem:[#allocation2 + $0xa0] sm:$0xff]
        %v1621 = vld [vmem:[#allocation2 + $0xa8] sm:$0xff]
        %v1622 = vld [vmem:[#allocation2 + $0xb0] sm:$0xff]
        %v1623 = vld [vmem:[#allocation2 + $0xb8] sm:$0xff]
        %v1624 = vld [vmem:[#allocation2 + $0xc0] sm:$0xff]
        %v1625 = vld [vmem:[#allocation2 + $0xc8] sm:$0xff]
        %v1626 = vld [vmem:[#allocation2 + $0xd0] sm:$0xff]
        %v1627 = vld [vmem:[#allocation2 + $0xd8] sm:$0xff]
        %v1628 = vld [vmem:[#allocation2 + $0xe0] sm:$0xff]
        %v1629 = vld [vmem:[#allocation2 + $0xe8] sm:$0xff]
        %v1630 = vld [vmem:[#allocation2 + $0xf0] sm:$0xff]
        %v1631 = vld [vmem:[#allocation2 + $0xf8] sm:$0xff]
        %v1632 = vlaneseq
        %v1633 = vshrl.u32 %v1632, 7
        %v1634 = vsub.s32 0, %v1633
        %v1635 = vrot.slane %v685, %v1634
        %v1636 = vmul.f32 %v1600, %v1635
        %v1637 = vmul.f32 %v1601, %v1635
        %v1638 = vmul.f32 %v1602, %v1635
        %v1639 = vmul.f32 %v1603, %v1635
        %v1640 = vmul.f32 %v1604, %v1635
        %v1641 = vmul.f32 %v1605, %v1635
        %v1642 = vmul.f32 %v1606, %v1635
        %v1643 = vmul.f32 %v1607, %v1635
        %v1644 = vmul.f32 %v1608, %v1635
        %v1645 = vmul.f32 %v1609, %v1635
        %v1646 = vmul.f32 %v1610, %v1635
        %v1647 = vmul.f32 %v1611, %v1635
        %v1648 = vmul.f32 %v1612, %v1635
        %v1649 = vmul.f32 %v1613, %v1635
        %v1650 = vmul.f32 %v1614, %v1635
        %v1651 = vmul.f32 %v1615, %v1635
        %v1652 = vmul.f32 %v1616, %v1635
        %v1653 = vmul.f32 %v1617, %v1635
        %v1654 = vmul.f32 %v1618, %v1635
        %v1655 = vmul.f32 %v1619, %v1635
        %v1656 = vmul.f32 %v1620, %v1635
        %v1657 = vmul.f32 %v1621, %v1635
        %v1658 = vmul.f32 %v1622, %v1635
        %v1659 = vmul.f32 %v1623, %v1635
        %v1660 = vmul.f32 %v1624, %v1635
        %v1661 = vmul.f32 %v1625, %v1635
        %v1662 = vmul.f32 %v1626, %v1635
        %v1663 = vmul.f32 %v1627, %v1635
        %v1664 = vmul.f32 %v1628, %v1635
        %v1665 = vmul.f32 %v1629, %v1635
        %v1666 = vmul.f32 %v1630, %v1635
        %v1667 = vmul.f32 %v1631, %v1635
        %v1668 = vadd.f32 %v1636, 0.0
        %v1669 = vadd.f32 %v1637, 0.0
        %v1670 = vadd.f32 %v1638, 0.0
        %v1671 = vadd.f32 %v1639, 0.0
        %v1672 = vadd.f32 %v1640, 0.0
        %v1673 = vadd.f32 %v1641, 0.0
        %v1674 = vadd.f32 %v1642, 0.0
        %v1675 = vadd.f32 %v1643, 0.0
        %v1676 = vadd.f32 %v1644, 0.0
        %v1677 = vadd.f32 %v1645, 0.0
        %v1678 = vadd.f32 %v1646, 0.0
        %v1679 = vadd.f32 %v1647, 0.0
        %v1680 = vadd.f32 %v1648, 0.0
        %v1681 = vadd.f32 %v1649, 0.0
        %v1682 = vadd.f32 %v1650, 0.0
        %v1683 = vadd.f32 %v1651, 0.0
        %v1684 = vadd.f32 %v1652, 0.0
        %v1685 = vadd.f32 %v1653, 0.0
        %v1686 = vadd.f32 %v1654, 0.0
        %v1687 = vadd.f32 %v1655, 0.0
        %v1688 = vadd.f32 %v1656, 0.0
        %v1689 = vadd.f32 %v1657, 0.0
        %v1690 = vadd.f32 %v1658, 0.0
        %v1691 = vadd.f32 %v1659, 0.0
        %v1692 = vadd.f32 %v1660, 0.0
        %v1693 = vadd.f32 %v1661, 0.0
        %v1694 = vadd.f32 %v1662, 0.0
        %v1695 = vadd.f32 %v1663, 0.0
        %v1696 = vadd.f32 %v1664, 0.0
        %v1697 = vadd.f32 %v1665, 0.0
        %v1698 = vadd.f32 %v1666, 0.0
        %v1699 = vadd.f32 %v1667, 0.0
        %v1700 = vld [vmem:[%s1526] sm:$0xff]
        %v1701 = vld [vmem:[%s1526 + $0x8] sm:$0xff]
        %v1702 = vld [vmem:[%s1526 + $0x10] sm:$0xff]
        %v1703 = vld [vmem:[%s1526 + $0x18] sm:$0xff]
        %v1704 = vld [vmem:[%s1526 + $0x20] sm:$0xff]
        %v1705 = vld [vmem:[%s1526 + $0x28] sm:$0xff]
        %v1706 = vld [vmem:[%s1526 + $0x30] sm:$0xff]
        %v1707 = vld [vmem:[%s1526 + $0x38] sm:$0xff]
        %v1708 = vld [vmem:[%s1526 + $0x40] sm:$0xff]
        %v1709 = vld [vmem:[%s1526 + $0x48] sm:$0xff]
        %v1710 = vld [vmem:[%s1526 + $0x50] sm:$0xff]
        %v1711 = vld [vmem:[%s1526 + $0x58] sm:$0xff]
        %v1712 = vld [vmem:[%s1526 + $0x60] sm:$0xff]
        %v1713 = vld [vmem:[%s1526 + $0x68] sm:$0xff]
        %v1714 = vld [vmem:[%s1526 + $0x70] sm:$0xff]
        %v1715 = vld [vmem:[%s1526 + $0x78] sm:$0xff]
        %v1716 = vld [vmem:[%s1526 + $0x80] sm:$0xff]
        %v1717 = vld [vmem:[%s1526 + $0x88] sm:$0xff]
        %v1718 = vld [vmem:[%s1526 + $0x90] sm:$0xff]
        %v1719 = vld [vmem:[%s1526 + $0x98] sm:$0xff]
        %v1720 = vld [vmem:[%s1526 + $0xa0] sm:$0xff]
        %v1721 = vld [vmem:[%s1526 + $0xa8] sm:$0xff]
        %v1722 = vld [vmem:[%s1526 + $0xb0] sm:$0xff]
        %v1723 = vld [vmem:[%s1526 + $0xb8] sm:$0xff]
        %v1724 = vld [vmem:[%s1526 + $0xc0] sm:$0xff]
        %v1725 = vld [vmem:[%s1526 + $0xc8] sm:$0xff]
        %v1726 = vld [vmem:[%s1526 + $0xd0] sm:$0xff]
        %v1727 = vld [vmem:[%s1526 + $0xd8] sm:$0xff]
        %v1728 = vld [vmem:[%s1526 + $0xe0] sm:$0xff]
        %v1729 = vld [vmem:[%s1526 + $0xe8] sm:$0xff]
        %v1730 = vld [vmem:[%s1526 + $0xf0] sm:$0xff]
        %v1731 = vld [vmem:[%s1526 + $0xf8] sm:$0xff]
        %v1732 = vlaneseq
        %v1733 = vshrl.u32 %v1732, 7
        %v1734 = vsub.s32 1, %v1733
        %v1735 = vrot.slane %v685, %v1734
        %v1736 = vmul.f32 %v1700, %v1735
        %v1737 = vmul.f32 %v1701, %v1735
        %v1738 = vmul.f32 %v1702, %v1735
        %v1739 = vmul.f32 %v1703, %v1735
        %v1740 = vmul.f32 %v1704, %v1735
        %v1741 = vmul.f32 %v1705, %v1735
        %v1742 = vmul.f32 %v1706, %v1735
        %v1743 = vmul.f32 %v1707, %v1735
        %v1744 = vmul.f32 %v1708, %v1735
        %v1745 = vmul.f32 %v1709, %v1735
        %v1746 = vmul.f32 %v1710, %v1735
        %v1747 = vmul.f32 %v1711, %v1735
        %v1748 = vmul.f32 %v1712, %v1735
        %v1749 = vmul.f32 %v1713, %v1735
        %v1750 = vmul.f32 %v1714, %v1735
        %v1751 = vmul.f32 %v1715, %v1735
        %v1752 = vmul.f32 %v1716, %v1735
        %v1753 = vmul.f32 %v1717, %v1735
        %v1754 = vmul.f32 %v1718, %v1735
        %v1755 = vmul.f32 %v1719, %v1735
        %v1756 = vmul.f32 %v1720, %v1735
        %v1757 = vmul.f32 %v1721, %v1735
        %v1758 = vmul.f32 %v1722, %v1735
        %v1759 = vmul.f32 %v1723, %v1735
        %v1760 = vmul.f32 %v1724, %v1735
        %v1761 = vmul.f32 %v1725, %v1735
        %v1762 = vmul.f32 %v1726, %v1735
        %v1763 = vmul.f32 %v1727, %v1735
        %v1764 = vmul.f32 %v1728, %v1735
        %v1765 = vmul.f32 %v1729, %v1735
        %v1766 = vmul.f32 %v1730, %v1735
        %v1767 = vmul.f32 %v1731, %v1735
        %v1768 = vadd.f32 %v1668, %v1736
        %v1769 = vadd.f32 %v1669, %v1737
        %v1770 = vadd.f32 %v1670, %v1738
        %v1771 = vadd.f32 %v1671, %v1739
        %v1772 = vadd.f32 %v1672, %v1740
        %v1773 = vadd.f32 %v1673, %v1741
        %v1774 = vadd.f32 %v1674, %v1742
        %v1775 = vadd.f32 %v1675, %v1743
        %v1776 = vadd.f32 %v1676, %v1744
        %v1777 = vadd.f32 %v1677, %v1745
        %v1778 = vadd.f32 %v1678, %v1746
        %v1779 = vadd.f32 %v1679, %v1747
        %v1780 = vadd.f32 %v1680, %v1748
        %v1781 = vadd.f32 %v1681, %v1749
        %v1782 = vadd.f32 %v1682, %v1750
        %v1783 = vadd.f32 %v1683, %v1751
        %v1784 = vadd.f32 %v1684, %v1752
        %v1785 = vadd.f32 %v1685, %v1753
        %v1786 = vadd.f32 %v1686, %v1754
        %v1787 = vadd.f32 %v1687, %v1755
        %v1788 = vadd.f32 %v1688, %v1756
        %v1789 = vadd.f32 %v1689, %v1757
        %v1790 = vadd.f32 %v1690, %v1758
        %v1791 = vadd.f32 %v1691, %v1759
        %v1792 = vadd.f32 %v1692, %v1760
        %v1793 = vadd.f32 %v1693, %v1761
        %v1794 = vadd.f32 %v1694, %v1762
        %v1795 = vadd.f32 %v1695, %v1763
        %v1796 = vadd.f32 %v1696, %v1764
        %v1797 = vadd.f32 %v1697, %v1765
        %v1798 = vadd.f32 %v1698, %v1766
        %v1799 = vadd.f32 %v1699, %v1767
        %v1800 = vld [vmem:[%s1563] sm:$0xff]
        %v1801 = vld [vmem:[%s1563 + $0x8] sm:$0xff]
        %v1802 = vld [vmem:[%s1563 + $0x10] sm:$0xff]
        %v1803 = vld [vmem:[%s1563 + $0x18] sm:$0xff]
        %v1804 = vld [vmem:[%s1563 + $0x20] sm:$0xff]
        %v1805 = vld [vmem:[%s1563 + $0x28] sm:$0xff]
        %v1806 = vld [vmem:[%s1563 + $0x30] sm:$0xff]
        %v1807 = vld [vmem:[%s1563 + $0x38] sm:$0xff]
        %v1808 = vld [vmem:[%s1563 + $0x40] sm:$0xff]
        %v1809 = vld [vmem:[%s1563 + $0x48] sm:$0xff]
        %v1810 = vld [vmem:[%s1563 + $0x50] sm:$0xff]
        %v1811 = vld [vmem:[%s1563 + $0x58] sm:$0xff]
        %v1812 = vld [vmem:[%s1563 + $0x60] sm:$0xff]
        %v1813 = vld [vmem:[%s1563 + $0x68] sm:$0xff]
        %v1814 = vld [vmem:[%s1563 + $0x70] sm:$0xff]
        %v1815 = vld [vmem:[%s1563 + $0x78] sm:$0xff]
        %v1816 = vld [vmem:[%s1563 + $0x80] sm:$0xff]
        %v1817 = vld [vmem:[%s1563 + $0x88] sm:$0xff]
        %v1818 = vld [vmem:[%s1563 + $0x90] sm:$0xff]
        %v1819 = vld [vmem:[%s1563 + $0x98] sm:$0xff]
        %v1820 = vld [vmem:[%s1563 + $0xa0] sm:$0xff]
        %v1821 = vld [vmem:[%s1563 + $0xa8] sm:$0xff]
        %v1822 = vld [vmem:[%s1563 + $0xb0] sm:$0xff]
        %v1823 = vld [vmem:[%s1563 + $0xb8] sm:$0xff]
        %v1824 = vld [vmem:[%s1563 + $0xc0] sm:$0xff]
        %v1825 = vld [vmem:[%s1563 + $0xc8] sm:$0xff]
        %v1826 = vld [vmem:[%s1563 + $0xd0] sm:$0xff]
        %v1827 = vld [vmem:[%s1563 + $0xd8] sm:$0xff]
        %v1828 = vld [vmem:[%s1563 + $0xe0] sm:$0xff]
        %v1829 = vld [vmem:[%s1563 + $0xe8] sm:$0xff]
        %v1830 = vld [vmem:[%s1563 + $0xf0] sm:$0xff]
        %v1831 = vld [vmem:[%s1563 + $0xf8] sm:$0xff]
        %v1832 = vlaneseq
        %v1833 = vshrl.u32 %v1832, 7
        %v1834 = vsub.s32 2, %v1833
        %v1835 = vrot.slane %v685, %v1834
        %v1836 = vmul.f32 %v1800, %v1835
        %v1837 = vmul.f32 %v1801, %v1835
        %v1838 = vmul.f32 %v1802, %v1835
        %v1839 = vmul.f32 %v1803, %v1835
        %v1840 = vmul.f32 %v1804, %v1835
        %v1841 = vmul.f32 %v1805, %v1835
        %v1842 = vmul.f32 %v1806, %v1835
        %v1843 = vmul.f32 %v1807, %v1835
        %v1844 = vmul.f32 %v1808, %v1835
        %v1845 = vmul.f32 %v1809, %v1835
        %v1846 = vmul.f32 %v1810, %v1835
        %v1847 = vmul.f32 %v1811, %v1835
        %v1848 = vmul.f32 %v1812, %v1835
        %v1849 = vmul.f32 %v1813, %v1835
        %v1850 = vmul.f32 %v1814, %v1835
        %v1851 = vmul.f32 %v1815, %v1835
        %v1852 = vmul.f32 %v1816, %v1835
        %v1853 = vmul.f32 %v1817, %v1835
        %v1854 = vmul.f32 %v1818, %v1835
        %v1855 = vmul.f32 %v1819, %v1835
        %v1856 = vmul.f32 %v1820, %v1835
        %v1857 = vmul.f32 %v1821, %v1835
        %v1858 = vmul.f32 %v1822, %v1835
        %v1859 = vmul.f32 %v1823, %v1835
        %v1860 = vmul.f32 %v1824, %v1835
        %v1861 = vmul.f32 %v1825, %v1835
        %v1862 = vmul.f32 %v1826, %v1835
        %v1863 = vmul.f32 %v1827, %v1835
        %v1864 = vmul.f32 %v1828, %v1835
        %v1865 = vmul.f32 %v1829, %v1835
        %v1866 = vmul.f32 %v1830, %v1835
        %v1867 = vmul.f32 %v1831, %v1835
        %v1868 = vadd.f32 %v1768, %v1836
        %v1869 = vadd.f32 %v1769, %v1837
        %v1870 = vadd.f32 %v1770, %v1838
        %v1871 = vadd.f32 %v1771, %v1839
        %v1872 = vadd.f32 %v1772, %v1840
        %v1873 = vadd.f32 %v1773, %v1841
        %v1874 = vadd.f32 %v1774, %v1842
        %v1875 = vadd.f32 %v1775, %v1843
        %v1876 = vadd.f32 %v1776, %v1844
        %v1877 = vadd.f32 %v1777, %v1845
        %v1878 = vadd.f32 %v1778, %v1846
        %v1879 = vadd.f32 %v1779, %v1847
        %v1880 = vadd.f32 %v1780, %v1848
        %v1881 = vadd.f32 %v1781, %v1849
        %v1882 = vadd.f32 %v1782, %v1850
        %v1883 = vadd.f32 %v1783, %v1851
        %v1884 = vadd.f32 %v1784, %v1852
        %v1885 = vadd.f32 %v1785, %v1853
        %v1886 = vadd.f32 %v1786, %v1854
        %v1887 = vadd.f32 %v1787, %v1855
        %v1888 = vadd.f32 %v1788, %v1856
        %v1889 = vadd.f32 %v1789, %v1857
        %v1890 = vadd.f32 %v1790, %v1858
        %v1891 = vadd.f32 %v1791, %v1859
        %v1892 = vadd.f32 %v1792, %v1860
        %v1893 = vadd.f32 %v1793, %v1861
        %v1894 = vadd.f32 %v1794, %v1862
        %v1895 = vadd.f32 %v1795, %v1863
        %v1896 = vadd.f32 %v1796, %v1864
        %v1897 = vadd.f32 %v1797, %v1865
        %v1898 = vadd.f32 %v1798, %v1866
        %v1899 = vadd.f32 %v1799, %v1867
        %v1900 = vld [vmem:[#allocation2 + $0x100] sm:$0xff]
        %v1901 = vld [vmem:[#allocation2 + $0x108] sm:$0xff]
        %v1902 = vlaneseq
        %v1903 = vshrl.u32 %v1902, 7
        %v1904 = vsub.s32 3, %v1903
        %v1905 = vrot.slane %v685, %v1904
        %v1906 = vmul.f32 %v1602, %v1905
        %v1907 = vmul.f32 %v1603, %v1905
        %v1908 = vmul.f32 %v1604, %v1905
        %v1909 = vmul.f32 %v1605, %v1905
        %v1910 = vmul.f32 %v1606, %v1905
        %v1911 = vmul.f32 %v1607, %v1905
        %v1912 = vmul.f32 %v1608, %v1905
        %v1913 = vmul.f32 %v1609, %v1905
        %v1914 = vmul.f32 %v1610, %v1905
        %v1915 = vmul.f32 %v1611, %v1905
        %v1916 = vmul.f32 %v1612, %v1905
        %v1917 = vmul.f32 %v1613, %v1905
        %v1918 = vmul.f32 %v1614, %v1905
        %v1919 = vmul.f32 %v1615, %v1905
        %v1920 = vmul.f32 %v1616, %v1905
        %v1921 = vmul.f32 %v1617, %v1905
        %v1922 = vmul.f32 %v1618, %v1905
        %v1923 = vmul.f32 %v1619, %v1905
        %v1924 = vmul.f32 %v1620, %v1905
        %v1925 = vmul.f32 %v1621, %v1905
        %v1926 = vmul.f32 %v1622, %v1905
        %v1927 = vmul.f32 %v1623, %v1905
        %v1928 = vmul.f32 %v1624, %v1905
        %v1929 = vmul.f32 %v1625, %v1905
        %v1930 = vmul.f32 %v1626, %v1905
        %v1931 = vmul.f32 %v1627, %v1905
        %v1932 = vmul.f32 %v1628, %v1905
        %v1933 = vmul.f32 %v1629, %v1905
        %v1934 = vmul.f32 %v1630, %v1905
        %v1935 = vmul.f32 %v1631, %v1905
        %v1936 = vmul.f32 %v1900, %v1905
        %v1937 = vmul.f32 %v1901, %v1905
        %v1938 = vadd.f32 %v1868, %v1906
        %v1939 = vadd.f32 %v1869, %v1907
        %v1940 = vadd.f32 %v1870, %v1908
        %v1941 = vadd.f32 %v1871, %v1909
        %v1942 = vadd.f32 %v1872, %v1910
        %v1943 = vadd.f32 %v1873, %v1911
        %v1944 = vadd.f32 %v1874, %v1912
        %v1945 = vadd.f32 %v1875, %v1913
        %v1946 = vadd.f32 %v1876, %v1914
        %v1947 = vadd.f32 %v1877, %v1915
        %v1948 = vadd.f32 %v1878, %v1916
        %v1949 = vadd.f32 %v1879, %v1917
        %v1950 = vadd.f32 %v1880, %v1918
        %v1951 = vadd.f32 %v1881, %v1919
        %v1952 = vadd.f32 %v1882, %v1920
        %v1953 = vadd.f32 %v1883, %v1921
        %v1954 = vadd.f32 %v1884, %v1922
        %v1955 = vadd.f32 %v1885, %v1923
        %v1956 = vadd.f32 %v1886, %v1924
        %v1957 = vadd.f32 %v1887, %v1925
        %v1958 = vadd.f32 %v1888, %v1926
        %v1959 = vadd.f32 %v1889, %v1927
        %v1960 = vadd.f32 %v1890, %v1928
        %v1961 = vadd.f32 %v1891, %v1929
        %v1962 = vadd.f32 %v1892, %v1930
        %v1963 = vadd.f32 %v1893, %v1931
        %v1964 = vadd.f32 %v1894, %v1932
        %v1965 = vadd.f32 %v1895, %v1933
        %v1966 = vadd.f32 %v1896, %v1934
        %v1967 = vadd.f32 %v1897, %v1935
        %v1968 = vadd.f32 %v1898, %v1936
        %v1969 = vadd.f32 %v1899, %v1937
        %v1970 = vld [vmem:[%s1526 + $0x100] sm:$0xff]
        %v1971 = vld [vmem:[%s1526 + $0x108] sm:$0xff]
        %v1972 = vlaneseq
        %v1973 = vshrl.u32 %v1972, 7
        %v1974 = vsub.s32 4, %v1973
        %v1975 = vrot.slane %v685, %v1974
        %v1976 = vmul.f32 %v1702, %v1975
        %v1977 = vmul.f32 %v1703, %v1975
        %v1978 = vmul.f32 %v1704, %v1975
        %v1979 = vmul.f32 %v1705, %v1975
        %v1980 = vmul.f32 %v1706, %v1975
        %v1981 = vmul.f32 %v1707, %v1975
        %v1982 = vmul.f32 %v1708, %v1975
        %v1983 = vmul.f32 %v1709, %v1975
        %v1984 = vmul.f32 %v1710, %v1975
        %v1985 = vmul.f32 %v1711, %v1975
        %v1986 = vmul.f32 %v1712, %v1975
        %v1987 = vmul.f32 %v1713, %v1975
        %v1988 = vmul.f32 %v1714, %v1975
        %v1989 = vmul.f32 %v1715, %v1975
        %v1990 = vmul.f32 %v1716, %v1975
        %v1991 = vmul.f32 %v1717, %v1975
        %v1992 = vmul.f32 %v1718, %v1975
        %v1993 = vmul.f32 %v1719, %v1975
        %v1994 = vmul.f32 %v1720, %v1975
        %v1995 = vmul.f32 %v1721, %v1975
        %v1996 = vmul.f32 %v1722, %v1975
        %v1997 = vmul.f32 %v1723, %v1975
        %v1998 = vmul.f32 %v1724, %v1975
        %v1999 = vmul.f32 %v1725, %v1975
        %v2000 = vmul.f32 %v1726, %v1975
        %v2001 = vmul.f32 %v1727, %v1975
        %v2002 = vmul.f32 %v1728, %v1975
        %v2003 = vmul.f32 %v1729, %v1975
        %v2004 = vmul.f32 %v1730, %v1975
        %v2005 = vmul.f32 %v1731, %v1975
        %v2006 = vmul.f32 %v1970, %v1975
        %v2007 = vmul.f32 %v1971, %v1975
        %v2008 = vadd.f32 %v1938, %v1976
        %v2009 = vadd.f32 %v1939, %v1977
        %v2010 = vadd.f32 %v1940, %v1978
        %v2011 = vadd.f32 %v1941, %v1979
        %v2012 = vadd.f32 %v1942, %v1980
        %v2013 = vadd.f32 %v1943, %v1981
        %v2014 = vadd.f32 %v1944, %v1982
        %v2015 = vadd.f32 %v1945, %v1983
        %v2016 = vadd.f32 %v1946, %v1984
        %v2017 = vadd.f32 %v1947, %v1985
        %v2018 = vadd.f32 %v1948, %v1986
        %v2019 = vadd.f32 %v1949, %v1987
        %v2020 = vadd.f32 %v1950, %v1988
        %v2021 = vadd.f32 %v1951, %v1989
        %v2022 = vadd.f32 %v1952, %v1990
        %v2023 = vadd.f32 %v1953, %v1991
        %v2024 = vadd.f32 %v1954, %v1992
        %v2025 = vadd.f32 %v1955, %v1993
        %v2026 = vadd.f32 %v1956, %v1994
        %v2027 = vadd.f32 %v1957, %v1995
        %v2028 = vadd.f32 %v1958, %v1996
        %v2029 = vadd.f32 %v1959, %v1997
        %v2030 = vadd.f32 %v1960, %v1998
        %v2031 = vadd.f32 %v1961, %v1999
        %v2032 = vadd.f32 %v1962, %v2000
        %v2033 = vadd.f32 %v1963, %v2001
        %v2034 = vadd.f32 %v1964, %v2002
        %v2035 = vadd.f32 %v1965, %v2003
        %v2036 = vadd.f32 %v1966, %v2004
        %v2037 = vadd.f32 %v1967, %v2005
        %v2038 = vadd.f32 %v1968, %v2006
        %v2039 = vadd.f32 %v1969, %v2007
        %v2040 = vld [vmem:[%s1563 + $0x100] sm:$0xff]
        %v2041 = vld [vmem:[%s1563 + $0x108] sm:$0xff]
        %v2042 = vlaneseq
        %v2043 = vshrl.u32 %v2042, 7
        %v2044 = vsub.s32 5, %v2043
        %v2045 = vrot.slane %v685, %v2044
        %v2046 = vmul.f32 %v1802, %v2045
        %v2047 = vmul.f32 %v1803, %v2045
        %v2048 = vmul.f32 %v1804, %v2045
        %v2049 = vmul.f32 %v1805, %v2045
        %v2050 = vmul.f32 %v1806, %v2045
        %v2051 = vmul.f32 %v1807, %v2045
        %v2052 = vmul.f32 %v1808, %v2045
        %v2053 = vmul.f32 %v1809, %v2045
        %v2054 = vmul.f32 %v1810, %v2045
        %v2055 = vmul.f32 %v1811, %v2045
        %v2056 = vmul.f32 %v1812, %v2045
        %v2057 = vmul.f32 %v1813, %v2045
        %v2058 = vmul.f32 %v1814, %v2045
        %v2059 = vmul.f32 %v1815, %v2045
        %v2060 = vmul.f32 %v1816, %v2045
        %v2061 = vmul.f32 %v1817, %v2045
        %v2062 = vmul.f32 %v1818, %v2045
        %v2063 = vmul.f32 %v1819, %v2045
        %v2064 = vmul.f32 %v1820, %v2045
        %v2065 = vmul.f32 %v1821, %v2045
        %v2066 = vmul.f32 %v1822, %v2045
        %v2067 = vmul.f32 %v1823, %v2045
        %v2068 = vmul.f32 %v1824, %v2045
        %v2069 = vmul.f32 %v1825, %v2045
        %v2070 = vmul.f32 %v1826, %v2045
        %v2071 = vmul.f32 %v1827, %v2045
        %v2072 = vmul.f32 %v1828, %v2045
        %v2073 = vmul.f32 %v1829, %v2045
        %v2074 = vmul.f32 %v1830, %v2045
        %v2075 = vmul.f32 %v1831, %v2045
        %v2076 = vmul.f32 %v2040, %v2045
        %v2077 = vmul.f32 %v2041, %v2045
        %v2078 = vadd.f32 %v2008, %v2046
        %v2079 = vadd.f32 %v2009, %v2047
        %v2080 = vadd.f32 %v2010, %v2048
        %v2081 = vadd.f32 %v2011, %v2049
        %v2082 = vadd.f32 %v2012, %v2050
        %v2083 = vadd.f32 %v2013, %v2051
        %v2084 = vadd.f32 %v2014, %v2052
        %v2085 = vadd.f32 %v2015, %v2053
        %v2086 = vadd.f32 %v2016, %v2054
        %v2087 = vadd.f32 %v2017, %v2055
        %v2088 = vadd.f32 %v2018, %v2056
        %v2089 = vadd.f32 %v2019, %v2057
        %v2090 = vadd.f32 %v2020, %v2058
        %v2091 = vadd.f32 %v2021, %v2059
        %v2092 = vadd.f32 %v2022, %v2060
        %v2093 = vadd.f32 %v2023, %v2061
        %v2094 = vadd.f32 %v2024, %v2062
        %v2095 = vadd.f32 %v2025, %v2063
        %v2096 = vadd.f32 %v2026, %v2064
        %v2097 = vadd.f32 %v2027, %v2065
        %v2098 = vadd.f32 %v2028, %v2066
        %v2099 = vadd.f32 %v2029, %v2067
        %v2100 = vadd.f32 %v2030, %v2068
        %v2101 = vadd.f32 %v2031, %v2069
        %v2102 = vadd.f32 %v2032, %v2070
        %v2103 = vadd.f32 %v2033, %v2071
        %v2104 = vadd.f32 %v2034, %v2072
        %v2105 = vadd.f32 %v2035, %v2073
        %v2106 = vadd.f32 %v2036, %v2074
        %v2107 = vadd.f32 %v2037, %v2075
        %v2108 = vadd.f32 %v2038, %v2076
        %v2109 = vadd.f32 %v2039, %v2077
        %v2110 = vld [vmem:[#allocation2 + $0x110] sm:$0xff]
        %v2111 = vld [vmem:[#allocation2 + $0x118] sm:$0xff]
        %v2112 = vlaneseq
        %v2113 = vshrl.u32 %v2112, 7
        %v2114 = vsub.s32 6, %v2113
        %v2115 = vrot.slane %v685, %v2114
        %v2116 = vmul.f32 %v1604, %v2115
        %v2117 = vmul.f32 %v1605, %v2115
        %v2118 = vmul.f32 %v1606, %v2115
        %v2119 = vmul.f32 %v1607, %v2115
        %v2120 = vmul.f32 %v1608, %v2115
        %v2121 = vmul.f32 %v1609, %v2115
        %v2122 = vmul.f32 %v1610, %v2115
        %v2123 = vmul.f32 %v1611, %v2115
        %v2124 = vmul.f32 %v1612, %v2115
        %v2125 = vmul.f32 %v1613, %v2115
        %v2126 = vmul.f32 %v1614, %v2115
        %v2127 = vmul.f32 %v1615, %v2115
        %v2128 = vmul.f32 %v1616, %v2115
        %v2129 = vmul.f32 %v1617, %v2115
        %v2130 = vmul.f32 %v1618, %v2115
        %v2131 = vmul.f32 %v1619, %v2115
        %v2132 = vmul.f32 %v1620, %v2115
        %v2133 = vmul.f32 %v1621, %v2115
        %v2134 = vmul.f32 %v1622, %v2115
        %v2135 = vmul.f32 %v1623, %v2115
        %v2136 = vmul.f32 %v1624, %v2115
        %v2137 = vmul.f32 %v1625, %v2115
        %v2138 = vmul.f32 %v1626, %v2115
        %v2139 = vmul.f32 %v1627, %v2115
        %v2140 = vmul.f32 %v1628, %v2115
        %v2141 = vmul.f32 %v1629, %v2115
        %v2142 = vmul.f32 %v1630, %v2115
        %v2143 = vmul.f32 %v1631, %v2115
        %v2144 = vmul.f32 %v1900, %v2115
        %v2145 = vmul.f32 %v1901, %v2115
        %v2146 = vmul.f32 %v2110, %v2115
        %v2147 = vmul.f32 %v2111, %v2115
        %v2148 = vadd.f32 %v2078, %v2116
        %v2149 = vadd.f32 %v2079, %v2117
        %v2150 = vadd.f32 %v2080, %v2118
        %v2151 = vadd.f32 %v2081, %v2119
        %v2152 = vadd.f32 %v2082, %v2120
        %v2153 = vadd.f32 %v2083, %v2121
        %v2154 = vadd.f32 %v2084, %v2122
        %v2155 = vadd.f32 %v2085, %v2123
        %v2156 = vadd.f32 %v2086, %v2124
        %v2157 = vadd.f32 %v2087, %v2125
        %v2158 = vadd.f32 %v2088, %v2126
        %v2159 = vadd.f32 %v2089, %v2127
        %v2160 = vadd.f32 %v2090, %v2128
        %v2161 = vadd.f32 %v2091, %v2129
        %v2162 = vadd.f32 %v2092, %v2130
        %v2163 = vadd.f32 %v2093, %v2131
        %v2164 = vadd.f32 %v2094, %v2132
        %v2165 = vadd.f32 %v2095, %v2133
        %v2166 = vadd.f32 %v2096, %v2134
        %v2167 = vadd.f32 %v2097, %v2135
        %v2168 = vadd.f32 %v2098, %v2136
        %v2169 = vadd.f32 %v2099, %v2137
        %v2170 = vadd.f32 %v2100, %v2138
        %v2171 = vadd.f32 %v2101, %v2139
        %v2172 = vadd.f32 %v2102, %v2140
        %v2173 = vadd.f32 %v2103, %v2141
        %v2174 = vadd.f32 %v2104, %v2142
        %v2175 = vadd.f32 %v2105, %v2143
        %v2176 = vadd.f32 %v2106, %v2144
        %v2177 = vadd.f32 %v2107, %v2145
        %v2178 = vadd.f32 %v2108, %v2146
        %v2179 = vadd.f32 %v2109, %v2147
        %v2180 = vld [vmem:[%s1526 + $0x110] sm:$0xff]
        %v2181 = vld [vmem:[%s1526 + $0x118] sm:$0xff]
        %v2182 = vlaneseq
        %v2183 = vshrl.u32 %v2182, 7
        %v2184 = vsub.s32 7, %v2183
        %v2185 = vrot.slane %v685, %v2184
        %v2186 = vmul.f32 %v1704, %v2185
        %v2187 = vmul.f32 %v1705, %v2185
        %v2188 = vmul.f32 %v1706, %v2185
        %v2189 = vmul.f32 %v1707, %v2185
        %v2190 = vmul.f32 %v1708, %v2185
        %v2191 = vmul.f32 %v1709, %v2185
        %v2192 = vmul.f32 %v1710, %v2185
        %v2193 = vmul.f32 %v1711, %v2185
        %v2194 = vmul.f32 %v1712, %v2185
        %v2195 = vmul.f32 %v1713, %v2185
        %v2196 = vmul.f32 %v1714, %v2185
        %v2197 = vmul.f32 %v1715, %v2185
        %v2198 = vmul.f32 %v1716, %v2185
        %v2199 = vmul.f32 %v1717, %v2185
        %v2200 = vmul.f32 %v1718, %v2185
        %v2201 = vmul.f32 %v1719, %v2185
        %v2202 = vmul.f32 %v1720, %v2185
        %v2203 = vmul.f32 %v1721, %v2185
        %v2204 = vmul.f32 %v1722, %v2185
        %v2205 = vmul.f32 %v1723, %v2185
        %v2206 = vmul.f32 %v1724, %v2185
        %v2207 = vmul.f32 %v1725, %v2185
        %v2208 = vmul.f32 %v1726, %v2185
        %v2209 = vmul.f32 %v1727, %v2185
        %v2210 = vmul.f32 %v1728, %v2185
        %v2211 = vmul.f32 %v1729, %v2185
        %v2212 = vmul.f32 %v1730, %v2185
        %v2213 = vmul.f32 %v1731, %v2185
        %v2214 = vmul.f32 %v1970, %v2185
        %v2215 = vmul.f32 %v1971, %v2185
        %v2216 = vmul.f32 %v2180, %v2185
        %v2217 = vmul.f32 %v2181, %v2185
        %v2218 = vadd.f32 %v2148, %v2186
        %v2219 = vadd.f32 %v2149, %v2187
        %v2220 = vadd.f32 %v2150, %v2188
        %v2221 = vadd.f32 %v2151, %v2189
        %v2222 = vadd.f32 %v2152, %v2190
        %v2223 = vadd.f32 %v2153, %v2191
        %v2224 = vadd.f32 %v2154, %v2192
        %v2225 = vadd.f32 %v2155, %v2193
        %v2226 = vadd.f32 %v2156, %v2194
        %v2227 = vadd.f32 %v2157, %v2195
        %v2228 = vadd.f32 %v2158, %v2196
        %v2229 = vadd.f32 %v2159, %v2197
        %v2230 = vadd.f32 %v2160, %v2198
        %v2231 = vadd.f32 %v2161, %v2199
        %v2232 = vadd.f32 %v2162, %v2200
        %v2233 = vadd.f32 %v2163, %v2201
        %v2234 = vadd.f32 %v2164, %v2202
        %v2235 = vadd.f32 %v2165, %v2203
        %v2236 = vadd.f32 %v2166, %v2204
        %v2237 = vadd.f32 %v2167, %v2205
        %v2238 = vadd.f32 %v2168, %v2206
        %v2239 = vadd.f32 %v2169, %v2207
        %v2240 = vadd.f32 %v2170, %v2208
        %v2241 = vadd.f32 %v2171, %v2209
        %v2242 = vadd.f32 %v2172, %v2210
        %v2243 = vadd.f32 %v2173, %v2211
        %v2244 = vadd.f32 %v2174, %v2212
        %v2245 = vadd.f32 %v2175, %v2213
        %v2246 = vadd.f32 %v2176, %v2214
        %v2247 = vadd.f32 %v2177, %v2215
        %v2248 = vadd.f32 %v2178, %v2216
        %v2249 = vadd.f32 %v2179, %v2217
        %v2250 = vld [vmem:[%s1563 + $0x110] sm:$0xff]
        %v2251 = vld [vmem:[%s1563 + $0x118] sm:$0xff]
        %v2252 = vlaneseq
        %v2253 = vshrl.u32 %v2252, 7
        %v2254 = vsub.s32 0, %v2253
        %v2255 = vrot.slane %v686, %v2254
        %v2256 = vmul.f32 %v1804, %v2255
        %v2257 = vmul.f32 %v1805, %v2255
        %v2258 = vmul.f32 %v1806, %v2255
        %v2259 = vmul.f32 %v1807, %v2255
        %v2260 = vmul.f32 %v1808, %v2255
        %v2261 = vmul.f32 %v1809, %v2255
        %v2262 = vmul.f32 %v1810, %v2255
        %v2263 = vmul.f32 %v1811, %v2255
        %v2264 = vmul.f32 %v1812, %v2255
        %v2265 = vmul.f32 %v1813, %v2255
        %v2266 = vmul.f32 %v1814, %v2255
        %v2267 = vmul.f32 %v1815, %v2255
        %v2268 = vmul.f32 %v1816, %v2255
        %v2269 = vmul.f32 %v1817, %v2255
        %v2270 = vmul.f32 %v1818, %v2255
        %v2271 = vmul.f32 %v1819, %v2255
        %v2272 = vmul.f32 %v1820, %v2255
        %v2273 = vmul.f32 %v1821, %v2255
        %v2274 = vmul.f32 %v1822, %v2255
        %v2275 = vmul.f32 %v1823, %v2255
        %v2276 = vmul.f32 %v1824, %v2255
        %v2277 = vmul.f32 %v1825, %v2255
        %v2278 = vmul.f32 %v1826, %v2255
        %v2279 = vmul.f32 %v1827, %v2255
        %v2280 = vmul.f32 %v1828, %v2255
        %v2281 = vmul.f32 %v1829, %v2255
        %v2282 = vmul.f32 %v1830, %v2255
        %v2283 = vmul.f32 %v1831, %v2255
        %v2284 = vmul.f32 %v2040, %v2255
        %v2285 = vmul.f32 %v2041, %v2255
        %v2286 = vmul.f32 %v2250, %v2255
        %v2287 = vmul.f32 %v2251, %v2255
        %v2288 = vadd.f32 %v2218, %v2256
        %v2289 = vadd.f32 %v2219, %v2257
        %v2290 = vadd.f32 %v2220, %v2258
        %v2291 = vadd.f32 %v2221, %v2259
        %v2292 = vadd.f32 %v2222, %v2260
        %v2293 = vadd.f32 %v2223, %v2261
        %v2294 = vadd.f32 %v2224, %v2262
        %v2295 = vadd.f32 %v2225, %v2263
        %v2296 = vadd.f32 %v2226, %v2264
        %v2297 = vadd.f32 %v2227, %v2265
        %v2298 = vadd.f32 %v2228, %v2266
        %v2299 = vadd.f32 %v2229, %v2267
        %v2300 = vadd.f32 %v2230, %v2268
        %v2301 = vadd.f32 %v2231, %v2269
        %v2302 = vadd.f32 %v2232, %v2270
        %v2303 = vadd.f32 %v2233, %v2271
        %v2304 = vadd.f32 %v2234, %v2272
        %v2305 = vadd.f32 %v2235, %v2273
        %v2306 = vadd.f32 %v2236, %v2274
        %v2307 = vadd.f32 %v2237, %v2275
        %v2308 = vadd.f32 %v2238, %v2276
        %v2309 = vadd.f32 %v2239, %v2277
        %v2310 = vadd.f32 %v2240, %v2278
        %v2311 = vadd.f32 %v2241, %v2279
        %v2312 = vadd.f32 %v2242, %v2280
        %v2313 = vadd.f32 %v2243, %v2281
        %v2314 = vadd.f32 %v2244, %v2282
        %v2315 = vadd.f32 %v2245, %v2283
        %v2316 = vadd.f32 %v2246, %v2284
        %v2317 = vadd.f32 %v2247, %v2285
        %v2318 = vadd.f32 %v2248, %v2286
        %v2319 = vadd.f32 %v2249, %v2287
        %v2320 = vld [vmem:[%s4] sm:$0x1]
        %v2322 = vlaneseq
        %v2323 = vshrl.u32 %v2322, 7
        %v2324 = vsub.s32 0, %v2323
        %v2325 = vrot.slane %v2320, %v2324
        %v2327 = vadd.f32 %v2288, %v2325
        %v2328 = vadd.f32 %v2289, %v2325
        %v2329 = vadd.f32 %v2290, %v2325
        %v2330 = vadd.f32 %v2291, %v2325
        %v2331 = vadd.f32 %v2292, %v2325
        %v2332 = vadd.f32 %v2293, %v2325
        %v2333 = vadd.f32 %v2294, %v2325
        %v2334 = vadd.f32 %v2295, %v2325
        %v2335 = vadd.f32 %v2296, %v2325
        %v2336 = vadd.f32 %v2297, %v2325
        %v2337 = vadd.f32 %v2298, %v2325
        %v2338 = vadd.f32 %v2299, %v2325
        %v2339 = vadd.f32 %v2300, %v2325
        %v2340 = vadd.f32 %v2301, %v2325
        %v2341 = vadd.f32 %v2302, %v2325
        %v2342 = vadd.f32 %v2303, %v2325
        %v2343 = vadd.f32 %v2304, %v2325
        %v2344 = vadd.f32 %v2305, %v2325
        %v2345 = vadd.f32 %v2306, %v2325
        %v2346 = vadd.f32 %v2307, %v2325
        %v2347 = vadd.f32 %v2308, %v2325
        %v2348 = vadd.f32 %v2309, %v2325
        %v2349 = vadd.f32 %v2310, %v2325
        %v2350 = vadd.f32 %v2311, %v2325
        %v2351 = vadd.f32 %v2312, %v2325
        %v2352 = vadd.f32 %v2313, %v2325
        %v2353 = vadd.f32 %v2314, %v2325
        %v2354 = vadd.f32 %v2315, %v2325
        %v2355 = vadd.f32 %v2316, %v2325
        %v2356 = vadd.f32 %v2317, %v2325
        %v2357 = vadd.f32 %v2318, %v2325
        %v2358 = vadd.f32 %v2319, %v2325
        %v2359 = vmax.f32 %v2327, 0.0
        %v2360 = vmax.f32 %v2328, 0.0
        %v2361 = vmax.f32 %v2329, 0.0
        %v2362 = vmax.f32 %v2330, 0.0
        %v2363 = vmax.f32 %v2331, 0.0
        %v2364 = vmax.f32 %v2332, 0.0
        %v2365 = vmax.f32 %v2333, 0.0
        %v2366 = vmax.f32 %v2334, 0.0
        %v2367 = vmax.f32 %v2335, 0.0
        %v2368 = vmax.f32 %v2336, 0.0
        %v2369 = vmax.f32 %v2337, 0.0
        %v2370 = vmax.f32 %v2338, 0.0
        %v2371 = vmax.f32 %v2339, 0.0
        %v2372 = vmax.f32 %v2340, 0.0
        %v2373 = vmax.f32 %v2341, 0.0
        %v2374 = vmax.f32 %v2342, 0.0
        %v2375 = vmax.f32 %v2343, 0.0
        %v2376 = vmax.f32 %v2344, 0.0
        %v2377 = vmax.f32 %v2345, 0.0
        %v2378 = vmax.f32 %v2346, 0.0
        %v2379 = vmax.f32 %v2347, 0.0
        %v2380 = vmax.f32 %v2348, 0.0
        %v2381 = vmax.f32 %v2349, 0.0
        %v2382 = vmax.f32 %v2350, 0.0
        %v2383 = vmax.f32 %v2351, 0.0
        %v2384 = vmax.f32 %v2352, 0.0
        %v2385 = vmax.f32 %v2353, 0.0
        %v2386 = vmax.f32 %v2354, 0.0
        %v2387 = vmax.f32 %v2355, 0.0
        %v2388 = vmax.f32 %v2356, 0.0
        %v2389 = vmax.f32 %v2357, 0.0
        %v2390 = vmax.f32 %v2358, 0.0
        %v2391 = vmin.f32 %v2359, 6.0
        %v2392 = vmin.f32 %v2360, 6.0
        %v2393 = vmin.f32 %v2361, 6.0
        %v2394 = vmin.f32 %v2362, 6.0
        %v2395 = vmin.f32 %v2363, 6.0
        %v2396 = vmin.f32 %v2364, 6.0
        %v2397 = vmin.f32 %v2365, 6.0
        %v2398 = vmin.f32 %v2366, 6.0
        %v2399 = vmin.f32 %v2367, 6.0
        %v2400 = vmin.f32 %v2368, 6.0
        %v2401 = vmin.f32 %v2369, 6.0
        %v2402 = vmin.f32 %v2370, 6.0
        %v2403 = vmin.f32 %v2371, 6.0
        %v2404 = vmin.f32 %v2372, 6.0
        %v2405 = vmin.f32 %v2373, 6.0
        %v2406 = vmin.f32 %v2374, 6.0
        %v2407 = vmin.f32 %v2375, 6.0
        %v2408 = vmin.f32 %v2376, 6.0
        %v2409 = vmin.f32 %v2377, 6.0
        %v2410 = vmin.f32 %v2378, 6.0
        %v2411 = vmin.f32 %v2379, 6.0
        %v2412 = vmin.f32 %v2380, 6.0
        %v2413 = vmin.f32 %v2381, 6.0
        %v2414 = vmin.f32 %v2382, 6.0
        %v2415 = vmin.f32 %v2383, 6.0
        %v2416 = vmin.f32 %v2384, 6.0
        %v2417 = vmin.f32 %v2385, 6.0
        %v2418 = vmin.f32 %v2386, 6.0
        %v2419 = vmin.f32 %v2387, 6.0
        %v2420 = vmin.f32 %v2388, 6.0
        %v2421 = vmin.f32 %v2389, 6.0
        %v2422 = vmin.f32 %v2390, 6.0
        %v2423 = vld [vmem:[#allocation9] sm:$0xff]
        %v2424 = vld [vmem:[#allocation9 + $0x8] sm:$0xff]
        %v2425 = vld [vmem:[#allocation9 + $0x10] sm:$0xff]
        %v2426 = vld [vmem:[#allocation9 + $0x18] sm:$0xff]
        %v2427 = vld [vmem:[#allocation9 + $0x20] sm:$0xff]
        %v2428 = vld [vmem:[#allocation9 + $0x28] sm:$0xff]
        %v2429 = vld [vmem:[#allocation9 + $0x30] sm:$0xff]
        %v2430 = vld [vmem:[#allocation9 + $0x38] sm:$0xff]
        %v2431 = vld [vmem:[#allocation9 + $0x40] sm:$0xff]
        %v2432 = vld [vmem:[#allocation9 + $0x48] sm:$0xff]
        %v2433 = vld [vmem:[#allocation9 + $0x50] sm:$0xff]
        %v2434 = vld [vmem:[#allocation9 + $0x58] sm:$0xff]
        %v2435 = vld [vmem:[#allocation9 + $0x60] sm:$0xff]
        %v2436 = vld [vmem:[#allocation9 + $0x68] sm:$0xff]
        %v2437 = vld [vmem:[#allocation9 + $0x70] sm:$0xff]
        %v2438 = vld [vmem:[#allocation9 + $0x78] sm:$0xff]
        %v2439 = vld [vmem:[%s6] sm:$0x1]
        %v2441 = vlaneseq
        %v2442 = vshrl.u32 %v2441, 7
        %v2443 = vsub.s32 0, %v2442
        %v2444 = vrot.slane %v2439, %v2443
        %2446 = vmatprep.subr.mxu0 0.0
        %2447 = vmatpush1.msra.mxu0 %v2438
        %2448 = vmatprep.subr.mxu0 0.0
        %2449 = vmatpush1.msra.mxu0 %v2437
        %2450 = vmatprep.subr.mxu0 0.0
        %2451 = vmatpush1.msra.mxu0 %v2436
        %2452 = vmatprep.subr.mxu0 0.0
        %2453 = vmatpush1.msra.mxu0 %v2435
        %2454 = vmatprep.subr.mxu0 0.0
        %2455 = vmatpush1.msra.mxu0 %v2434
        %2456 = vmatprep.subr.mxu0 0.0
        %2457 = vmatpush1.msra.mxu0 %v2433
        %2458 = vmatprep.subr.mxu0 0.0
        %2459 = vmatpush1.msra.mxu0 %v2432
        %2460 = vmatprep.subr.mxu0 0.0
        %2461 = vmatpush1.msra.mxu0 %v2431
        %2462 = vmatprep.subr.mxu0 0.0
        %2463 = vmatpush1.msra.mxu0 %v2430
        %2464 = vmatprep.subr.mxu0 0.0
        %2465 = vmatpush1.msra.mxu0 %v2429
        %2466 = vmatprep.subr.mxu0 0.0
        %2467 = vmatpush1.msra.mxu0 %v2428
        %2468 = vmatprep.subr.mxu0 0.0
        %2469 = vmatpush1.msra.mxu0 %v2427
        %2470 = vmatprep.subr.mxu0 0.0
        %2471 = vmatpush1.msra.mxu0 %v2426
        %2472 = vmatprep.subr.mxu0 0.0
        %2473 = vmatpush1.msra.mxu0 %v2425
        %2474 = vmatprep.subr.mxu0 0.0
        %2475 = vmatpush1.msra.mxu0 %v2424
        %2476 = vmatprep.subr.mxu0 0.0
        %2477 = vmatpush1.msra.mxu0 %v2423
        %2478 = vmatprep.subr.mxu0 0.0
        %2479 = vmatpush2.msra.mxu0 0.0
        %2480 = vmatprep.subr.mxu0 0.0
        %2481 = vmatpush2.msra.mxu0 0.0
        %2482 = vmatprep.subr.mxu0 0.0
        %2483 = vmatpush2.msra.mxu0 0.0
        %2484 = vmatprep.subr.mxu0 0.0
        %2485 = vmatpush2.msra.mxu0 0.0
        %2486 = vmatprep.subr.mxu0 0.0
        %2487 = vmatpush2.msra.mxu0 0.0
        %2488 = vmatprep.subr.mxu0 0.0
        %2489 = vmatpush2.msra.mxu0 0.0
        %2490 = vmatprep.subr.mxu0 0.0
        %2491 = vmatpush2.msra.mxu0 0.0
        %2492 = vmatprep.subr.mxu0 0.0
        %2493 = vmatpush2.msra.mxu0 0.0
        %2494 = vmatprep.subr.mxu0 0.0
        %2495 = vmatpush2.msra.mxu0 0.0
        %2496 = vmatprep.subr.mxu0 0.0
        %2497 = vmatpush2.msra.mxu0 0.0
        %2498 = vmatprep.subr.mxu0 0.0
        %2499 = vmatpush2.msra.mxu0 0.0
        %2500 = vmatprep.subr.mxu0 0.0
        %2501 = vmatpush2.msra.mxu0 0.0
        %2502 = vmatprep.subr.mxu0 0.0
        %2503 = vmatpush2.msra.mxu0 0.0
        %2504 = vmatprep.subr.mxu0 0.0
        %2505 = vmatpush2.msra.mxu0 0.0
        %2506 = vmatprep.subr.mxu0 0.0
        %2507 = vmatpush2.msra.mxu0 0.0
        %2508 = vmatprep.subr.mxu0 0.0
        %2509 = vmatpush2.msra.mxu0 0.0
        %2510 = vmatprep.mubr.f32.mxu0 0.0
        %2511 = vmatmul.mubr.f32.gmra.mxu0 %v2391
        %v2512 = vpop.f32.mrf.mxu0
        %v2513 = vadd.f32 %v2444, %v2512
        %v2514 = vpop.f32.mrf.mxu0
        %2515 = vmatprep.mubr.f32.mxu0 0.0
        %2516 = vmatmul.mubr.f32.gmra.mxu0 %v2392
        %v2517 = vpop.f32.mrf.mxu0
        %v2518 = vadd.f32 %v2444, %v2517
        %v2519 = vpop.f32.mrf.mxu0
        %2520 = vmatprep.mubr.f32.mxu0 0.0
        %2521 = vmatmul.mubr.f32.gmra.mxu0 %v2393
        %v2522 = vpop.f32.mrf.mxu0
        %v2523 = vadd.f32 %v2444, %v2522
        %v2524 = vpop.f32.mrf.mxu0
        %2525 = vmatprep.mubr.f32.mxu0 0.0
        %2526 = vmatmul.mubr.f32.gmra.mxu0 %v2394
        %v2527 = vpop.f32.mrf.mxu0
        %v2528 = vadd.f32 %v2444, %v2527
        %v2529 = vpop.f32.mrf.mxu0
        %2530 = vmatprep.mubr.f32.mxu0 0.0
        %2531 = vmatmul.mubr.f32.gmra.mxu0 %v2395
        %v2532 = vpop.f32.mrf.mxu0
        %v2533 = vadd.f32 %v2444, %v2532
        %v2534 = vpop.f32.mrf.mxu0
        %2535 = vmatprep.mubr.f32.mxu0 0.0
        %2536 = vmatmul.mubr.f32.gmra.mxu0 %v2396
        %v2537 = vpop.f32.mrf.mxu0
        %v2538 = vadd.f32 %v2444, %v2537
        %v2539 = vpop.f32.mrf.mxu0
        %2540 = vmatprep.mubr.f32.mxu0 0.0
        %2541 = vmatmul.mubr.f32.gmra.mxu0 %v2397
        %v2542 = vpop.f32.mrf.mxu0
        %v2543 = vadd.f32 %v2444, %v2542
        %v2544 = vpop.f32.mrf.mxu0
        %2545 = vmatprep.mubr.f32.mxu0 0.0
        %2546 = vmatmul.mubr.f32.gmra.mxu0 %v2398
        %v2547 = vpop.f32.mrf.mxu0
        %v2548 = vadd.f32 %v2444, %v2547
        %v2549 = vpop.f32.mrf.mxu0
        %2550 = vmatprep.mubr.f32.mxu0 0.0
        %2551 = vmatmul.mubr.f32.gmra.mxu0 %v2399
        %v2552 = vpop.f32.mrf.mxu0
        %v2553 = vadd.f32 %v2444, %v2552
        %v2554 = vpop.f32.mrf.mxu0
        %2555 = vmatprep.mubr.f32.mxu0 0.0
        %2556 = vmatmul.mubr.f32.gmra.mxu0 %v2400
        %v2557 = vpop.f32.mrf.mxu0
        %v2558 = vadd.f32 %v2444, %v2557
        %v2559 = vpop.f32.mrf.mxu0
        %2560 = vmatprep.mubr.f32.mxu0 0.0
        %2561 = vmatmul.mubr.f32.gmra.mxu0 %v2401
        %v2562 = vpop.f32.mrf.mxu0
        %v2563 = vadd.f32 %v2444, %v2562
        %v2564 = vpop.f32.mrf.mxu0
        %2565 = vmatprep.mubr.f32.mxu0 0.0
        %2566 = vmatmul.mubr.f32.gmra.mxu0 %v2402
        %v2567 = vpop.f32.mrf.mxu0
        %v2568 = vadd.f32 %v2444, %v2567
        %v2569 = vpop.f32.mrf.mxu0
        %2570 = vmatprep.mubr.f32.mxu0 0.0
        %2571 = vmatmul.mubr.f32.gmra.mxu0 %v2403
        %v2572 = vpop.f32.mrf.mxu0
        %v2573 = vadd.f32 %v2444, %v2572
        %v2574 = vpop.f32.mrf.mxu0
        %2575 = vmatprep.mubr.f32.mxu0 0.0
        %2576 = vmatmul.mubr.f32.gmra.mxu0 %v2404
        %v2577 = vpop.f32.mrf.mxu0
        %v2578 = vadd.f32 %v2444, %v2577
        %v2579 = vpop.f32.mrf.mxu0
        %2580 = vmatprep.mubr.f32.mxu0 0.0
        %2581 = vmatmul.mubr.f32.gmra.mxu0 %v2405
        %v2582 = vpop.f32.mrf.mxu0
        %v2583 = vadd.f32 %v2444, %v2582
        %v2584 = vpop.f32.mrf.mxu0
        %2585 = vmatprep.mubr.f32.mxu0 0.0
        %2586 = vmatmul.mubr.f32.gmra.mxu0 %v2406
        %v2587 = vpop.f32.mrf.mxu0
        %v2588 = vadd.f32 %v2444, %v2587
        %v2589 = vpop.f32.mrf.mxu0
        %2590 = vmatprep.mubr.f32.mxu0 0.0
        %2591 = vmatmul.mubr.f32.gmra.mxu0 %v2407
        %v2592 = vpop.f32.mrf.mxu0
        %v2593 = vadd.f32 %v2444, %v2592
        %v2594 = vpop.f32.mrf.mxu0
        %2595 = vmatprep.mubr.f32.mxu0 0.0
        %2596 = vmatmul.mubr.f32.gmra.mxu0 %v2408
        %v2597 = vpop.f32.mrf.mxu0
        %v2598 = vadd.f32 %v2444, %v2597
        %v2599 = vpop.f32.mrf.mxu0
        %2600 = vmatprep.mubr.f32.mxu0 0.0
        %2601 = vmatmul.mubr.f32.gmra.mxu0 %v2409
        %v2602 = vpop.f32.mrf.mxu0
        %v2603 = vadd.f32 %v2444, %v2602
        %v2604 = vpop.f32.mrf.mxu0
        %2605 = vmatprep.mubr.f32.mxu0 0.0
        %2606 = vmatmul.mubr.f32.gmra.mxu0 %v2410
        %v2607 = vpop.f32.mrf.mxu0
        %v2608 = vadd.f32 %v2444, %v2607
        %v2609 = vpop.f32.mrf.mxu0
        %2610 = vmatprep.mubr.f32.mxu0 0.0
        %2611 = vmatmul.mubr.f32.gmra.mxu0 %v2411
        %v2612 = vpop.f32.mrf.mxu0
        %v2613 = vadd.f32 %v2444, %v2612
        %v2614 = vpop.f32.mrf.mxu0
        %2615 = vmatprep.mubr.f32.mxu0 0.0
        %2616 = vmatmul.mubr.f32.gmra.mxu0 %v2412
        %v2617 = vpop.f32.mrf.mxu0
        %v2618 = vadd.f32 %v2444, %v2617
        %v2619 = vpop.f32.mrf.mxu0
        %2620 = vmatprep.mubr.f32.mxu0 0.0
        %2621 = vmatmul.mubr.f32.gmra.mxu0 %v2413
        %v2622 = vpop.f32.mrf.mxu0
        %v2623 = vadd.f32 %v2444, %v2622
        %v2624 = vpop.f32.mrf.mxu0
        %2625 = vmatprep.mubr.f32.mxu0 0.0
        %2626 = vmatmul.mubr.f32.gmra.mxu0 %v2414
        %v2627 = vpop.f32.mrf.mxu0
        %v2628 = vadd.f32 %v2444, %v2627
        %v2629 = vpop.f32.mrf.mxu0
        %2630 = vmatprep.mubr.f32.mxu0 0.0
        %2631 = vmatmul.mubr.f32.gmra.mxu0 %v2415
        %v2632 = vpop.f32.mrf.mxu0
        %v2633 = vadd.f32 %v2444, %v2632
        %v2634 = vpop.f32.mrf.mxu0
        %2635 = vmatprep.mubr.f32.mxu0 0.0
        %2636 = vmatmul.mubr.f32.gmra.mxu0 %v2416
        %v2637 = vpop.f32.mrf.mxu0
        %v2638 = vadd.f32 %v2444, %v2637
        %v2639 = vpop.f32.mrf.mxu0
        %2640 = vmatprep.mubr.f32.mxu0 0.0
        %2641 = vmatmul.mubr.f32.gmra.mxu0 %v2417
        %v2642 = vpop.f32.mrf.mxu0
        %v2643 = vadd.f32 %v2444, %v2642
        %v2644 = vpop.f32.mrf.mxu0
        %2645 = vmatprep.mubr.f32.mxu0 0.0
        %2646 = vmatmul.mubr.f32.gmra.mxu0 %v2418
        %v2647 = vpop.f32.mrf.mxu0
        %v2648 = vadd.f32 %v2444, %v2647
        %v2649 = vpop.f32.mrf.mxu0
        %2650 = vmatprep.mubr.f32.mxu0 0.0
        %2651 = vmatmul.mubr.f32.gmra.mxu0 %v2419
        %v2652 = vpop.f32.mrf.mxu0
        %v2653 = vadd.f32 %v2444, %v2652
        %v2654 = vpop.f32.mrf.mxu0
        %2655 = vmatprep.mubr.f32.mxu0 0.0
        %2656 = vmatmul.mubr.f32.gmra.mxu0 %v2420
        %v2657 = vpop.f32.mrf.mxu0
        %v2658 = vadd.f32 %v2444, %v2657
        %v2659 = vpop.f32.mrf.mxu0
        %2660 = vmatprep.mubr.f32.mxu0 0.0
        %2661 = vmatmul.mubr.f32.gmra.mxu0 %v2421
        %v2662 = vpop.f32.mrf.mxu0
        %v2663 = vadd.f32 %v2444, %v2662
        %v2664 = vpop.f32.mrf.mxu0
        %2665 = vmatprep.mubr.f32.mxu0 0.0
        %2666 = vmatmul.mubr.f32.gmra.mxu0 %v2422
        %v2667 = vpop.f32.mrf.mxu0
        %v2668 = vadd.f32 %v2444, %v2667
        %v2669 = vpop.f32.mrf.mxu0
        %2670 = vdwg.mxu0
        %v2671 = vadd.f32 %v2513, %v341
        %v2672 = vadd.f32 %v2518, %v342
        %v2673 = vadd.f32 %v2523, %v343
        %v2674 = vadd.f32 %v2528, %v344
        %v2675 = vadd.f32 %v2533, %v345
        %v2676 = vadd.f32 %v2538, %v346
        %v2677 = vadd.f32 %v2543, %v347
        %v2678 = vadd.f32 %v2548, %v348
        %v2679 = vadd.f32 %v2553, %v349
        %v2680 = vadd.f32 %v2558, %v350
        %v2681 = vadd.f32 %v2563, %v351
        %v2682 = vadd.f32 %v2568, %v352
        %v2683 = vadd.f32 %v2573, %v353
        %v2684 = vadd.f32 %v2578, %v354
        %v2685 = vadd.f32 %v2583, %v355
        %v2686 = vadd.f32 %v2588, %v356
        %v2687 = vadd.f32 %v2593, %v357
        %v2688 = vadd.f32 %v2598, %v358
        %v2689 = vadd.f32 %v2603, %v359
        %v2690 = vadd.f32 %v2608, %v360
        %v2691 = vadd.f32 %v2613, %v361
        %v2692 = vadd.f32 %v2618, %v362
        %v2693 = vadd.f32 %v2623, %v363
        %v2694 = vadd.f32 %v2628, %v364
        %v2695 = vadd.f32 %v2633, %v365
        %v2696 = vadd.f32 %v2638, %v366
        %v2697 = vadd.f32 %v2643, %v367
        %v2698 = vadd.f32 %v2648, %v368
        %v2699 = vadd.f32 %v2653, %v369
        %v2700 = vadd.f32 %v2658, %v370
        %v2701 = vadd.f32 %v2663, %v371
        %v2702 = vadd.f32 %v2668, %v372
        %2703 = vst [vmem:[%s340] sm:$0xff] %v2671
        %2704 = vst [vmem:[%s340 + $0x8] sm:$0xff] %v2672
        %2705 = vst [vmem:[%s340 + $0x10] sm:$0xff] %v2673
        %2706 = vst [vmem:[%s340 + $0x18] sm:$0xff] %v2674
        %2707 = vst [vmem:[%s340 + $0x20] sm:$0xff] %v2675
        %2708 = vst [vmem:[%s340 + $0x28] sm:$0xff] %v2676
        %2709 = vst [vmem:[%s340 + $0x30] sm:$0xff] %v2677
        %2710 = vst [vmem:[%s340 + $0x38] sm:$0xff] %v2678
        %2711 = vst [vmem:[%s340 + $0x40] sm:$0xff] %v2679
        %2712 = vst [vmem:[%s340 + $0x48] sm:$0xff] %v2680
        %2713 = vst [vmem:[%s340 + $0x50] sm:$0xff] %v2681
        %2714 = vst [vmem:[%s340 + $0x58] sm:$0xff] %v2682
        %2715 = vst [vmem:[%s340 + $0x60] sm:$0xff] %v2683
        %2716 = vst [vmem:[%s340 + $0x68] sm:$0xff] %v2684
        %2717 = vst [vmem:[%s340 + $0x70] sm:$0xff] %v2685
        %2718 = vst [vmem:[%s340 + $0x78] sm:$0xff] %v2686
        %2719 = vst [vmem:[%s340 + $0x80] sm:$0xff] %v2687
        %2720 = vst [vmem:[%s340 + $0x88] sm:$0xff] %v2688
        %2721 = vst [vmem:[%s340 + $0x90] sm:$0xff] %v2689
        %2722 = vst [vmem:[%s340 + $0x98] sm:$0xff] %v2690
        %2723 = vst [vmem:[%s340 + $0xa0] sm:$0xff] %v2691
        %2724 = vst [vmem:[%s340 + $0xa8] sm:$0xff] %v2692
        %2725 = vst [vmem:[%s340 + $0xb0] sm:$0xff] %v2693
        %2726 = vst [vmem:[%s340 + $0xb8] sm:$0xff] %v2694
        %2727 = vst [vmem:[%s340 + $0xc0] sm:$0xff] %v2695
        %2728 = vst [vmem:[%s340 + $0xc8] sm:$0xff] %v2696
        %2729 = vst [vmem:[%s340 + $0xd0] sm:$0xff] %v2697
        %2730 = vst [vmem:[%s340 + $0xd8] sm:$0xff] %v2698
        %2731 = vst [vmem:[%s340 + $0xe0] sm:$0xff] %v2699
        %2732 = vst [vmem:[%s340 + $0xe8] sm:$0xff] %v2700
        %2733 = vst [vmem:[%s340 + $0xf0] sm:$0xff] %v2701
        %2734 = vst [vmem:[%s340 + $0xf8] sm:$0xff] %v2702
        %s2735 = sand.u32 %s186, 1
        %s2736 = scalar_lea.sflag [#allocation5], %s2735
        %s2737 = sand.u32 %s186, 1
        %s2738 = smul.addr %s2737, 256
        %s2739 = scalar_lea.vmem [#allocation11], %s2738
        // Predicated region
        $region65: #{tpu_custom_call.1} parent=47 // pred_check
          %p2740 = pneg %p196
        $region66: #{tpu_custom_call.1} parent=47 // pred_check_branch
          %2742 = sbr.rel (%p2740) target = $region68
        $region67: #{tpu_custom_call.1} parent=47 // pred_region
          %s2744 = ssub.s32 4096, 4096
          %2745 = vsyncadd %s2736, %s2744
          %s2746 = smul.addr %s26, 32
          %s2747 = smul.addr %s2746, 128
          %s2748 = scalar_lea.hbm %s7, %s2747
          %s2749 = sshll.u32 %s2739, 4
          %s2750 = int_to_ptr.vmem [resolvable:$true] %s2749
          %2755 = dma.vmem_to_hbm [thread:$0]  %s2750, 4096, %s2748, %s2736, 128, 128, 8
        $region68: #{tpu_custom_call.1} parent=47 // pred_fallthru
          _
      $region48: #{tpu_custom_call.1} parent=5 // pred_fallthru
        _
      %p2756 = scmp.le.s32.totalorder 2, %s21
      // Predicated region
      $region69: #{tpu_custom_call.1} parent=5 // pred_check
        %p2757 = pneg %p2756
      $region70: #{tpu_custom_call.1} parent=5 // pred_check_branch
        %2759 = sbr.rel (%p2757) target = $region72
      $region71: #{tpu_custom_call.1} parent=5 // pred_region
        %s2760 = ssub.s32 %s21, 2
        // Predicated region
        $region73: #{tpu_custom_call.1} parent=71 // pred_check
          %p2761 = pneg %p202
        $region74: #{tpu_custom_call.1} parent=71 // pred_check_branch
          %2763 = sbr.rel (%p2761) target = $region76
        $region75: #{tpu_custom_call.1} parent=71 // pred_region
          %s2764 = sand.u32 %s187, 1
          %s2765 = scalar_lea.sflag [#allocation5], %s2764
          %s2766 = sand.u32 %s187, 1
          %s2767 = smul.addr %s2766, 256
          %s2768 = scalar_lea.vmem [#allocation11], %s2767
          %2769 = dma.done %s2765, 4096
        $region76: #{tpu_custom_call.1} parent=71 // pred_fallthru
          _
      $region72: #{tpu_custom_call.1} parent=5 // pred_fallthru
        _
    $region6: #{tpu_custom_call.1} parent=1 // loop_footer
      %s25 = sadd.s32 1, %s21
    $region7: #{tpu_custom_call.1} parent=1 // loop_footer_branch
      %20 = sbr.rel target = $region3
    $region8: #{tpu_custom_call.1} parent=1 // loop_exit
      _
    %2770 = vsyncpa [#allocation4], 1
    %s2771 = scalar_lea.sflag [#allocation4], 1
    %2772 = vsyncpa %s2771, 1
    %2773 = vsyncpa [#allocation7], 1
    %2774 = vsyncpa [#allocation10], 1
    %2775 = vsyncpa [#allocation5], 1
    %s2776 = scalar_lea.sflag [#allocation5], 1
    %2777 = vsyncpa %s2776, 1

</llo_original>
